<compile_context>
chip_gen: v6e
topology: v6e:2x2x1
jax: 0.10.0
libtpu: 0.0.40
codegen_flags: <defaults>
</compile_context>

<pallas_src>
import functools

import jax
import jax.numpy as jnp
from jax.experimental import pallas as pl
from jax.experimental.pallas import tpu as pltpu

BN_EPS = 1e-5  # PyTorch nn.BatchNorm1d default

_MIN_TILE_M = 256    # multiple of 8 sublanes; keeps per-step overhead small
_MAX_TILE_M = 2048   # double-buffered f32 output = 2 x (2048*512*4B) = 8 MiB,
                     # safely below the 16 MiB default scoped VMEM on v5e


# ----------------------------------------------------------------------------
# Pallas kernel: fused 4-layer MLP (BN folded) for one tile of points
# ----------------------------------------------------------------------------
def _ppmodel_kernel(x_ref, a1_ref, a2_ref, a3_ref, a4_ref,
                    c1_ref, c2_ref, c3_ref, o_ref):
    # x_ref : (TM, F)        f32 input points tile
    # aK_ref: (in_k, out_k)  bf16 folded weights (BN scales absorbed)
    # cK_ref: (1, out_k)     f32 folded biases (BN shifts absorbed)
    # o_ref : (TM, OUT)      output tile (f32 by default)
    h = jnp.dot(x_ref[...].astype(jnp.bfloat16), a1_ref[...],
                preferred_element_type=jnp.float32)
    h = jnp.maximum(h + c1_ref[...], 0.0)                       # BN0/BN1 + ReLU

    h = jnp.dot(h.astype(jnp.bfloat16), a2_ref[...],
                preferred_element_type=jnp.float32)
    h = jnp.maximum(h + c2_ref[...], 0.0)                       # BN2 + ReLU

    h = jnp.dot(h.astype(jnp.bfloat16), a3_ref[...],
                preferred_element_type=jnp.float32)
    h = jnp.maximum(h + c3_ref[...], 0.0)                       # BN3 + ReLU

    out = jnp.dot(h.astype(jnp.bfloat16), a4_ref[...],
                  preferred_element_type=jnp.float32)           # final Linear
    o_ref[...] = out.astype(o_ref.dtype)


def _choose_tile_m(n_rows, tile_m):
    """Clamp tile to [256, 2048] (multiple of 8) and keep >=2 grid steps."""
    tile_m = max(_MIN_TILE_M, min(_MAX_TILE_M, (tile_m // 8) * 8))
    # v7x has 2 TensorCores per chip: a 1-step grid forfeits half the chip.
    if n_rows > 2 * _MIN_TILE_M and pl.cdiv(n_rows, tile_m) < 2:
        half = pl.cdiv(n_rows, 2)
        tile_m = max(_MIN_TILE_M, ((half + 7) // 8) * 8)
    return tile_m


def ppmodel_forward(x, folded, *, tile_m=1024, out_dtype=jnp.float32):
    """x: (N, fea_dim) f32.  folded: (A1, A2, A3, A4, c1, c2, c3)."""
    a1, a2, a3, a4, c1, c2, c3 = folded
    N, F = x.shape
    out_dim = a4.shape[-1]

    tm = _choose_tile_m(N, tile_m)
    grid = (pl.cdiv(N, tm),)   # ragged last block: reads padded, stores masked

    full = lambda arr: pl.BlockSpec(arr.shape, lambda i: (0, 0))

    out_bytes = jnp.dtype(out_dtype).itemsize
    cost = pl.CostEstimate(
        flops=2 * N * (F * 64 + 64 * 128 + 128 * 128 + 128 * out_dim),
        transcendentals=0,
        bytes_accessed=(N * F * 4 + N * out_dim * out_bytes
                        + sum(int(a.size) * 2 for a in (a1, a2, a3, a4))
                        + sum(int(c.size) * 4 for c in (c1, c2, c3))),
    )

    return pl.pallas_call(
        _ppmodel_kernel,
        out_shape=jax.ShapeDtypeStruct((N, out_dim), out_dtype),
        grid=grid,
        in_specs=[
            pl.BlockSpec((tm, F), lambda i: (i, 0)),
            full(a1), full(a2), full(a3), full(a4),
            full(c1), full(c2), full(c3),
        ],
        out_specs=pl.BlockSpec((tm, out_dim), lambda i: (i, 0)),
        compiler_params=pltpu.CompilerParams(
            dimension_semantics=("parallel",)),
        cost_estimate=cost,
    )(x, a1, a2, a3, a4, c1, c2, c3)


# ----------------------------------------------------------------------------
# Parameters: synthetic (deterministic) BN stats + xavier-style Linear weights
# ----------------------------------------------------------------------------
def _bn_params(key, dim):
    kg, kb, km, kv = jax.random.split(key, 4)
    gamma = 1.0 + 0.1 * jax.random.normal(kg, (dim,), jnp.float32)
    beta = 0.1 * jax.random.normal(kb, (dim,), jnp.float32)
    rmean = 0.1 * jax.random.normal(km, (dim,), jnp.float32)
    rvar = 0.5 + 0.1 * jnp.abs(jax.random.normal(kv, (dim,), jnp.float32))
    return gamma, beta, rmean, rvar


def _linear_w(key, fan_in, fan_out):
    # xavier_normal_, stored already transposed as (in, out) for x @ W
    std = jnp.sqrt(2.0 / (fan_in + fan_out))
    return std * jax.random.normal(key, (fan_in, fan_out), jnp.float32)


def make_raw_params(key, fea_dim, out_dim):
    ks = jax.random.split(key, 8)
    return {
        "bn0": _bn_params(ks[0], fea_dim),
        "W1": _linear_w(ks[1], fea_dim, 64),
        "bn1": _bn_params(ks[2], 64),
        "W2": _linear_w(ks[3], 64, 128),
        "bn2": _bn_params(ks[4], 128),
        "W3": _linear_w(ks[5], 128, 128),
        "bn3": _bn_params(ks[6], 128),
        "W4": _linear_w(ks[7], 128, out_dim),
    }


def fold_params(raw):
    """Fold inference-mode BatchNorms into the Linear weights/biases (once)."""
    def sb(bn):
        g, b, m, v = bn
        s = g / jnp.sqrt(v + BN_EPS)
        return s, b - m * s

    s0, t0 = sb(raw["bn0"])
    s1, t1 = sb(raw["bn1"])
    s2, t2 = sb(raw["bn2"])
    s3, t3 = sb(raw["bn3"])

    # y1 = BN1(BN0(x) @ W1) = x @ A1 + c1
    A1 = (s0[:, None] * raw["W1"]) * s1[None, :]
    c1 = (t0 @ raw["W1"]) * s1 + t1
    # y2 = BN2(h1 @ W2) = h1 @ A2 + c2
    A2 = raw["W2"] * s2[None, :]
    c2 = t2
    # y3 = BN3(h2 @ W3) = h2 @ A3 + c3
    A3 = raw["W3"] * s3[None, :]
    c3 = t3
    # out = h3 @ W4
    A4 = raw["W4"]

    bf = lambda a: a.astype(jnp.bfloat16)
    row = lambda c: c.reshape(1, -1).astype(jnp.float32)
    return (bf(A1), bf(A2), bf(A3), bf(A4), row(c1), row(c2), row(c3))


# ----------------------------------------------------------------------------
# Pure-JAX f32 reference (unfolded), for correctness check
# ----------------------------------------------------------------------------
def ppmodel_reference(x, raw):
    def bn(h, p):
        g, b, m, v = p
        return (h - m) / jnp.sqrt(v + BN_EPS) * g + b

    h = bn(x, raw["bn0"]) @ raw["W1"]
    h = jax.nn.relu(bn(h, raw["bn1"])) @ raw["W2"]
    h = jax.nn.relu(bn(h, raw["bn2"])) @ raw["W3"]
    h = jax.nn.relu(bn(h, raw["bn3"])) @ raw["W4"]
    return h


if __name__ == "__main__":
    key = jax.random.PRNGKey(0)
    kx, kp = jax.random.split(key)

    FEA_DIM, OUT_DIM = 8, 512
    raw = make_raw_params(kp, FEA_DIM, OUT_DIM)
    folded = fold_params(raw)

    fwd = jax.jit(functools.partial(ppmodel_forward, tile_m=1024))

    # Divisible N (2 full blocks) and ragged N (masked partial last block).
    for n_points in (2048, 1000):
        x = jax.random.normal(jax.random.fold_in(kx, n_points),
                              (n_points, FEA_DIM), jnp.float32)
        out = fwd(x, folded)
        jax.block_until_ready(out)

        assert out.shape == (n_points, OUT_DIM), out.shape
        assert out.dtype == jnp.float32

        # Relaxed tolerance: bf16 MXU inputs (f32 accumulation) vs f32 reference.
        ref = ppmodel_reference(x, raw)
        max_err = float(jnp.max(jnp.abs(out - ref)))
        ref_scale = float(jnp.max(jnp.abs(ref))) + 1e-6
        assert max_err <= 0.05 * ref_scale + 1e-3, (n_points, max_err, ref_scale)

    print("KERNEL_OK")
</pallas_src>

<mosaic_0001>
module attributes {stable_mosaic.version = 11 : i64} {
  func.func @_ppmodel_kernel(%arg0: i32, %arg1: memref<1024x8xf32, #tpu.memory_space<vmem>>, %arg2: memref<8x64xbf16, #tpu.memory_space<vmem>>, %arg3: memref<64x128xbf16, #tpu.memory_space<vmem>>, %arg4: memref<128x128xbf16, #tpu.memory_space<vmem>>, %arg5: memref<128x512xbf16, #tpu.memory_space<vmem>>, %arg6: memref<1x64xf32, #tpu.memory_space<vmem>>, %arg7: memref<1x128xf32, #tpu.memory_space<vmem>>, %arg8: memref<1x128xf32, #tpu.memory_space<vmem>>, %arg9: memref<1024x512xf32, #tpu.memory_space<vmem>>) attributes {dimension_semantics = [#tpu.dimension_semantics<parallel>], iteration_bounds = array<i64: 2>, scalar_prefetch = 0 : i64, scratch_operands = 0 : i64, tpu.core_type = #tpu.core_type<tc>, window_params = [{transform_indices = @transform_0, window_bounds = array<i64: 1024, 8>}, {pipeline_mode = #tpu.pipeline_mode<synchronous>, transform_indices = @transform_1, window_bounds = array<i64: 8, 64>}, {pipeline_mode = #tpu.pipeline_mode<synchronous>, transform_indices = @transform_2, window_bounds = array<i64: 64, 128>}, {pipeline_mode = #tpu.pipeline_mode<synchronous>, transform_indices = @transform_3, window_bounds = array<i64: 128, 128>}, {pipeline_mode = #tpu.pipeline_mode<synchronous>, transform_indices = @transform_4, window_bounds = array<i64: 128, 512>}, {pipeline_mode = #tpu.pipeline_mode<synchronous>, transform_indices = @transform_5, window_bounds = array<i64: 1, 64>}, {pipeline_mode = #tpu.pipeline_mode<synchronous>, transform_indices = @transform_6, window_bounds = array<i64: 1, 128>}, {pipeline_mode = #tpu.pipeline_mode<synchronous>, transform_indices = @transform_7, window_bounds = array<i64: 1, 128>}, {transform_indices = @transform_8, window_bounds = array<i64: 1024, 512>}]} {
    %c0 = arith.constant 0 : index
    %c0_0 = arith.constant 0 : index
    %0 = vector.load %arg1[%c0, %c0_0] : memref<1024x8xf32, #tpu.memory_space<vmem>>, vector<1024x8xf32>
    %1 = arith.truncf %0 : vector<1024x8xf32> to vector<1024x8xbf16>
    %c0_1 = arith.constant 0 : index
    %c0_2 = arith.constant 0 : index
    %2 = vector.load %arg2[%c0_1, %c0_2] : memref<8x64xbf16, #tpu.memory_space<vmem>>, vector<8x64xbf16>
    %cst = arith.constant dense<0.000000e+00> : vector<1024x64xf32>
    %3 = tpu.matmul %1, %2, %cst {dimension_numbers = #tpu.dot_dimension_numbers<[1], [0], [0], [1], [0, 0, 1, 1], [], []>} : vector<1024x8xbf16>, vector<8x64xbf16>, vector<1024x64xf32> -> vector<1024x64xf32>
    %c0_3 = arith.constant 0 : index
    %c0_4 = arith.constant 0 : index
    %4 = vector.load %arg6[%c0_3, %c0_4] : memref<1x64xf32, #tpu.memory_space<vmem>>, vector<1x64xf32>
    %5 = vector.broadcast %4 : vector<1x64xf32> to vector<1024x64xf32>
    %6 = arith.addf %3, %5 : vector<1024x64xf32>
    %cst_5 = arith.constant 0.000000e+00 : f32
    %7 = vector.broadcast %cst_5 : f32 to vector<1024x64xf32>
    %8 = arith.maximumf %6, %7 : vector<1024x64xf32>
    %9 = arith.truncf %8 : vector<1024x64xf32> to vector<1024x64xbf16>
    %c0_6 = arith.constant 0 : index
    %c0_7 = arith.constant 0 : index
    %10 = vector.load %arg3[%c0_6, %c0_7] : memref<64x128xbf16, #tpu.memory_space<vmem>>, vector<64x128xbf16>
    %cst_8 = arith.constant dense<0.000000e+00> : vector<1024x128xf32>
    %11 = tpu.matmul %9, %10, %cst_8 {dimension_numbers = #tpu.dot_dimension_numbers<[1], [0], [0], [1], [0, 0, 1, 1], [], []>} : vector<1024x64xbf16>, vector<64x128xbf16>, vector<1024x128xf32> -> vector<1024x128xf32>
    %c0_9 = arith.constant 0 : index
    %c0_10 = arith.constant 0 : index
    %12 = vector.load %arg7[%c0_9, %c0_10] : memref<1x128xf32, #tpu.memory_space<vmem>>, vector<1x128xf32>
    %13 = vector.broadcast %12 : vector<1x128xf32> to vector<1024x128xf32>
    %14 = arith.addf %11, %13 : vector<1024x128xf32>
    %cst_11 = arith.constant 0.000000e+00 : f32
    %15 = vector.broadcast %cst_11 : f32 to vector<1024x128xf32>
    %16 = arith.maximumf %14, %15 : vector<1024x128xf32>
    %17 = arith.truncf %16 : vector<1024x128xf32> to vector<1024x128xbf16>
    %c0_12 = arith.constant 0 : index
    %c0_13 = arith.constant 0 : index
    %18 = vector.load %arg4[%c0_12, %c0_13] : memref<128x128xbf16, #tpu.memory_space<vmem>>, vector<128x128xbf16>
    %cst_14 = arith.constant dense<0.000000e+00> : vector<1024x128xf32>
    %19 = tpu.matmul %17, %18, %cst_14 {dimension_numbers = #tpu.dot_dimension_numbers<[1], [0], [0], [1], [0, 0, 1, 1], [], []>} : vector<1024x128xbf16>, vector<128x128xbf16>, vector<1024x128xf32> -> vector<1024x128xf32>
    %c0_15 = arith.constant 0 : index
    %c0_16 = arith.constant 0 : index
    %20 = vector.load %arg8[%c0_15, %c0_16] : memref<1x128xf32, #tpu.memory_space<vmem>>, vector<1x128xf32>
    %21 = vector.broadcast %20 : vector<1x128xf32> to vector<1024x128xf32>
    %22 = arith.addf %19, %21 : vector<1024x128xf32>
    %cst_17 = arith.constant 0.000000e+00 : f32
    %23 = vector.broadcast %cst_17 : f32 to vector<1024x128xf32>
    %24 = arith.maximumf %22, %23 : vector<1024x128xf32>
    %25 = arith.truncf %24 : vector<1024x128xf32> to vector<1024x128xbf16>
    %c0_18 = arith.constant 0 : index
    %c0_19 = arith.constant 0 : index
    %26 = vector.load %arg5[%c0_18, %c0_19] : memref<128x512xbf16, #tpu.memory_space<vmem>>, vector<128x512xbf16>
    %cst_20 = arith.constant dense<0.000000e+00> : vector<1024x512xf32>
    %27 = tpu.matmul %25, %26, %cst_20 {dimension_numbers = #tpu.dot_dimension_numbers<[1], [0], [0], [1], [0, 0, 1, 1], [], []>} : vector<1024x128xbf16>, vector<128x512xbf16>, vector<1024x512xf32> -> vector<1024x512xf32>
    %c0_21 = arith.constant 0 : index
    %c0_22 = arith.constant 0 : index
    %28 = vector.load %arg9[%c0_21, %c0_22] : memref<1024x512xf32, #tpu.memory_space<vmem>>, vector<1024x512xf32>
    tpu.vector_store %arg9[%c0_21, %c0_22], %27 {strides = array<i32>} : memref<1024x512xf32, #tpu.memory_space<vmem>>, vector<1024x512xf32>,
    return
  }
  func.func @transform_0(%arg0: i32) -> (i32, i32) {
    %c0_i32 = arith.constant 0 : i32
    %c0_i32_0 = arith.constant 0 : i32
    return %arg0, %c0_i32 : i32, i32
  }
  func.func @transform_1(%arg0: i32) -> (i32, i32) {
    %c0_i32 = arith.constant 0 : i32
    %c0_i32_0 = arith.constant 0 : i32
    %c0_i32_1 = arith.constant 0 : i32
    return %c0_i32, %c0_i32_0 : i32, i32
  }
  func.func @transform_2(%arg0: i32) -> (i32, i32) {
    %c0_i32 = arith.constant 0 : i32
    %c0_i32_0 = arith.constant 0 : i32
    %c0_i32_1 = arith.constant 0 : i32
    return %c0_i32, %c0_i32_0 : i32, i32
  }
  func.func @transform_3(%arg0: i32) -> (i32, i32) {
    %c0_i32 = arith.constant 0 : i32
    %c0_i32_0 = arith.constant 0 : i32
    %c0_i32_1 = arith.constant 0 : i32
    return %c0_i32, %c0_i32_0 : i32, i32
  }
  func.func @transform_4(%arg0: i32) -> (i32, i32) {
    %c0_i32 = arith.constant 0 : i32
    %c0_i32_0 = arith.constant 0 : i32
    %c0_i32_1 = arith.constant 0 : i32
    return %c0_i32, %c0_i32_0 : i32, i32
  }
  func.func @transform_5(%arg0: i32) -> (i32, i32) {
    %c0_i32 = arith.constant 0 : i32
    %c0_i32_0 = arith.constant 0 : i32
    %c0_i32_1 = arith.constant 0 : i32
    return %c0_i32, %c0_i32_0 : i32, i32
  }
  func.func @transform_6(%arg0: i32) -> (i32, i32) {
    %c0_i32 = arith.constant 0 : i32
    %c0_i32_0 = arith.constant 0 : i32
    %c0_i32_1 = arith.constant 0 : i32
    return %c0_i32, %c0_i32_0 : i32, i32
  }
  func.func @transform_7(%arg0: i32) -> (i32, i32) {
    %c0_i32 = arith.constant 0 : i32
    %c0_i32_0 = arith.constant 0 : i32
    %c0_i32_1 = arith.constant 0 : i32
    return %c0_i32, %c0_i32_0 : i32, i32
  }
  func.func @transform_8(%arg0: i32) -> (i32, i32) {
    %c0_i32 = arith.constant 0 : i32
    %c0_i32_0 = arith.constant 0 : i32
    return %arg0, %c0_i32 : i32, i32
  }
}

</mosaic_0001>

<llo_original>
// kernel: ppmodel_forward.1
$region0: #{ppmodel_forward.1}
  #allocation0 [shape = 'u32[]', space=smem, size = 0x4, offset = 0x4, fixed_abs, tag = 'smem constant byte address 0x4 - core index']
  #allocation1 [shape = 'u32[144,128]{1,0:T(1,128)}', space=vmem, size = 0x12000, scoped, tag = 'internal scratch']
  %s0 = inlined_call_operand.vmem [shape: f32[2048,8], index: 0, kind: input, shape index: {}]
  %s1 = inlined_call_operand.hbm [shape: bf16[8,64], index: 1, kind: input, shape index: {}]
  %s2 = inlined_call_operand.hbm [shape: bf16[64,128], index: 2, kind: input, shape index: {}]
  %s3 = inlined_call_operand.hbm [shape: bf16[128,128], index: 3, kind: input, shape index: {}]
  %s4 = inlined_call_operand.hbm [shape: bf16[128,512], index: 4, kind: input, shape index: {}]
  %s5 = inlined_call_operand.hbm [shape: f32[1,64], index: 5, kind: input, shape index: {}]
  %s6 = inlined_call_operand.hbm [shape: f32[1,128], index: 6, kind: input, shape index: {}]
  %s7 = inlined_call_operand.hbm [shape: f32[1,128], index: 7, kind: input, shape index: {}]
  %s8 = inlined_call_operand.hbm [shape: f32[2048,512], index: 8, kind: output, shape index: {}]
  %s9 = sld [smem:[#allocation0]]
  $region93: #{ppmodel_forward.1} parent=0
    _
  %s11 = ssub.s32 1, %s9
  %s12 = scalar_select 0, %s11, %s9
  $region1: #{ppmodel_forward.1} parent=0
    #allocation2 [shape = 'u8[2048]{0}', space=vmem, size = 0x800, scoped, tag = 'input window, operand 1, single buffered']
    #allocation3 [shape = 's32[2]{0}', space=sflag, size = 0x8, scoped, tag = 'scoped memory for ppmodel_forward.1']
    #allocation4 [shape = 's32[2]{0}', space=sflag, size = 0x8, scoped, tag = 'scoped memory for ppmodel_forward.1']
    #allocation5 [shape = 'u8[16384]{0}', space=vmem, size = 0x4000, scoped, tag = 'input window, operand 2, single buffered']
    #allocation6 [shape = 's32[1]{0}', space=sflag, size = 0x4, scoped, tag = 'scoped memory for ppmodel_forward.1']
    #allocation7 [shape = 'u8[32768]{0}', space=vmem, size = 0x8000, scoped, tag = 'input window, operand 3, single buffered']
    #allocation8 [shape = 'u8[131072]{0}', space=vmem, size = 0x20000, scoped, tag = 'input window, operand 4, single buffered']
    #allocation9 [shape = 's32[1]{0}', space=sflag, size = 0x4, scoped, tag = 'scoped memory for ppmodel_forward.1']
    #allocation10 [shape = 'u8[512]{0}', space=vmem, size = 0x400, scoped, tag = 'input window, operand 5, single buffered']
    #allocation11 [shape = 'u8[512]{0}', space=vmem, size = 0x400, scoped, tag = 'input window, operand 6, single buffered']
    #allocation12 [shape = 's32[1]{0}', space=sflag, size = 0x4, scoped, tag = 'scoped memory for ppmodel_forward.1']
    #allocation13 [shape = 'u8[512]{0}', space=vmem, size = 0x400, scoped, tag = 'input window, operand 7, single buffered']
    #allocation14 [shape = 'u8[4194304]{0}', space=vmem, size = 0x400000, scoped, tag = 'output window, operand 0']
    %13 = vsyncpa [#allocation3], 0
    %14 = vsyncpa [#allocation6], 0
    %15 = vsyncpa [#allocation9], 0
    %16 = vsyncpa [#allocation12], 0
    %17 = vsyncpa [#allocation4], 0
    %s18 = scalar_lea.sflag [#allocation4], 1
    %19 = vsyncpa %s18, 0
    loop: start=0, step=1, limit=4
    $region2: #{ppmodel_forward.1} parent=1 // loop_pre_header
      _
    $region3: #{ppmodel_forward.1} parent=1 // loop_header
      %s21 = sphi 0, %s25
      %p22 = scmp.ge.s32.totalorder %s21, 4
      %s31 = sphi 0, %s33
      %s34 = sphi 0, %s31
      %s35 = sphi 0, %s34
      %s51 = sphi 0, %s35
      %s55 = sphi 0, %s55
      %s57 = sphi 0, %s55
      %s58 = sphi 0, %s57
      %s72 = sphi 0, %s58
      %s76 = sphi 0, %s76
      %s78 = sphi 0, %s76
      %s79 = sphi 0, %s78
      %s93 = sphi 0, %s79
      %s97 = sphi 0, %s97
      %s99 = sphi 0, %s97
      %s100 = sphi 0, %s99
      %s114 = sphi 0, %s100
      %s118 = sphi 0, %s118
      %s120 = sphi 0, %s118
      %s121 = sphi 0, %s120
      %s135 = sphi 0, %s121
      %s139 = sphi 0, %s139
      %s141 = sphi 0, %s139
      %s142 = sphi 0, %s141
      %s156 = sphi 0, %s142
      %s160 = sphi 0, %s160
      %s162 = sphi 0, %s160
      %s163 = sphi 0, %s162
      %s177 = sphi 0, %s163
      %s181 = sphi 0, %s181
      %s183 = sphi 0, %s181
      %s184 = sphi 0, %s183
      %s198 = sphi 0, %s184
      %s204 = sphi 0, %s206
      %s207 = sphi 0, %s204
      %s208 = sphi 0, %s207
      %s224 = sphi 0, %s208
    $region4: #{ppmodel_forward.1} parent=1 // loop_header_branch
      %24 = sbr.rel (%p22) target = $region8
    $region5: #{ppmodel_forward.1} parent=1 // loop_body
      %s26 = ssub.s32 %s21, 1
      %s27 = ssub.s32 %s21, 2
      %s28 = sadd.s32 %s21, 1
      %s29 = ssub.s32 %s21, %s28
      %p30 = scmp.eq.s32.totalorder %s29, 0
      %s32 = sadd.s32 %s31, 1
      %s33 = scalar_select %p30, %s31, %s32
      %p36 = pneg %p30
      %p37 = scmp.eq.s32.totalorder %s21, 1
      %p38 = por %p36, %p37
      %p39 = scmp.ne.s32.totalorder %s31, %s34
      %p40 = scmp.eq.s32.totalorder %s21, 0
      %p41 = por %p39, %p40
      %p42 = scmp.ne.s32.totalorder %s31, %s34
      %p43 = scmp.eq.s32.totalorder %s26, 1
      %p44 = por %p42, %p43
      %p45 = scmp.ne.s32.totalorder %s34, %s35
      %p46 = scmp.eq.s32.totalorder %s26, 0
      %p47 = por %p45, %p46
      %p48 = scmp.ne.s32.totalorder %s34, %s35
      %p49 = scmp.eq.s32.totalorder %s27, 1
      %p50 = por %p48, %p49
      %p52 = scmp.ne.s32.totalorder %s35, %s51
      %p53 = scmp.eq.s32.totalorder %s27, 0
      %p54 = por %p52, %p53
      %s56 = sadd.s32 %s55, 1
      %p59 = scmp.eq.s32.totalorder %s21, 1
      %p60 = scmp.ne.s32.totalorder %s55, %s57
      %p61 = scmp.eq.s32.totalorder %s21, 0
      %p62 = por %p60, %p61
      %p63 = scmp.ne.s32.totalorder %s55, %s57
      %p64 = scmp.eq.s32.totalorder %s26, 1
      %p65 = por %p63, %p64
      %p66 = scmp.ne.s32.totalorder %s57, %s58
      %p67 = scmp.eq.s32.totalorder %s26, 0
      %p68 = por %p66, %p67
      %p69 = scmp.ne.s32.totalorder %s57, %s58
      %p70 = scmp.eq.s32.totalorder %s27, 1
      %p71 = por %p69, %p70
      %p73 = scmp.ne.s32.totalorder %s58, %s72
      %p74 = scmp.eq.s32.totalorder %s27, 0
      %p75 = por %p73, %p74
      %s77 = sadd.s32 %s76, 1
      %p80 = scmp.eq.s32.totalorder %s21, 1
      %p81 = scmp.ne.s32.totalorder %s76, %s78
      %p82 = scmp.eq.s32.totalorder %s21, 0
      %p83 = por %p81, %p82
      %p84 = scmp.ne.s32.totalorder %s76, %s78
      %p85 = scmp.eq.s32.totalorder %s26, 1
      %p86 = por %p84, %p85
      %p87 = scmp.ne.s32.totalorder %s78, %s79
      %p88 = scmp.eq.s32.totalorder %s26, 0
      %p89 = por %p87, %p88
      %p90 = scmp.ne.s32.totalorder %s78, %s79
      %p91 = scmp.eq.s32.totalorder %s27, 1
      %p92 = por %p90, %p91
      %p94 = scmp.ne.s32.totalorder %s79, %s93
      %p95 = scmp.eq.s32.totalorder %s27, 0
      %p96 = por %p94, %p95
      %s98 = sadd.s32 %s97, 1
      %p101 = scmp.eq.s32.totalorder %s21, 1
      %p102 = scmp.ne.s32.totalorder %s97, %s99
      %p103 = scmp.eq.s32.totalorder %s21, 0
      %p104 = por %p102, %p103
      %p105 = scmp.ne.s32.totalorder %s97, %s99
      %p106 = scmp.eq.s32.totalorder %s26, 1
      %p107 = por %p105, %p106
      %p108 = scmp.ne.s32.totalorder %s99, %s100
      %p109 = scmp.eq.s32.totalorder %s26, 0
      %p110 = por %p108, %p109
      %p111 = scmp.ne.s32.totalorder %s99, %s100
      %p112 = scmp.eq.s32.totalorder %s27, 1
      %p113 = por %p111, %p112
      %p115 = scmp.ne.s32.totalorder %s100, %s114
      %p116 = scmp.eq.s32.totalorder %s27, 0
      %p117 = por %p115, %p116
      %s119 = sadd.s32 %s118, 1
      %p122 = scmp.eq.s32.totalorder %s21, 1
      %p123 = scmp.ne.s32.totalorder %s118, %s120
      %p124 = scmp.eq.s32.totalorder %s21, 0
      %p125 = por %p123, %p124
      %p126 = scmp.ne.s32.totalorder %s118, %s120
      %p127 = scmp.eq.s32.totalorder %s26, 1
      %p128 = por %p126, %p127
      %p129 = scmp.ne.s32.totalorder %s120, %s121
      %p130 = scmp.eq.s32.totalorder %s26, 0
      %p131 = por %p129, %p130
      %p132 = scmp.ne.s32.totalorder %s120, %s121
      %p133 = scmp.eq.s32.totalorder %s27, 1
      %p134 = por %p132, %p133
      %p136 = scmp.ne.s32.totalorder %s121, %s135
      %p137 = scmp.eq.s32.totalorder %s27, 0
      %p138 = por %p136, %p137
      %s140 = sadd.s32 %s139, 1
      %p143 = scmp.eq.s32.totalorder %s21, 1
      %p144 = scmp.ne.s32.totalorder %s139, %s141
      %p145 = scmp.eq.s32.totalorder %s21, 0
      %p146 = por %p144, %p145
      %p147 = scmp.ne.s32.totalorder %s139, %s141
      %p148 = scmp.eq.s32.totalorder %s26, 1
      %p149 = por %p147, %p148
      %p150 = scmp.ne.s32.totalorder %s141, %s142
      %p151 = scmp.eq.s32.totalorder %s26, 0
      %p152 = por %p150, %p151
      %p153 = scmp.ne.s32.totalorder %s141, %s142
      %p154 = scmp.eq.s32.totalorder %s27, 1
      %p155 = por %p153, %p154
      %p157 = scmp.ne.s32.totalorder %s142, %s156
      %p158 = scmp.eq.s32.totalorder %s27, 0
      %p159 = por %p157, %p158
      %s161 = sadd.s32 %s160, 1
      %p164 = scmp.eq.s32.totalorder %s21, 1
      %p165 = scmp.ne.s32.totalorder %s160, %s162
      %p166 = scmp.eq.s32.totalorder %s21, 0
      %p167 = por %p165, %p166
      %p168 = scmp.ne.s32.totalorder %s160, %s162
      %p169 = scmp.eq.s32.totalorder %s26, 1
      %p170 = por %p168, %p169
      %p171 = scmp.ne.s32.totalorder %s162, %s163
      %p172 = scmp.eq.s32.totalorder %s26, 0
      %p173 = por %p171, %p172
      %p174 = scmp.ne.s32.totalorder %s162, %s163
      %p175 = scmp.eq.s32.totalorder %s27, 1
      %p176 = por %p174, %p175
      %p178 = scmp.ne.s32.totalorder %s163, %s177
      %p179 = scmp.eq.s32.totalorder %s27, 0
      %p180 = por %p178, %p179
      %s182 = sadd.s32 %s181, 1
      %p185 = scmp.eq.s32.totalorder %s21, 1
      %p186 = scmp.ne.s32.totalorder %s181, %s183
      %p187 = scmp.eq.s32.totalorder %s21, 0
      %p188 = por %p186, %p187
      %p189 = scmp.ne.s32.totalorder %s181, %s183
      %p190 = scmp.eq.s32.totalorder %s26, 1
      %p191 = por %p189, %p190
      %p192 = scmp.ne.s32.totalorder %s183, %s184
      %p193 = scmp.eq.s32.totalorder %s26, 0
      %p194 = por %p192, %p193
      %p195 = scmp.ne.s32.totalorder %s183, %s184
      %p196 = scmp.eq.s32.totalorder %s27, 1
      %p197 = por %p195, %p196
      %p199 = scmp.ne.s32.totalorder %s184, %s198
      %p200 = scmp.eq.s32.totalorder %s27, 0
      %p201 = por %p199, %p200
      %s202 = ssub.s32 %s21, %s28
      %p203 = scmp.eq.s32.totalorder %s202, 0
      %s205 = sadd.s32 %s204, 1
      %s206 = scalar_select %p203, %s204, %s205
      %p209 = pneg %p203
      %p210 = scmp.eq.s32.totalorder %s21, 1
      %p211 = por %p209, %p210
      %p212 = scmp.ne.s32.totalorder %s204, %s207
      %p213 = scmp.eq.s32.totalorder %s21, 0
      %p214 = por %p212, %p213
      %p215 = scmp.ne.s32.totalorder %s204, %s207
      %p216 = scmp.eq.s32.totalorder %s26, 1
      %p217 = por %p215, %p216
      %p218 = scmp.ne.s32.totalorder %s207, %s208
      %p219 = scmp.eq.s32.totalorder %s26, 0
      %p220 = por %p218, %p219
      %p221 = scmp.ne.s32.totalorder %s207, %s208
      %p222 = scmp.eq.s32.totalorder %s27, 1
      %p223 = por %p221, %p222
      %p225 = scmp.ne.s32.totalorder %s208, %s224
      %p226 = scmp.eq.s32.totalorder %s27, 0
      %p227 = por %p225, %p226
      %p228 = scmp.le.s32.totalorder 1, %s21
      %p229 = scmp.lt.s32.totalorder %s21, 3
      %p230 = pnand %p228, %p229
      %p231 = pneg %p230
      // Predicated region
      $region9: #{ppmodel_forward.1} parent=5 // pred_check
        _
      $region10: #{ppmodel_forward.1} parent=5 // pred_check_branch
        %233 = sbr.rel (%p230) target = $region12
      $region11: #{ppmodel_forward.1} parent=5 // pred_region
        %s234 = ssub.s32 %s21, 1
        // Predicated region
        $region13: #{ppmodel_forward.1} parent=11 // pred_check
          %p235 = pneg %p68
        $region14: #{ppmodel_forward.1} parent=11 // pred_check_branch
          %237 = sbr.rel (%p235) target = $region16
        $region15: #{ppmodel_forward.1} parent=11 // pred_region
          %s239 = ssub.s32 64, 64
          %240 = vsyncadd [#allocation3], %s239
          %s242 = sshll.u32 [#allocation2], 4
          %s243 = int_to_ptr.vmem [resolvable:$true] %s242
          %245 = dma.hbm_to_vmem [thread:$0]  %s1, 64, %s243, [#allocation3]
        $region16: #{ppmodel_forward.1} parent=11 // pred_fallthru
          _
        // Predicated region
        $region17: #{ppmodel_forward.1} parent=11 // pred_check
          %p246 = pneg %p89
        $region18: #{ppmodel_forward.1} parent=11 // pred_check_branch
          %248 = sbr.rel (%p246) target = $region20
        $region19: #{ppmodel_forward.1} parent=11 // pred_region
          %s250 = ssub.s32 512, 512
          %251 = vsyncadd [#allocation6], %s250
          %s252 = sshll.u32 [#allocation5], 4
          %s253 = int_to_ptr.vmem [resolvable:$true] %s252
          %258 = dma.hbm_to_vmem [thread:$0]  %s2, 512, %s253, [#allocation6], 64, 64, 4
        $region20: #{ppmodel_forward.1} parent=11 // pred_fallthru
          _
        // Predicated region
        $region21: #{ppmodel_forward.1} parent=11 // pred_check
          %p259 = pneg %p110
        $region22: #{ppmodel_forward.1} parent=11 // pred_check_branch
          %261 = sbr.rel (%p259) target = $region24
        $region23: #{ppmodel_forward.1} parent=11 // pred_region
          %s263 = ssub.s32 1024, 1024
          %264 = vsyncadd [#allocation6], %s263
          %s265 = sshll.u32 [#allocation7], 4
          %s266 = int_to_ptr.vmem [resolvable:$true] %s265
          %271 = dma.hbm_to_vmem [thread:$0]  %s3, 1024, %s266, [#allocation6], 64, 64, 4
        $region24: #{ppmodel_forward.1} parent=11 // pred_fallthru
          _
        // Predicated region
        $region25: #{ppmodel_forward.1} parent=11 // pred_check
          %p272 = pneg %p131
        $region26: #{ppmodel_forward.1} parent=11 // pred_check_branch
          %274 = sbr.rel (%p272) target = $region28
        $region27: #{ppmodel_forward.1} parent=11 // pred_region
          %s276 = ssub.s32 4096, 4096
          %277 = vsyncadd [#allocation9], %s276
          %s278 = sshll.u32 [#allocation8], 4
          %s279 = int_to_ptr.vmem [resolvable:$true] %s278
          %284 = dma.hbm_to_vmem [thread:$0]  %s4, 4096, %s279, [#allocation9], 256, 256, 16
        $region28: #{ppmodel_forward.1} parent=11 // pred_fallthru
          _
        // Predicated region
        $region29: #{ppmodel_forward.1} parent=11 // pred_check
          %p285 = pneg %p152
        $region30: #{ppmodel_forward.1} parent=11 // pred_check_branch
          %287 = sbr.rel (%p285) target = $region32
        $region31: #{ppmodel_forward.1} parent=11 // pred_region
          %s289 = ssub.s32 16, 16
          %290 = vsyncadd [#allocation9], %s289
          %s292 = sshll.u32 [#allocation10], 4
          %s293 = int_to_ptr.vmem [resolvable:$true] %s292
          %295 = dma.hbm_to_vmem [thread:$0]  %s5, 16, %s293, [#allocation9]
        $region32: #{ppmodel_forward.1} parent=11 // pred_fallthru
          _
        // Predicated region
        $region33: #{ppmodel_forward.1} parent=11 // pred_check
          %p296 = pneg %p173
        $region34: #{ppmodel_forward.1} parent=11 // pred_check_branch
          %298 = sbr.rel (%p296) target = $region36
        $region35: #{ppmodel_forward.1} parent=11 // pred_region
          %s300 = ssub.s32 16, 16
          %301 = vsyncadd [#allocation12], %s300
          %s303 = sshll.u32 [#allocation11], 4
          %s304 = int_to_ptr.vmem [resolvable:$true] %s303
          %306 = dma.hbm_to_vmem [thread:$0]  %s6, 16, %s304, [#allocation12]
        $region36: #{ppmodel_forward.1} parent=11 // pred_fallthru
          _
        // Predicated region
        $region37: #{ppmodel_forward.1} parent=11 // pred_check
          %p307 = pneg %p194
        $region38: #{ppmodel_forward.1} parent=11 // pred_check_branch
          %309 = sbr.rel (%p307) target = $region40
        $region39: #{ppmodel_forward.1} parent=11 // pred_region
          %s311 = ssub.s32 16, 16
          %312 = vsyncadd [#allocation12], %s311
          %s314 = sshll.u32 [#allocation13], 4
          %s315 = int_to_ptr.vmem [resolvable:$true] %s314
          %317 = dma.hbm_to_vmem [thread:$0]  %s7, 16, %s315, [#allocation12]
        $region40: #{ppmodel_forward.1} parent=11 // pred_fallthru
          _
      $region12: #{ppmodel_forward.1} parent=5 // pred_fallthru
        _
      %p318 = scmp.lt.s32.totalorder %s21, 2
      // Predicated region
      $region41: #{ppmodel_forward.1} parent=5 // pred_check
        %p319 = pneg %p318
      $region42: #{ppmodel_forward.1} parent=5 // pred_check_branch
        %321 = sbr.rel (%p319) target = $region44
      $region43: #{ppmodel_forward.1} parent=5 // pred_region
        // Predicated region
        $region45: #{ppmodel_forward.1} parent=43 // pred_check
          %p322 = pneg %p41
        $region46: #{ppmodel_forward.1} parent=43 // pred_check_branch
          %324 = sbr.rel (%p322) target = $region48
        $region47: #{ppmodel_forward.1} parent=43 // pred_region
          %s325 = smul.u32 128, %s21
          %p326 = scmp.lt.s32.totalorder %s325, 255
          %s327 = scalar_select %p326, %s325, 255
          %s328 = smul.addr %s327, 8
          %s329 = scalar_lea.vmem %s0, %s328
          %s330 = smul.u32 128, %s21
        $region48: #{ppmodel_forward.1} parent=43 // pred_fallthru
          _
      $region44: #{ppmodel_forward.1} parent=5 // pred_fallthru
        _
      %p331 = scmp.le.s32.totalorder 1, %s21
      %p332 = scmp.lt.s32.totalorder %s21, 3
      %p333 = pnand %p331, %p332
      %p334 = pneg %p333
      // Predicated region
      $region49: #{ppmodel_forward.1} parent=5 // pred_check
        _
      $region50: #{ppmodel_forward.1} parent=5 // pred_check_branch
        %336 = sbr.rel (%p333) target = $region52
      $region51: #{ppmodel_forward.1} parent=5 // pred_region
        %s337 = ssub.s32 %s21, 1
        // Predicated region
        $region53: #{ppmodel_forward.1} parent=51 // pred_check
          %p338 = pneg %p68
        $region54: #{ppmodel_forward.1} parent=51 // pred_check_branch
          %340 = sbr.rel (%p338) target = $region56
        $region55: #{ppmodel_forward.1} parent=51 // pred_region
          %341 = dma.done [#allocation3], 64
        $region56: #{ppmodel_forward.1} parent=51 // pred_fallthru
          _
        // Predicated region
        $region57: #{ppmodel_forward.1} parent=51 // pred_check
          %p342 = pneg %p89
        $region58: #{ppmodel_forward.1} parent=51 // pred_check_branch
          %344 = sbr.rel (%p342) target = $region60
        $region59: #{ppmodel_forward.1} parent=51 // pred_region
          %345 = dma.done [#allocation6], 512
        $region60: #{ppmodel_forward.1} parent=51 // pred_fallthru
          _
        // Predicated region
        $region61: #{ppmodel_forward.1} parent=51 // pred_check
          %p346 = pneg %p110
        $region62: #{ppmodel_forward.1} parent=51 // pred_check_branch
          %348 = sbr.rel (%p346) target = $region64
        $region63: #{ppmodel_forward.1} parent=51 // pred_region
          %349 = dma.done [#allocation6], 1024
        $region64: #{ppmodel_forward.1} parent=51 // pred_fallthru
          _
        // Predicated region
        $region65: #{ppmodel_forward.1} parent=51 // pred_check
          %p350 = pneg %p131
        $region66: #{ppmodel_forward.1} parent=51 // pred_check_branch
          %352 = sbr.rel (%p350) target = $region68
        $region67: #{ppmodel_forward.1} parent=51 // pred_region
          %353 = dma.done [#allocation9], 4096
        $region68: #{ppmodel_forward.1} parent=51 // pred_fallthru
          _
        // Predicated region
        $region69: #{ppmodel_forward.1} parent=51 // pred_check
          %p354 = pneg %p152
        $region70: #{ppmodel_forward.1} parent=51 // pred_check_branch
          %356 = sbr.rel (%p354) target = $region72
        $region71: #{ppmodel_forward.1} parent=51 // pred_region
          %357 = dma.done [#allocation9], 16
        $region72: #{ppmodel_forward.1} parent=51 // pred_fallthru
          _
        // Predicated region
        $region73: #{ppmodel_forward.1} parent=51 // pred_check
          %p358 = pneg %p173
        $region74: #{ppmodel_forward.1} parent=51 // pred_check_branch
          %360 = sbr.rel (%p358) target = $region76
        $region75: #{ppmodel_forward.1} parent=51 // pred_region
          %361 = dma.done [#allocation12], 16
        $region76: #{ppmodel_forward.1} parent=51 // pred_fallthru
          _
        // Predicated region
        $region77: #{ppmodel_forward.1} parent=51 // pred_check
          %p362 = pneg %p194
        $region78: #{ppmodel_forward.1} parent=51 // pred_check_branch
          %364 = sbr.rel (%p362) target = $region80
        $region79: #{ppmodel_forward.1} parent=51 // pred_region
          %365 = dma.done [#allocation12], 16
        $region80: #{ppmodel_forward.1} parent=51 // pred_fallthru
          _
        %s366 = smul.u32 128, %s26
        %p367 = scmp.lt.s32.totalorder %s366, 255
        %s368 = scalar_select %p367, %s366, 255
        %s369 = smul.addr %s368, 8
        %s370 = scalar_lea.vmem %s0, %s369
        %p371 = pneg %p47
        %p372 = pneg %p44
        %p373 = pneg %p68
        %p374 = pneg %p65
        %p375 = pneg %p89
        %p376 = pneg %p86
        %p377 = pneg %p110
        %p378 = pneg %p107
        %p379 = pneg %p131
        %p380 = pneg %p128
        %p381 = pneg %p152
        %p382 = pneg %p149
        %p383 = pneg %p173
        %p384 = pneg %p170
        %p385 = pneg %p194
        %p386 = pneg %p191
        %p387 = pneg %p220
        %p388 = pneg %p217
        %s389 = sand.u32 %s207, 1
        %s390 = scalar_lea.sflag [#allocation4], %s389
        %s391 = sand.u32 %s207, 1
        %s392 = smul.addr %s391, 4096
        %s393 = scalar_lea.vmem [#allocation14], %s392
        %s394 = smul.u32 128, %s26
        %p395 = scmp.lt.s32.totalorder %s394, 255
        %s396 = scalar_select %p395, %s394, 255
        %s397 = smul.addr %s396, 8
        %s398 = scalar_lea.vmem %s0, %s397
        %s399 = smul.u32 128, %s26
        %s400 = smul.u32 128, %s26
        %v402 = vld [vmem:[%s398] sm:$0xff]
        %v403 = vld [vmem:[%s398 + $0x8] sm:$0xff]
        %v404 = vld [vmem:[%s398 + $0x10] sm:$0xff]
        %v405 = vld [vmem:[%s398 + $0x18] sm:$0xff]
        %v406 = vld [vmem:[%s398 + $0x20] sm:$0xff]
        %v407 = vld [vmem:[%s398 + $0x28] sm:$0xff]
        %v408 = vld [vmem:[%s398 + $0x30] sm:$0xff]
        %v409 = vld [vmem:[%s398 + $0x38] sm:$0xff]
        %v410 = vld [vmem:[%s398 + $0x40] sm:$0xff]
        %v411 = vld [vmem:[%s398 + $0x48] sm:$0xff]
        %v412 = vld [vmem:[%s398 + $0x50] sm:$0xff]
        %v413 = vld [vmem:[%s398 + $0x58] sm:$0xff]
        %v414 = vld [vmem:[%s398 + $0x60] sm:$0xff]
        %v415 = vld [vmem:[%s398 + $0x68] sm:$0xff]
        %v416 = vld [vmem:[%s398 + $0x70] sm:$0xff]
        %v417 = vld [vmem:[%s398 + $0x78] sm:$0xff]
        %v418 = vld [vmem:[%s398 + $0x80] sm:$0xff]
        %v419 = vld [vmem:[%s398 + $0x88] sm:$0xff]
        %v420 = vld [vmem:[%s398 + $0x90] sm:$0xff]
        %v421 = vld [vmem:[%s398 + $0x98] sm:$0xff]
        %v422 = vld [vmem:[%s398 + $0xa0] sm:$0xff]
        %v423 = vld [vmem:[%s398 + $0xa8] sm:$0xff]
        %v424 = vld [vmem:[%s398 + $0xb0] sm:$0xff]
        %v425 = vld [vmem:[%s398 + $0xb8] sm:$0xff]
        %v426 = vld [vmem:[%s398 + $0xc0] sm:$0xff]
        %v427 = vld [vmem:[%s398 + $0xc8] sm:$0xff]
        %v428 = vld [vmem:[%s398 + $0xd0] sm:$0xff]
        %v429 = vld [vmem:[%s398 + $0xd8] sm:$0xff]
        %v430 = vld [vmem:[%s398 + $0xe0] sm:$0xff]
        %v431 = vld [vmem:[%s398 + $0xe8] sm:$0xff]
        %v432 = vld [vmem:[%s398 + $0xf0] sm:$0xff]
        %v433 = vld [vmem:[%s398 + $0xf8] sm:$0xff]
        %v434 = vld [vmem:[%s398 + $0x100] sm:$0xff]
        %v435 = vld [vmem:[%s398 + $0x108] sm:$0xff]
        %v436 = vld [vmem:[%s398 + $0x110] sm:$0xff]
        %v437 = vld [vmem:[%s398 + $0x118] sm:$0xff]
        %v438 = vld [vmem:[%s398 + $0x120] sm:$0xff]
        %v439 = vld [vmem:[%s398 + $0x128] sm:$0xff]
        %v440 = vld [vmem:[%s398 + $0x130] sm:$0xff]
        %v441 = vld [vmem:[%s398 + $0x138] sm:$0xff]
        %v442 = vld [vmem:[%s398 + $0x140] sm:$0xff]
        %v443 = vld [vmem:[%s398 + $0x148] sm:$0xff]
        %v444 = vld [vmem:[%s398 + $0x150] sm:$0xff]
        %v445 = vld [vmem:[%s398 + $0x158] sm:$0xff]
        %v446 = vld [vmem:[%s398 + $0x160] sm:$0xff]
        %v447 = vld [vmem:[%s398 + $0x168] sm:$0xff]
        %v448 = vld [vmem:[%s398 + $0x170] sm:$0xff]
        %v449 = vld [vmem:[%s398 + $0x178] sm:$0xff]
        %v450 = vld [vmem:[%s398 + $0x180] sm:$0xff]
        %v451 = vld [vmem:[%s398 + $0x188] sm:$0xff]
        %v452 = vld [vmem:[%s398 + $0x190] sm:$0xff]
        %v453 = vld [vmem:[%s398 + $0x198] sm:$0xff]
        %v454 = vld [vmem:[%s398 + $0x1a0] sm:$0xff]
        %v455 = vld [vmem:[%s398 + $0x1a8] sm:$0xff]
        %v456 = vld [vmem:[%s398 + $0x1b0] sm:$0xff]
        %v457 = vld [vmem:[%s398 + $0x1b8] sm:$0xff]
        %v458 = vld [vmem:[%s398 + $0x1c0] sm:$0xff]
        %v459 = vld [vmem:[%s398 + $0x1c8] sm:$0xff]
        %v460 = vld [vmem:[%s398 + $0x1d0] sm:$0xff]
        %v461 = vld [vmem:[%s398 + $0x1d8] sm:$0xff]
        %v462 = vld [vmem:[%s398 + $0x1e0] sm:$0xff]
        %v463 = vld [vmem:[%s398 + $0x1e8] sm:$0xff]
        %v464 = vld [vmem:[%s398 + $0x1f0] sm:$0xff]
        %v465 = vld [vmem:[%s398 + $0x1f8] sm:$0xff]
        %v466 = vld [vmem:[%s398 + $0x200] sm:$0xff]
        %v467 = vld [vmem:[%s398 + $0x208] sm:$0xff]
        %v468 = vld [vmem:[%s398 + $0x210] sm:$0xff]
        %v469 = vld [vmem:[%s398 + $0x218] sm:$0xff]
        %v470 = vld [vmem:[%s398 + $0x220] sm:$0xff]
        %v471 = vld [vmem:[%s398 + $0x228] sm:$0xff]
        %v472 = vld [vmem:[%s398 + $0x230] sm:$0xff]
        %v473 = vld [vmem:[%s398 + $0x238] sm:$0xff]
        %v474 = vld [vmem:[%s398 + $0x240] sm:$0xff]
        %v475 = vld [vmem:[%s398 + $0x248] sm:$0xff]
        %v476 = vld [vmem:[%s398 + $0x250] sm:$0xff]
        %v477 = vld [vmem:[%s398 + $0x258] sm:$0xff]
        %v478 = vld [vmem:[%s398 + $0x260] sm:$0xff]
        %v479 = vld [vmem:[%s398 + $0x268] sm:$0xff]
        %v480 = vld [vmem:[%s398 + $0x270] sm:$0xff]
        %v481 = vld [vmem:[%s398 + $0x278] sm:$0xff]
        %v482 = vld [vmem:[%s398 + $0x280] sm:$0xff]
        %v483 = vld [vmem:[%s398 + $0x288] sm:$0xff]
        %v484 = vld [vmem:[%s398 + $0x290] sm:$0xff]
        %v485 = vld [vmem:[%s398 + $0x298] sm:$0xff]
        %v486 = vld [vmem:[%s398 + $0x2a0] sm:$0xff]
        %v487 = vld [vmem:[%s398 + $0x2a8] sm:$0xff]
        %v488 = vld [vmem:[%s398 + $0x2b0] sm:$0xff]
        %v489 = vld [vmem:[%s398 + $0x2b8] sm:$0xff]
        %v490 = vld [vmem:[%s398 + $0x2c0] sm:$0xff]
        %v491 = vld [vmem:[%s398 + $0x2c8] sm:$0xff]
        %v492 = vld [vmem:[%s398 + $0x2d0] sm:$0xff]
        %v493 = vld [vmem:[%s398 + $0x2d8] sm:$0xff]
        %v494 = vld [vmem:[%s398 + $0x2e0] sm:$0xff]
        %v495 = vld [vmem:[%s398 + $0x2e8] sm:$0xff]
        %v496 = vld [vmem:[%s398 + $0x2f0] sm:$0xff]
        %v497 = vld [vmem:[%s398 + $0x2f8] sm:$0xff]
        %v498 = vld [vmem:[%s398 + $0x300] sm:$0xff]
        %v499 = vld [vmem:[%s398 + $0x308] sm:$0xff]
        %v500 = vld [vmem:[%s398 + $0x310] sm:$0xff]
        %v501 = vld [vmem:[%s398 + $0x318] sm:$0xff]
        %v502 = vld [vmem:[%s398 + $0x320] sm:$0xff]
        %v503 = vld [vmem:[%s398 + $0x328] sm:$0xff]
        %v504 = vld [vmem:[%s398 + $0x330] sm:$0xff]
        %v505 = vld [vmem:[%s398 + $0x338] sm:$0xff]
        %v506 = vld [vmem:[%s398 + $0x340] sm:$0xff]
        %v507 = vld [vmem:[%s398 + $0x348] sm:$0xff]
        %v508 = vld [vmem:[%s398 + $0x350] sm:$0xff]
        %v509 = vld [vmem:[%s398 + $0x358] sm:$0xff]
        %v510 = vld [vmem:[%s398 + $0x360] sm:$0xff]
        %v511 = vld [vmem:[%s398 + $0x368] sm:$0xff]
        %v512 = vld [vmem:[%s398 + $0x370] sm:$0xff]
        %v513 = vld [vmem:[%s398 + $0x378] sm:$0xff]
        %v514 = vld [vmem:[%s398 + $0x380] sm:$0xff]
        %v515 = vld [vmem:[%s398 + $0x388] sm:$0xff]
        %v516 = vld [vmem:[%s398 + $0x390] sm:$0xff]
        %v517 = vld [vmem:[%s398 + $0x398] sm:$0xff]
        %v518 = vld [vmem:[%s398 + $0x3a0] sm:$0xff]
        %v519 = vld [vmem:[%s398 + $0x3a8] sm:$0xff]
        %v520 = vld [vmem:[%s398 + $0x3b0] sm:$0xff]
        %v521 = vld [vmem:[%s398 + $0x3b8] sm:$0xff]
        %v522 = vld [vmem:[%s398 + $0x3c0] sm:$0xff]
        %v523 = vld [vmem:[%s398 + $0x3c8] sm:$0xff]
        %v524 = vld [vmem:[%s398 + $0x3d0] sm:$0xff]
        %v525 = vld [vmem:[%s398 + $0x3d8] sm:$0xff]
        %v526 = vld [vmem:[%s398 + $0x3e0] sm:$0xff]
        %v527 = vld [vmem:[%s398 + $0x3e8] sm:$0xff]
        %v528 = vld [vmem:[%s398 + $0x3f0] sm:$0xff]
        %v529 = vld [vmem:[%s398 + $0x3f8] sm:$0xff]
        %v530 = vpack.c.bf16 %v403, %v402
        %v531 = vpack.c.bf16 %v405, %v404
        %v532 = vpack.c.bf16 %v407, %v406
        %v533 = vpack.c.bf16 %v409, %v408
        %v534 = vpack.c.bf16 %v411, %v410
        %v535 = vpack.c.bf16 %v413, %v412
        %v536 = vpack.c.bf16 %v415, %v414
        %v537 = vpack.c.bf16 %v417, %v416
        %v538 = vpack.c.bf16 %v419, %v418
        %v539 = vpack.c.bf16 %v421, %v420
        %v540 = vpack.c.bf16 %v423, %v422
        %v541 = vpack.c.bf16 %v425, %v424
        %v542 = vpack.c.bf16 %v427, %v426
        %v543 = vpack.c.bf16 %v429, %v428
        %v544 = vpack.c.bf16 %v431, %v430
        %v545 = vpack.c.bf16 %v433, %v432
        %v546 = vpack.c.bf16 %v435, %v434
        %v547 = vpack.c.bf16 %v437, %v436
        %v548 = vpack.c.bf16 %v439, %v438
        %v549 = vpack.c.bf16 %v441, %v440
        %v550 = vpack.c.bf16 %v443, %v442
        %v551 = vpack.c.bf16 %v445, %v444
        %v552 = vpack.c.bf16 %v447, %v446
        %v553 = vpack.c.bf16 %v449, %v448
        %v554 = vpack.c.bf16 %v451, %v450
        %v555 = vpack.c.bf16 %v453, %v452
        %v556 = vpack.c.bf16 %v455, %v454
        %v557 = vpack.c.bf16 %v457, %v456
        %v558 = vpack.c.bf16 %v459, %v458
        %v559 = vpack.c.bf16 %v461, %v460
        %v560 = vpack.c.bf16 %v463, %v462
        %v561 = vpack.c.bf16 %v465, %v464
        %v562 = vpack.c.bf16 %v467, %v466
        %v563 = vpack.c.bf16 %v469, %v468
        %v564 = vpack.c.bf16 %v471, %v470
        %v565 = vpack.c.bf16 %v473, %v472
        %v566 = vpack.c.bf16 %v475, %v474
        %v567 = vpack.c.bf16 %v477, %v476
        %v568 = vpack.c.bf16 %v479, %v478
        %v569 = vpack.c.bf16 %v481, %v480
        %v570 = vpack.c.bf16 %v483, %v482
        %v571 = vpack.c.bf16 %v485, %v484
        %v572 = vpack.c.bf16 %v487, %v486
        %v573 = vpack.c.bf16 %v489, %v488
        %v574 = vpack.c.bf16 %v491, %v490
        %v575 = vpack.c.bf16 %v493, %v492
        %v576 = vpack.c.bf16 %v495, %v494
        %v577 = vpack.c.bf16 %v497, %v496
        %v578 = vpack.c.bf16 %v499, %v498
        %v579 = vpack.c.bf16 %v501, %v500
        %v580 = vpack.c.bf16 %v503, %v502
        %v581 = vpack.c.bf16 %v505, %v504
        %v582 = vpack.c.bf16 %v507, %v506
        %v583 = vpack.c.bf16 %v509, %v508
        %v584 = vpack.c.bf16 %v511, %v510
        %v585 = vpack.c.bf16 %v513, %v512
        %v586 = vpack.c.bf16 %v515, %v514
        %v587 = vpack.c.bf16 %v517, %v516
        %v588 = vpack.c.bf16 %v519, %v518
        %v589 = vpack.c.bf16 %v521, %v520
        %v590 = vpack.c.bf16 %v523, %v522
        %v591 = vpack.c.bf16 %v525, %v524
        %v592 = vpack.c.bf16 %v527, %v526
        %v593 = vpack.c.bf16 %v529, %v528
        %v594 = vld [vmem:[#allocation2] sm:$0xf]
        %v595 = vld [vmem:[#allocation10] sm:$0x1]
        %v597 = vlaneseq
        %v598 = vshrl.u32 %v597, 7
        %v599 = vsub.s32 0, %v598
        %v600 = vrot.slane %v595, %v599
        %vm602 = vcmask 64512
        %v604 = vsel %vm602, %v530, 0
        %v607 = vsel %vm602, %v531, 0
        %v610 = vsel %vm602, %v532, 0
        %v613 = vsel %vm602, %v533, 0
        %v616 = vsel %vm602, %v534, 0
        %v619 = vsel %vm602, %v535, 0
        %v622 = vsel %vm602, %v536, 0
        %v625 = vsel %vm602, %v537, 0
        %v628 = vsel %vm602, %v538, 0
        %v631 = vsel %vm602, %v539, 0
        %v634 = vsel %vm602, %v540, 0
        %v637 = vsel %vm602, %v541, 0
        %v640 = vsel %vm602, %v542, 0
        %v643 = vsel %vm602, %v543, 0
        %v646 = vsel %vm602, %v544, 0
        %v649 = vsel %vm602, %v545, 0
        %v652 = vsel %vm602, %v546, 0
        %v655 = vsel %vm602, %v547, 0
        %v658 = vsel %vm602, %v548, 0
        %v661 = vsel %vm602, %v549, 0
        %v664 = vsel %vm602, %v550, 0
        %v667 = vsel %vm602, %v551, 0
        %v670 = vsel %vm602, %v552, 0
        %v673 = vsel %vm602, %v553, 0
        %v676 = vsel %vm602, %v554, 0
        %v679 = vsel %vm602, %v555, 0
        %v682 = vsel %vm602, %v556, 0
        %v685 = vsel %vm602, %v557, 0
        %v688 = vsel %vm602, %v558, 0
        %v691 = vsel %vm602, %v559, 0
        %v694 = vsel %vm602, %v560, 0
        %v697 = vsel %vm602, %v561, 0
        %v700 = vsel %vm602, %v562, 0
        %v703 = vsel %vm602, %v563, 0
        %v706 = vsel %vm602, %v564, 0
        %v709 = vsel %vm602, %v565, 0
        %v712 = vsel %vm602, %v566, 0
        %v715 = vsel %vm602, %v567, 0
        %v718 = vsel %vm602, %v568, 0
        %v721 = vsel %vm602, %v569, 0
        %v724 = vsel %vm602, %v570, 0
        %v727 = vsel %vm602, %v571, 0
        %v730 = vsel %vm602, %v572, 0
        %v733 = vsel %vm602, %v573, 0
        %v736 = vsel %vm602, %v574, 0
        %v739 = vsel %vm602, %v575, 0
        %v742 = vsel %vm602, %v576, 0
        %v745 = vsel %vm602, %v577, 0
        %v748 = vsel %vm602, %v578, 0
        %v751 = vsel %vm602, %v579, 0
        %v754 = vsel %vm602, %v580, 0
        %v757 = vsel %vm602, %v581, 0
        %v760 = vsel %vm602, %v582, 0
        %v763 = vsel %vm602, %v583, 0
        %v766 = vsel %vm602, %v584, 0
        %v769 = vsel %vm602, %v585, 0
        %v772 = vsel %vm602, %v586, 0
        %v775 = vsel %vm602, %v587, 0
        %v778 = vsel %vm602, %v588, 0
        %v781 = vsel %vm602, %v589, 0
        %v784 = vsel %vm602, %v590, 0
        %v787 = vsel %vm602, %v591, 0
        %v790 = vsel %vm602, %v592, 0
        %v793 = vsel %vm602, %v593, 0
        %vm795 = vcmask 1043456
        %v797 = vsel %vm795, %v594, 0
        %799 = vmatprep.subr.bf16.mxu0 0
        %800 = vmatpush1.bf16.msra.mxu0 0
        %801 = vmatprep.subr.bf16.mxu0 0
        %802 = vmatpush1.bf16.msra.mxu0 0
        %803 = vmatprep.subr.bf16.mxu0 0
        %804 = vmatpush1.bf16.msra.mxu0 0
        %805 = vmatprep.subr.bf16.mxu0 0
        %806 = vmatpush1.bf16.msra.mxu0 0
        %807 = vmatprep.subr.bf16.mxu0 0
        %808 = vmatpush1.bf16.msra.mxu0 0
        %809 = vmatprep.subr.bf16.mxu0 0
        %810 = vmatpush1.bf16.msra.mxu0 0
        %811 = vmatprep.subr.bf16.mxu0 0
        %812 = vmatpush1.bf16.msra.mxu0 0
        %813 = vmatprep.subr.bf16.mxu0 0
        %814 = vmatpush1.bf16.msra.mxu0 %v797
        %815 = vmatprep.subr.bf16.mxu0 0
        %816 = vmatpush2.bf16.msra.mxu0 0
        %817 = vmatprep.subr.bf16.mxu0 0
        %818 = vmatpush2.bf16.msra.mxu0 0
        %819 = vmatprep.subr.bf16.mxu0 0
        %820 = vmatpush2.bf16.msra.mxu0 0
        %821 = vmatprep.subr.bf16.mxu0 0
        %822 = vmatpush2.bf16.msra.mxu0 0
        %823 = vmatprep.subr.bf16.mxu0 0
        %824 = vmatpush2.bf16.msra.mxu0 0
        %825 = vmatprep.subr.bf16.mxu0 0
        %826 = vmatpush2.bf16.msra.mxu0 0
        %827 = vmatprep.subr.bf16.mxu0 0
        %828 = vmatpush2.bf16.msra.mxu0 0
        %829 = vmatprep.subr.bf16.mxu0 0
        %830 = vmatpush2.bf16.msra.mxu0 0
        %831 = vmatprep.mubr.bf16.mxu0 0
        %832 = vmatmul.mubr.bf16.gmra.mxu0 %v604
        %v833 = vpop.f32.mrf.mxu0
        %v834 = vadd.f32 %v600, %v833
        %v835 = vpop.f32.mrf.mxu0
        %v836 = vpop.f32.mrf.mxu0
        %v837 = vadd.f32 %v600, %v836
        %v838 = vpop.f32.mrf.mxu0
        %839 = vmatprep.mubr.bf16.mxu0 0
        %840 = vmatmul.mubr.bf16.gmra.mxu0 %v607
        %v841 = vpop.f32.mrf.mxu0
        %v842 = vadd.f32 %v600, %v841
        %v843 = vpop.f32.mrf.mxu0
        %v844 = vpop.f32.mrf.mxu0
        %v845 = vadd.f32 %v600, %v844
        %v846 = vpop.f32.mrf.mxu0
        %847 = vmatprep.mubr.bf16.mxu0 0
        %848 = vmatmul.mubr.bf16.gmra.mxu0 %v610
        %v849 = vpop.f32.mrf.mxu0
        %v850 = vadd.f32 %v600, %v849
        %v851 = vpop.f32.mrf.mxu0
        %v852 = vpop.f32.mrf.mxu0
        %v853 = vadd.f32 %v600, %v852
        %v854 = vpop.f32.mrf.mxu0
        %855 = vmatprep.mubr.bf16.mxu0 0
        %856 = vmatmul.mubr.bf16.gmra.mxu0 %v613
        %v857 = vpop.f32.mrf.mxu0
        %v858 = vadd.f32 %v600, %v857
        %v859 = vpop.f32.mrf.mxu0
        %v860 = vpop.f32.mrf.mxu0
        %v861 = vadd.f32 %v600, %v860
        %v862 = vpop.f32.mrf.mxu0
        %863 = vmatprep.mubr.bf16.mxu0 0
        %864 = vmatmul.mubr.bf16.gmra.mxu0 %v616
        %v865 = vpop.f32.mrf.mxu0
        %v866 = vadd.f32 %v600, %v865
        %v867 = vpop.f32.mrf.mxu0
        %v868 = vpop.f32.mrf.mxu0
        %v869 = vadd.f32 %v600, %v868
        %v870 = vpop.f32.mrf.mxu0
        %871 = vmatprep.mubr.bf16.mxu0 0
        %872 = vmatmul.mubr.bf16.gmra.mxu0 %v619
        %v873 = vpop.f32.mrf.mxu0
        %v874 = vadd.f32 %v600, %v873
        %v875 = vpop.f32.mrf.mxu0
        %v876 = vpop.f32.mrf.mxu0
        %v877 = vadd.f32 %v600, %v876
        %v878 = vpop.f32.mrf.mxu0
        %879 = vmatprep.mubr.bf16.mxu0 0
        %880 = vmatmul.mubr.bf16.gmra.mxu0 %v622
        %v881 = vpop.f32.mrf.mxu0
        %v882 = vadd.f32 %v600, %v881
        %v883 = vpop.f32.mrf.mxu0
        %v884 = vpop.f32.mrf.mxu0
        %v885 = vadd.f32 %v600, %v884
        %v886 = vpop.f32.mrf.mxu0
        %887 = vmatprep.mubr.bf16.mxu0 0
        %888 = vmatmul.mubr.bf16.gmra.mxu0 %v625
        %v889 = vpop.f32.mrf.mxu0
        %v890 = vadd.f32 %v600, %v889
        %v891 = vpop.f32.mrf.mxu0
        %v892 = vpop.f32.mrf.mxu0
        %v893 = vadd.f32 %v600, %v892
        %v894 = vpop.f32.mrf.mxu0
        %895 = vmatprep.mubr.bf16.mxu0 0
        %896 = vmatmul.mubr.bf16.gmra.mxu0 %v628
        %v897 = vpop.f32.mrf.mxu0
        %v898 = vadd.f32 %v600, %v897
        %v899 = vpop.f32.mrf.mxu0
        %v900 = vpop.f32.mrf.mxu0
        %v901 = vadd.f32 %v600, %v900
        %v902 = vpop.f32.mrf.mxu0
        %903 = vmatprep.mubr.bf16.mxu0 0
        %904 = vmatmul.mubr.bf16.gmra.mxu0 %v631
        %v905 = vpop.f32.mrf.mxu0
        %v906 = vadd.f32 %v600, %v905
        %v907 = vpop.f32.mrf.mxu0
        %v908 = vpop.f32.mrf.mxu0
        %v909 = vadd.f32 %v600, %v908
        %v910 = vpop.f32.mrf.mxu0
        %911 = vmatprep.mubr.bf16.mxu0 0
        %912 = vmatmul.mubr.bf16.gmra.mxu0 %v634
        %v913 = vpop.f32.mrf.mxu0
        %v914 = vadd.f32 %v600, %v913
        %v915 = vpop.f32.mrf.mxu0
        %v916 = vpop.f32.mrf.mxu0
        %v917 = vadd.f32 %v600, %v916
        %v918 = vpop.f32.mrf.mxu0
        %919 = vmatprep.mubr.bf16.mxu0 0
        %920 = vmatmul.mubr.bf16.gmra.mxu0 %v637
        %v921 = vpop.f32.mrf.mxu0
        %v922 = vadd.f32 %v600, %v921
        %v923 = vpop.f32.mrf.mxu0
        %v924 = vpop.f32.mrf.mxu0
        %v925 = vadd.f32 %v600, %v924
        %v926 = vpop.f32.mrf.mxu0
        %927 = vmatprep.mubr.bf16.mxu0 0
        %928 = vmatmul.mubr.bf16.gmra.mxu0 %v640
        %v929 = vpop.f32.mrf.mxu0
        %v930 = vadd.f32 %v600, %v929
        %v931 = vpop.f32.mrf.mxu0
        %v932 = vpop.f32.mrf.mxu0
        %v933 = vadd.f32 %v600, %v932
        %v934 = vpop.f32.mrf.mxu0
        %935 = vmatprep.mubr.bf16.mxu0 0
        %936 = vmatmul.mubr.bf16.gmra.mxu0 %v643
        %v937 = vpop.f32.mrf.mxu0
        %v938 = vadd.f32 %v600, %v937
        %v939 = vpop.f32.mrf.mxu0
        %v940 = vpop.f32.mrf.mxu0
        %v941 = vadd.f32 %v600, %v940
        %v942 = vpop.f32.mrf.mxu0
        %943 = vmatprep.mubr.bf16.mxu0 0
        %944 = vmatmul.mubr.bf16.gmra.mxu0 %v646
        %v945 = vpop.f32.mrf.mxu0
        %v946 = vadd.f32 %v600, %v945
        %v947 = vpop.f32.mrf.mxu0
        %v948 = vpop.f32.mrf.mxu0
        %v949 = vadd.f32 %v600, %v948
        %v950 = vpop.f32.mrf.mxu0
        %951 = vmatprep.mubr.bf16.mxu0 0
        %952 = vmatmul.mubr.bf16.gmra.mxu0 %v649
        %v953 = vpop.f32.mrf.mxu0
        %v954 = vadd.f32 %v600, %v953
        %v955 = vpop.f32.mrf.mxu0
        %v956 = vpop.f32.mrf.mxu0
        %v957 = vadd.f32 %v600, %v956
        %v958 = vpop.f32.mrf.mxu0
        %959 = vmatprep.mubr.bf16.mxu0 0
        %960 = vmatmul.mubr.bf16.gmra.mxu0 %v652
        %v961 = vpop.f32.mrf.mxu0
        %v962 = vadd.f32 %v600, %v961
        %v963 = vpop.f32.mrf.mxu0
        %v964 = vpop.f32.mrf.mxu0
        %v965 = vadd.f32 %v600, %v964
        %v966 = vpop.f32.mrf.mxu0
        %967 = vmatprep.mubr.bf16.mxu0 0
        %968 = vmatmul.mubr.bf16.gmra.mxu0 %v655
        %v969 = vpop.f32.mrf.mxu0
        %v970 = vadd.f32 %v600, %v969
        %v971 = vpop.f32.mrf.mxu0
        %v972 = vpop.f32.mrf.mxu0
        %v973 = vadd.f32 %v600, %v972
        %v974 = vpop.f32.mrf.mxu0
        %975 = vmatprep.mubr.bf16.mxu0 0
        %976 = vmatmul.mubr.bf16.gmra.mxu0 %v658
        %v977 = vpop.f32.mrf.mxu0
        %v978 = vadd.f32 %v600, %v977
        %v979 = vpop.f32.mrf.mxu0
        %v980 = vpop.f32.mrf.mxu0
        %v981 = vadd.f32 %v600, %v980
        %v982 = vpop.f32.mrf.mxu0
        %983 = vmatprep.mubr.bf16.mxu0 0
        %984 = vmatmul.mubr.bf16.gmra.mxu0 %v661
        %v985 = vpop.f32.mrf.mxu0
        %v986 = vadd.f32 %v600, %v985
        %v987 = vpop.f32.mrf.mxu0
        %v988 = vpop.f32.mrf.mxu0
        %v989 = vadd.f32 %v600, %v988
        %v990 = vpop.f32.mrf.mxu0
        %991 = vmatprep.mubr.bf16.mxu0 0
        %992 = vmatmul.mubr.bf16.gmra.mxu0 %v664
        %v993 = vpop.f32.mrf.mxu0
        %v994 = vadd.f32 %v600, %v993
        %v995 = vpop.f32.mrf.mxu0
        %v996 = vpop.f32.mrf.mxu0
        %v997 = vadd.f32 %v600, %v996
        %v998 = vpop.f32.mrf.mxu0
        %999 = vmatprep.mubr.bf16.mxu0 0
        %1000 = vmatmul.mubr.bf16.gmra.mxu0 %v667
        %v1001 = vpop.f32.mrf.mxu0
        %v1002 = vadd.f32 %v600, %v1001
        %v1003 = vpop.f32.mrf.mxu0
        %v1004 = vpop.f32.mrf.mxu0
        %v1005 = vadd.f32 %v600, %v1004
        %v1006 = vpop.f32.mrf.mxu0
        %1007 = vmatprep.mubr.bf16.mxu0 0
        %1008 = vmatmul.mubr.bf16.gmra.mxu0 %v670
        %v1009 = vpop.f32.mrf.mxu0
        %v1010 = vadd.f32 %v600, %v1009
        %v1011 = vpop.f32.mrf.mxu0
        %v1012 = vpop.f32.mrf.mxu0
        %v1013 = vadd.f32 %v600, %v1012
        %v1014 = vpop.f32.mrf.mxu0
        %1015 = vmatprep.mubr.bf16.mxu0 0
        %1016 = vmatmul.mubr.bf16.gmra.mxu0 %v673
        %v1017 = vpop.f32.mrf.mxu0
        %v1018 = vadd.f32 %v600, %v1017
        %v1019 = vpop.f32.mrf.mxu0
        %v1020 = vpop.f32.mrf.mxu0
        %v1021 = vadd.f32 %v600, %v1020
        %v1022 = vpop.f32.mrf.mxu0
        %1023 = vmatprep.mubr.bf16.mxu0 0
        %1024 = vmatmul.mubr.bf16.gmra.mxu0 %v676
        %v1025 = vpop.f32.mrf.mxu0
        %v1026 = vadd.f32 %v600, %v1025
        %v1027 = vpop.f32.mrf.mxu0
        %v1028 = vpop.f32.mrf.mxu0
        %v1029 = vadd.f32 %v600, %v1028
        %v1030 = vpop.f32.mrf.mxu0
        %1031 = vmatprep.mubr.bf16.mxu0 0
        %1032 = vmatmul.mubr.bf16.gmra.mxu0 %v679
        %v1033 = vpop.f32.mrf.mxu0
        %v1034 = vadd.f32 %v600, %v1033
        %v1035 = vpop.f32.mrf.mxu0
        %v1036 = vpop.f32.mrf.mxu0
        %v1037 = vadd.f32 %v600, %v1036
        %v1038 = vpop.f32.mrf.mxu0
        %1039 = vmatprep.mubr.bf16.mxu0 0
        %1040 = vmatmul.mubr.bf16.gmra.mxu0 %v682
        %v1041 = vpop.f32.mrf.mxu0
        %v1042 = vadd.f32 %v600, %v1041
        %v1043 = vpop.f32.mrf.mxu0
        %v1044 = vpop.f32.mrf.mxu0
        %v1045 = vadd.f32 %v600, %v1044
        %v1046 = vpop.f32.mrf.mxu0
        %1047 = vmatprep.mubr.bf16.mxu0 0
        %1048 = vmatmul.mubr.bf16.gmra.mxu0 %v685
        %v1049 = vpop.f32.mrf.mxu0
        %v1050 = vadd.f32 %v600, %v1049
        %v1051 = vpop.f32.mrf.mxu0
        %v1052 = vpop.f32.mrf.mxu0
        %v1053 = vadd.f32 %v600, %v1052
        %v1054 = vpop.f32.mrf.mxu0
        %1055 = vmatprep.mubr.bf16.mxu0 0
        %1056 = vmatmul.mubr.bf16.gmra.mxu0 %v688
        %v1057 = vpop.f32.mrf.mxu0
        %v1058 = vadd.f32 %v600, %v1057
        %v1059 = vpop.f32.mrf.mxu0
        %v1060 = vpop.f32.mrf.mxu0
        %v1061 = vadd.f32 %v600, %v1060
        %v1062 = vpop.f32.mrf.mxu0
        %1063 = vmatprep.mubr.bf16.mxu0 0
        %1064 = vmatmul.mubr.bf16.gmra.mxu0 %v691
        %v1065 = vpop.f32.mrf.mxu0
        %v1066 = vadd.f32 %v600, %v1065
        %v1067 = vpop.f32.mrf.mxu0
        %v1068 = vpop.f32.mrf.mxu0
        %v1069 = vadd.f32 %v600, %v1068
        %v1070 = vpop.f32.mrf.mxu0
        %1071 = vmatprep.mubr.bf16.mxu0 0
        %1072 = vmatmul.mubr.bf16.gmra.mxu0 %v694
        %v1073 = vpop.f32.mrf.mxu0
        %v1074 = vadd.f32 %v600, %v1073
        %v1075 = vpop.f32.mrf.mxu0
        %v1076 = vpop.f32.mrf.mxu0
        %v1077 = vadd.f32 %v600, %v1076
        %v1078 = vpop.f32.mrf.mxu0
        %1079 = vmatprep.mubr.bf16.mxu0 0
        %1080 = vmatmul.mubr.bf16.gmra.mxu0 %v697
        %v1081 = vpop.f32.mrf.mxu0
        %v1082 = vadd.f32 %v600, %v1081
        %v1083 = vpop.f32.mrf.mxu0
        %v1084 = vpop.f32.mrf.mxu0
        %v1085 = vadd.f32 %v600, %v1084
        %v1086 = vpop.f32.mrf.mxu0
        %1087 = vmatprep.mubr.bf16.mxu0 0
        %1088 = vmatmul.mubr.bf16.gmra.mxu0 %v700
        %v1089 = vpop.f32.mrf.mxu0
        %v1090 = vadd.f32 %v600, %v1089
        %v1091 = vpop.f32.mrf.mxu0
        %v1092 = vpop.f32.mrf.mxu0
        %v1093 = vadd.f32 %v600, %v1092
        %v1094 = vpop.f32.mrf.mxu0
        %1095 = vmatprep.mubr.bf16.mxu0 0
        %1096 = vmatmul.mubr.bf16.gmra.mxu0 %v703
        %v1097 = vpop.f32.mrf.mxu0
        %v1098 = vadd.f32 %v600, %v1097
        %v1099 = vpop.f32.mrf.mxu0
        %v1100 = vpop.f32.mrf.mxu0
        %v1101 = vadd.f32 %v600, %v1100
        %v1102 = vpop.f32.mrf.mxu0
        %1103 = vmatprep.mubr.bf16.mxu0 0
        %1104 = vmatmul.mubr.bf16.gmra.mxu0 %v706
        %v1105 = vpop.f32.mrf.mxu0
        %v1106 = vadd.f32 %v600, %v1105
        %v1107 = vpop.f32.mrf.mxu0
        %v1108 = vpop.f32.mrf.mxu0
        %v1109 = vadd.f32 %v600, %v1108
        %v1110 = vpop.f32.mrf.mxu0
        %1111 = vmatprep.mubr.bf16.mxu0 0
        %1112 = vmatmul.mubr.bf16.gmra.mxu0 %v709
        %v1113 = vpop.f32.mrf.mxu0
        %v1114 = vadd.f32 %v600, %v1113
        %v1115 = vpop.f32.mrf.mxu0
        %v1116 = vpop.f32.mrf.mxu0
        %v1117 = vadd.f32 %v600, %v1116
        %v1118 = vpop.f32.mrf.mxu0
        %1119 = vmatprep.mubr.bf16.mxu0 0
        %1120 = vmatmul.mubr.bf16.gmra.mxu0 %v712
        %v1121 = vpop.f32.mrf.mxu0
        %v1122 = vadd.f32 %v600, %v1121
        %v1123 = vpop.f32.mrf.mxu0
        %v1124 = vpop.f32.mrf.mxu0
        %v1125 = vadd.f32 %v600, %v1124
        %v1126 = vpop.f32.mrf.mxu0
        %1127 = vmatprep.mubr.bf16.mxu0 0
        %1128 = vmatmul.mubr.bf16.gmra.mxu0 %v715
        %v1129 = vpop.f32.mrf.mxu0
        %v1130 = vadd.f32 %v600, %v1129
        %v1131 = vpop.f32.mrf.mxu0
        %v1132 = vpop.f32.mrf.mxu0
        %v1133 = vadd.f32 %v600, %v1132
        %v1134 = vpop.f32.mrf.mxu0
        %1135 = vmatprep.mubr.bf16.mxu0 0
        %1136 = vmatmul.mubr.bf16.gmra.mxu0 %v718
        %v1137 = vpop.f32.mrf.mxu0
        %v1138 = vadd.f32 %v600, %v1137
        %v1139 = vpop.f32.mrf.mxu0
        %v1140 = vpop.f32.mrf.mxu0
        %v1141 = vadd.f32 %v600, %v1140
        %v1142 = vpop.f32.mrf.mxu0
        %1143 = vmatprep.mubr.bf16.mxu0 0
        %1144 = vmatmul.mubr.bf16.gmra.mxu0 %v721
        %v1145 = vpop.f32.mrf.mxu0
        %v1146 = vadd.f32 %v600, %v1145
        %v1147 = vpop.f32.mrf.mxu0
        %v1148 = vpop.f32.mrf.mxu0
        %v1149 = vadd.f32 %v600, %v1148
        %v1150 = vpop.f32.mrf.mxu0
        %1151 = vmatprep.mubr.bf16.mxu0 0
        %1152 = vmatmul.mubr.bf16.gmra.mxu0 %v724
        %v1153 = vpop.f32.mrf.mxu0
        %v1154 = vadd.f32 %v600, %v1153
        %v1155 = vpop.f32.mrf.mxu0
        %v1156 = vpop.f32.mrf.mxu0
        %v1157 = vadd.f32 %v600, %v1156
        %v1158 = vpop.f32.mrf.mxu0
        %1159 = vmatprep.mubr.bf16.mxu0 0
        %1160 = vmatmul.mubr.bf16.gmra.mxu0 %v727
        %v1161 = vpop.f32.mrf.mxu0
        %v1162 = vadd.f32 %v600, %v1161
        %v1163 = vpop.f32.mrf.mxu0
        %v1164 = vpop.f32.mrf.mxu0
        %v1165 = vadd.f32 %v600, %v1164
        %v1166 = vpop.f32.mrf.mxu0
        %1167 = vmatprep.mubr.bf16.mxu0 0
        %1168 = vmatmul.mubr.bf16.gmra.mxu0 %v730
        %v1169 = vpop.f32.mrf.mxu0
        %v1170 = vadd.f32 %v600, %v1169
        %v1171 = vpop.f32.mrf.mxu0
        %v1172 = vpop.f32.mrf.mxu0
        %v1173 = vadd.f32 %v600, %v1172
        %v1174 = vpop.f32.mrf.mxu0
        %1175 = vmatprep.mubr.bf16.mxu0 0
        %1176 = vmatmul.mubr.bf16.gmra.mxu0 %v733
        %v1177 = vpop.f32.mrf.mxu0
        %v1178 = vadd.f32 %v600, %v1177
        %v1179 = vpop.f32.mrf.mxu0
        %v1180 = vpop.f32.mrf.mxu0
        %v1181 = vadd.f32 %v600, %v1180
        %v1182 = vpop.f32.mrf.mxu0
        %1183 = vmatprep.mubr.bf16.mxu0 0
        %1184 = vmatmul.mubr.bf16.gmra.mxu0 %v736
        %v1185 = vpop.f32.mrf.mxu0
        %v1186 = vadd.f32 %v600, %v1185
        %v1187 = vpop.f32.mrf.mxu0
        %v1188 = vpop.f32.mrf.mxu0
        %v1189 = vadd.f32 %v600, %v1188
        %v1190 = vpop.f32.mrf.mxu0
        %1191 = vmatprep.mubr.bf16.mxu0 0
        %1192 = vmatmul.mubr.bf16.gmra.mxu0 %v739
        %v1193 = vpop.f32.mrf.mxu0
        %v1194 = vadd.f32 %v600, %v1193
        %v1195 = vpop.f32.mrf.mxu0
        %v1196 = vpop.f32.mrf.mxu0
        %v1197 = vadd.f32 %v600, %v1196
        %v1198 = vpop.f32.mrf.mxu0
        %1199 = vmatprep.mubr.bf16.mxu0 0
        %1200 = vmatmul.mubr.bf16.gmra.mxu0 %v742
        %v1201 = vpop.f32.mrf.mxu0
        %v1202 = vadd.f32 %v600, %v1201
        %v1203 = vpop.f32.mrf.mxu0
        %v1204 = vpop.f32.mrf.mxu0
        %v1205 = vadd.f32 %v600, %v1204
        %v1206 = vpop.f32.mrf.mxu0
        %1207 = vmatprep.mubr.bf16.mxu0 0
        %1208 = vmatmul.mubr.bf16.gmra.mxu0 %v745
        %v1209 = vpop.f32.mrf.mxu0
        %v1210 = vadd.f32 %v600, %v1209
        %v1211 = vpop.f32.mrf.mxu0
        %v1212 = vpop.f32.mrf.mxu0
        %v1213 = vadd.f32 %v600, %v1212
        %v1214 = vpop.f32.mrf.mxu0
        %1215 = vmatprep.mubr.bf16.mxu0 0
        %1216 = vmatmul.mubr.bf16.gmra.mxu0 %v748
        %v1217 = vpop.f32.mrf.mxu0
        %v1218 = vadd.f32 %v600, %v1217
        %v1219 = vpop.f32.mrf.mxu0
        %v1220 = vpop.f32.mrf.mxu0
        %v1221 = vadd.f32 %v600, %v1220
        %v1222 = vpop.f32.mrf.mxu0
        %1223 = vmatprep.mubr.bf16.mxu0 0
        %1224 = vmatmul.mubr.bf16.gmra.mxu0 %v751
        %v1225 = vpop.f32.mrf.mxu0
        %v1226 = vadd.f32 %v600, %v1225
        %v1227 = vpop.f32.mrf.mxu0
        %v1228 = vpop.f32.mrf.mxu0
        %v1229 = vadd.f32 %v600, %v1228
        %v1230 = vpop.f32.mrf.mxu0
        %1231 = vmatprep.mubr.bf16.mxu0 0
        %1232 = vmatmul.mubr.bf16.gmra.mxu0 %v754
        %v1233 = vpop.f32.mrf.mxu0
        %v1234 = vadd.f32 %v600, %v1233
        %v1235 = vpop.f32.mrf.mxu0
        %v1236 = vpop.f32.mrf.mxu0
        %v1237 = vadd.f32 %v600, %v1236
        %v1238 = vpop.f32.mrf.mxu0
        %1239 = vmatprep.mubr.bf16.mxu0 0
        %1240 = vmatmul.mubr.bf16.gmra.mxu0 %v757
        %v1241 = vpop.f32.mrf.mxu0
        %v1242 = vadd.f32 %v600, %v1241
        %v1243 = vpop.f32.mrf.mxu0
        %v1244 = vpop.f32.mrf.mxu0
        %v1245 = vadd.f32 %v600, %v1244
        %v1246 = vpop.f32.mrf.mxu0
        %1247 = vmatprep.mubr.bf16.mxu0 0
        %1248 = vmatmul.mubr.bf16.gmra.mxu0 %v760
        %v1249 = vpop.f32.mrf.mxu0
        %v1250 = vadd.f32 %v600, %v1249
        %v1251 = vpop.f32.mrf.mxu0
        %v1252 = vpop.f32.mrf.mxu0
        %v1253 = vadd.f32 %v600, %v1252
        %v1254 = vpop.f32.mrf.mxu0
        %1255 = vmatprep.mubr.bf16.mxu0 0
        %1256 = vmatmul.mubr.bf16.gmra.mxu0 %v763
        %v1257 = vpop.f32.mrf.mxu0
        %v1258 = vadd.f32 %v600, %v1257
        %v1259 = vpop.f32.mrf.mxu0
        %v1260 = vpop.f32.mrf.mxu0
        %v1261 = vadd.f32 %v600, %v1260
        %v1262 = vpop.f32.mrf.mxu0
        %1263 = vmatprep.mubr.bf16.mxu0 0
        %1264 = vmatmul.mubr.bf16.gmra.mxu0 %v766
        %v1265 = vpop.f32.mrf.mxu0
        %v1266 = vadd.f32 %v600, %v1265
        %v1267 = vpop.f32.mrf.mxu0
        %v1268 = vpop.f32.mrf.mxu0
        %v1269 = vadd.f32 %v600, %v1268
        %v1270 = vpop.f32.mrf.mxu0
        %1271 = vmatprep.mubr.bf16.mxu0 0
        %1272 = vmatmul.mubr.bf16.gmra.mxu0 %v769
        %v1273 = vpop.f32.mrf.mxu0
        %v1274 = vadd.f32 %v600, %v1273
        %v1275 = vpop.f32.mrf.mxu0
        %v1276 = vpop.f32.mrf.mxu0
        %v1277 = vadd.f32 %v600, %v1276
        %v1278 = vpop.f32.mrf.mxu0
        %1279 = vmatprep.mubr.bf16.mxu0 0
        %1280 = vmatmul.mubr.bf16.gmra.mxu0 %v772
        %v1281 = vpop.f32.mrf.mxu0
        %v1282 = vadd.f32 %v600, %v1281
        %v1283 = vpop.f32.mrf.mxu0
        %v1284 = vpop.f32.mrf.mxu0
        %v1285 = vadd.f32 %v600, %v1284
        %v1286 = vpop.f32.mrf.mxu0
        %1287 = vmatprep.mubr.bf16.mxu0 0
        %1288 = vmatmul.mubr.bf16.gmra.mxu0 %v775
        %v1289 = vpop.f32.mrf.mxu0
        %v1290 = vadd.f32 %v600, %v1289
        %v1291 = vpop.f32.mrf.mxu0
        %v1292 = vpop.f32.mrf.mxu0
        %v1293 = vadd.f32 %v600, %v1292
        %v1294 = vpop.f32.mrf.mxu0
        %1295 = vmatprep.mubr.bf16.mxu0 0
        %1296 = vmatmul.mubr.bf16.gmra.mxu0 %v778
        %v1297 = vpop.f32.mrf.mxu0
        %v1298 = vadd.f32 %v600, %v1297
        %v1299 = vpop.f32.mrf.mxu0
        %v1300 = vpop.f32.mrf.mxu0
        %v1301 = vadd.f32 %v600, %v1300
        %v1302 = vpop.f32.mrf.mxu0
        %1303 = vmatprep.mubr.bf16.mxu0 0
        %1304 = vmatmul.mubr.bf16.gmra.mxu0 %v781
        %v1305 = vpop.f32.mrf.mxu0
        %v1306 = vadd.f32 %v600, %v1305
        %v1307 = vpop.f32.mrf.mxu0
        %v1308 = vpop.f32.mrf.mxu0
        %v1309 = vadd.f32 %v600, %v1308
        %v1310 = vpop.f32.mrf.mxu0
        %1311 = vmatprep.mubr.bf16.mxu0 0
        %1312 = vmatmul.mubr.bf16.gmra.mxu0 %v784
        %v1313 = vpop.f32.mrf.mxu0
        %v1314 = vadd.f32 %v600, %v1313
        %v1315 = vpop.f32.mrf.mxu0
        %v1316 = vpop.f32.mrf.mxu0
        %v1317 = vadd.f32 %v600, %v1316
        %v1318 = vpop.f32.mrf.mxu0
        %1319 = vmatprep.mubr.bf16.mxu0 0
        %1320 = vmatmul.mubr.bf16.gmra.mxu0 %v787
        %v1321 = vpop.f32.mrf.mxu0
        %v1322 = vadd.f32 %v600, %v1321
        %v1323 = vpop.f32.mrf.mxu0
        %v1324 = vpop.f32.mrf.mxu0
        %v1325 = vadd.f32 %v600, %v1324
        %v1326 = vpop.f32.mrf.mxu0
        %1327 = vmatprep.mubr.bf16.mxu0 0
        %1328 = vmatmul.mubr.bf16.gmra.mxu0 %v790
        %v1329 = vpop.f32.mrf.mxu0
        %v1330 = vadd.f32 %v600, %v1329
        %v1331 = vpop.f32.mrf.mxu0
        %v1332 = vpop.f32.mrf.mxu0
        %v1333 = vadd.f32 %v600, %v1332
        %v1334 = vpop.f32.mrf.mxu0
        %1335 = vmatprep.mubr.bf16.mxu0 0
        %1336 = vmatmul.mubr.bf16.gmra.mxu0 %v793
        %v1337 = vpop.f32.mrf.mxu0
        %v1338 = vadd.f32 %v600, %v1337
        %v1339 = vpop.f32.mrf.mxu0
        %v1340 = vpop.f32.mrf.mxu0
        %v1341 = vadd.f32 %v600, %v1340
        %v1342 = vpop.f32.mrf.mxu0
        %1343 = vdwg.mxu0
        %v1344 = vmax.f32 %v834, 0.0
        %v1345 = vmax.f32 %v837, 0.0
        %v1346 = vmax.f32 %v842, 0.0
        %v1347 = vmax.f32 %v845, 0.0
        %v1348 = vmax.f32 %v850, 0.0
        %v1349 = vmax.f32 %v853, 0.0
        %v1350 = vmax.f32 %v858, 0.0
        %v1351 = vmax.f32 %v861, 0.0
        %v1352 = vmax.f32 %v866, 0.0
        %v1353 = vmax.f32 %v869, 0.0
        %v1354 = vmax.f32 %v874, 0.0
        %v1355 = vmax.f32 %v877, 0.0
        %v1356 = vmax.f32 %v882, 0.0
        %v1357 = vmax.f32 %v885, 0.0
        %v1358 = vmax.f32 %v890, 0.0
        %v1359 = vmax.f32 %v893, 0.0
        %v1360 = vmax.f32 %v898, 0.0
        %v1361 = vmax.f32 %v901, 0.0
        %v1362 = vmax.f32 %v906, 0.0
        %v1363 = vmax.f32 %v909, 0.0
        %v1364 = vmax.f32 %v914, 0.0
        %v1365 = vmax.f32 %v917, 0.0
        %v1366 = vmax.f32 %v922, 0.0
        %v1367 = vmax.f32 %v925, 0.0
        %v1368 = vmax.f32 %v930, 0.0
        %v1369 = vmax.f32 %v933, 0.0
        %v1370 = vmax.f32 %v938, 0.0
        %v1371 = vmax.f32 %v941, 0.0
        %v1372 = vmax.f32 %v946, 0.0
        %v1373 = vmax.f32 %v949, 0.0
        %v1374 = vmax.f32 %v954, 0.0
        %v1375 = vmax.f32 %v957, 0.0
        %v1376 = vmax.f32 %v962, 0.0
        %v1377 = vmax.f32 %v965, 0.0
        %v1378 = vmax.f32 %v970, 0.0
        %v1379 = vmax.f32 %v973, 0.0
        %v1380 = vmax.f32 %v978, 0.0
        %v1381 = vmax.f32 %v981, 0.0
        %v1382 = vmax.f32 %v986, 0.0
        %v1383 = vmax.f32 %v989, 0.0
        %v1384 = vmax.f32 %v994, 0.0
        %v1385 = vmax.f32 %v997, 0.0
        %v1386 = vmax.f32 %v1002, 0.0
        %v1387 = vmax.f32 %v1005, 0.0
        %v1388 = vmax.f32 %v1010, 0.0
        %v1389 = vmax.f32 %v1013, 0.0
        %v1390 = vmax.f32 %v1018, 0.0
        %v1391 = vmax.f32 %v1021, 0.0
        %v1392 = vmax.f32 %v1026, 0.0
        %v1393 = vmax.f32 %v1029, 0.0
        %v1394 = vmax.f32 %v1034, 0.0
        %v1395 = vmax.f32 %v1037, 0.0
        %v1396 = vmax.f32 %v1042, 0.0
        %v1397 = vmax.f32 %v1045, 0.0
        %v1398 = vmax.f32 %v1050, 0.0
        %v1399 = vmax.f32 %v1053, 0.0
        %v1400 = vmax.f32 %v1058, 0.0
        %v1401 = vmax.f32 %v1061, 0.0
        %v1402 = vmax.f32 %v1066, 0.0
        %v1403 = vmax.f32 %v1069, 0.0
        %v1404 = vmax.f32 %v1074, 0.0
        %v1405 = vmax.f32 %v1077, 0.0
        %v1406 = vmax.f32 %v1082, 0.0
        %v1407 = vmax.f32 %v1085, 0.0
        %v1408 = vmax.f32 %v1090, 0.0
        %v1409 = vmax.f32 %v1093, 0.0
        %v1410 = vmax.f32 %v1098, 0.0
        %v1411 = vmax.f32 %v1101, 0.0
        %v1412 = vmax.f32 %v1106, 0.0
        %v1413 = vmax.f32 %v1109, 0.0
        %v1414 = vmax.f32 %v1114, 0.0
        %v1415 = vmax.f32 %v1117, 0.0
        %v1416 = vmax.f32 %v1122, 0.0
        %v1417 = vmax.f32 %v1125, 0.0
        %v1418 = vmax.f32 %v1130, 0.0
        %v1419 = vmax.f32 %v1133, 0.0
        %v1420 = vmax.f32 %v1138, 0.0
        %v1421 = vmax.f32 %v1141, 0.0
        %v1422 = vmax.f32 %v1146, 0.0
        %v1423 = vmax.f32 %v1149, 0.0
        %v1424 = vmax.f32 %v1154, 0.0
        %v1425 = vmax.f32 %v1157, 0.0
        %v1426 = vmax.f32 %v1162, 0.0
        %v1427 = vmax.f32 %v1165, 0.0
        %v1428 = vmax.f32 %v1170, 0.0
        %v1429 = vmax.f32 %v1173, 0.0
        %v1430 = vmax.f32 %v1178, 0.0
        %v1431 = vmax.f32 %v1181, 0.0
        %v1432 = vmax.f32 %v1186, 0.0
        %v1433 = vmax.f32 %v1189, 0.0
        %v1434 = vmax.f32 %v1194, 0.0
        %v1435 = vmax.f32 %v1197, 0.0
        %v1436 = vmax.f32 %v1202, 0.0
        %v1437 = vmax.f32 %v1205, 0.0
        %v1438 = vmax.f32 %v1210, 0.0
        %v1439 = vmax.f32 %v1213, 0.0
        %v1440 = vmax.f32 %v1218, 0.0
        %v1441 = vmax.f32 %v1221, 0.0
        %v1442 = vmax.f32 %v1226, 0.0
        %v1443 = vmax.f32 %v1229, 0.0
        %v1444 = vmax.f32 %v1234, 0.0
        %v1445 = vmax.f32 %v1237, 0.0
        %v1446 = vmax.f32 %v1242, 0.0
        %v1447 = vmax.f32 %v1245, 0.0
        %v1448 = vmax.f32 %v1250, 0.0
        %v1449 = vmax.f32 %v1253, 0.0
        %v1450 = vmax.f32 %v1258, 0.0
        %v1451 = vmax.f32 %v1261, 0.0
        %v1452 = vmax.f32 %v1266, 0.0
        %v1453 = vmax.f32 %v1269, 0.0
        %v1454 = vmax.f32 %v1274, 0.0
        %v1455 = vmax.f32 %v1277, 0.0
        %v1456 = vmax.f32 %v1282, 0.0
        %v1457 = vmax.f32 %v1285, 0.0
        %v1458 = vmax.f32 %v1290, 0.0
        %v1459 = vmax.f32 %v1293, 0.0
        %v1460 = vmax.f32 %v1298, 0.0
        %v1461 = vmax.f32 %v1301, 0.0
        %v1462 = vmax.f32 %v1306, 0.0
        %v1463 = vmax.f32 %v1309, 0.0
        %v1464 = vmax.f32 %v1314, 0.0
        %v1465 = vmax.f32 %v1317, 0.0
        %v1466 = vmax.f32 %v1322, 0.0
        %v1467 = vmax.f32 %v1325, 0.0
        %v1468 = vmax.f32 %v1330, 0.0
        %v1469 = vmax.f32 %v1333, 0.0
        %v1470 = vmax.f32 %v1338, 0.0
        %v1471 = vmax.f32 %v1341, 0.0
        %v1472 = vpack.c.bf16 %v1345, %v1344
        %v1473 = vpack.c.bf16 %v1347, %v1346
        %v1474 = vpack.c.bf16 %v1349, %v1348
        %v1475 = vpack.c.bf16 %v1351, %v1350
        %v1476 = vpack.c.bf16 %v1353, %v1352
        %v1477 = vpack.c.bf16 %v1355, %v1354
        %v1478 = vpack.c.bf16 %v1357, %v1356
        %v1479 = vpack.c.bf16 %v1359, %v1358
        %v1480 = vpack.c.bf16 %v1361, %v1360
        %v1481 = vpack.c.bf16 %v1363, %v1362
        %v1482 = vpack.c.bf16 %v1365, %v1364
        %v1483 = vpack.c.bf16 %v1367, %v1366
        %v1484 = vpack.c.bf16 %v1369, %v1368
        %v1485 = vpack.c.bf16 %v1371, %v1370
        %v1486 = vpack.c.bf16 %v1373, %v1372
        %v1487 = vpack.c.bf16 %v1375, %v1374
        %v1488 = vpack.c.bf16 %v1377, %v1376
        %v1489 = vpack.c.bf16 %v1379, %v1378
        %v1490 = vpack.c.bf16 %v1381, %v1380
        %v1491 = vpack.c.bf16 %v1383, %v1382
        %v1492 = vpack.c.bf16 %v1385, %v1384
        %v1493 = vpack.c.bf16 %v1387, %v1386
        %v1494 = vpack.c.bf16 %v1389, %v1388
        %v1495 = vpack.c.bf16 %v1391, %v1390
        %v1496 = vpack.c.bf16 %v1393, %v1392
        %v1497 = vpack.c.bf16 %v1395, %v1394
        %v1498 = vpack.c.bf16 %v1397, %v1396
        %v1499 = vpack.c.bf16 %v1399, %v1398
        %v1500 = vpack.c.bf16 %v1401, %v1400
        %v1501 = vpack.c.bf16 %v1403, %v1402
        %v1502 = vpack.c.bf16 %v1405, %v1404
        %v1503 = vpack.c.bf16 %v1407, %v1406
        %v1504 = vpack.c.bf16 %v1409, %v1408
        %v1505 = vpack.c.bf16 %v1411, %v1410
        %v1506 = vpack.c.bf16 %v1413, %v1412
        %v1507 = vpack.c.bf16 %v1415, %v1414
        %v1508 = vpack.c.bf16 %v1417, %v1416
        %v1509 = vpack.c.bf16 %v1419, %v1418
        %v1510 = vpack.c.bf16 %v1421, %v1420
        %v1511 = vpack.c.bf16 %v1423, %v1422
        %v1512 = vpack.c.bf16 %v1425, %v1424
        %v1513 = vpack.c.bf16 %v1427, %v1426
        %v1514 = vpack.c.bf16 %v1429, %v1428
        %v1515 = vpack.c.bf16 %v1431, %v1430
        %v1516 = vpack.c.bf16 %v1433, %v1432
        %v1517 = vpack.c.bf16 %v1435, %v1434
        %v1518 = vpack.c.bf16 %v1437, %v1436
        %v1519 = vpack.c.bf16 %v1439, %v1438
        %v1520 = vpack.c.bf16 %v1441, %v1440
        %v1521 = vpack.c.bf16 %v1443, %v1442
        %v1522 = vpack.c.bf16 %v1445, %v1444
        %v1523 = vpack.c.bf16 %v1447, %v1446
        %v1524 = vpack.c.bf16 %v1449, %v1448
        %v1525 = vpack.c.bf16 %v1451, %v1450
        %v1526 = vpack.c.bf16 %v1453, %v1452
        %v1527 = vpack.c.bf16 %v1455, %v1454
        %v1528 = vpack.c.bf16 %v1457, %v1456
        %v1529 = vpack.c.bf16 %v1459, %v1458
        %v1530 = vpack.c.bf16 %v1461, %v1460
        %v1531 = vpack.c.bf16 %v1463, %v1462
        %v1532 = vpack.c.bf16 %v1465, %v1464
        %v1533 = vpack.c.bf16 %v1467, %v1466
        %v1534 = vpack.c.bf16 %v1469, %v1468
        %v1535 = vpack.c.bf16 %v1471, %v1470
        %v1536 = vld [vmem:[#allocation5] sm:$0xf]
        %v1537 = vld [vmem:[#allocation5 + $0x4] sm:$0xf]
        %v1538 = vld [vmem:[#allocation5 + $0x8] sm:$0xf]
        %v1539 = vld [vmem:[#allocation5 + $0xc] sm:$0xf]
        %v1540 = vld [vmem:[#allocation5 + $0x10] sm:$0xf]
        %v1541 = vld [vmem:[#allocation5 + $0x14] sm:$0xf]
        %v1542 = vld [vmem:[#allocation5 + $0x18] sm:$0xf]
        %v1543 = vld [vmem:[#allocation5 + $0x1c] sm:$0xf]
        %v1544 = vld [vmem:[#allocation11] sm:$0x1]
        %v1546 = vlaneseq
        %v1547 = vshrl.u32 %v1546, 7
        %v1548 = vsub.s32 0, %v1547
        %v1549 = vrot.slane %v1544, %v1548
        %v1559 = vunpack.c.l.b16 %v1536
        %v1560 = vunpack.c.l.b16 %v1537
        %v1561 = vunpack.c.l.b16 %v1538
        %v1562 = vunpack.c.l.b16 %v1539
        %v1563 = vunpack.c.l.b16 %v1540
        %v1564 = vunpack.c.l.b16 %v1541
        %v1565 = vunpack.c.l.b16 %v1542
        %v1566 = vunpack.c.l.b16 %v1543
        %v1567 = vpack.c.b16 %v1560, %v1559
        %v1568 = vpack.c.b16 %v1562, %v1561
        %v1569 = vpack.c.b16 %v1564, %v1563
        %v1570 = vpack.c.b16 %v1566, %v1565
        %vm1575 = vcmask 523264
        %v1577 = vsel %vm1575, %v1472, 0
        %v1580 = vsel %vm1575, %v1473, 0
        %v1583 = vsel %vm1575, %v1474, 0
        %v1586 = vsel %vm1575, %v1475, 0
        %v1589 = vsel %vm1575, %v1476, 0
        %v1592 = vsel %vm1575, %v1477, 0
        %v1595 = vsel %vm1575, %v1478, 0
        %v1598 = vsel %vm1575, %v1479, 0
        %v1601 = vsel %vm1575, %v1480, 0
        %v1604 = vsel %vm1575, %v1481, 0
        %v1607 = vsel %vm1575, %v1482, 0
        %v1610 = vsel %vm1575, %v1483, 0
        %v1613 = vsel %vm1575, %v1484, 0
        %v1616 = vsel %vm1575, %v1485, 0
        %v1619 = vsel %vm1575, %v1486, 0
        %v1622 = vsel %vm1575, %v1487, 0
        %v1625 = vsel %vm1575, %v1488, 0
        %v1628 = vsel %vm1575, %v1489, 0
        %v1631 = vsel %vm1575, %v1490, 0
        %v1634 = vsel %vm1575, %v1491, 0
        %v1637 = vsel %vm1575, %v1492, 0
        %v1640 = vsel %vm1575, %v1493, 0
        %v1643 = vsel %vm1575, %v1494, 0
        %v1646 = vsel %vm1575, %v1495, 0
        %v1649 = vsel %vm1575, %v1496, 0
        %v1652 = vsel %vm1575, %v1497, 0
        %v1655 = vsel %vm1575, %v1498, 0
        %v1658 = vsel %vm1575, %v1499, 0
        %v1661 = vsel %vm1575, %v1500, 0
        %v1664 = vsel %vm1575, %v1501, 0
        %v1667 = vsel %vm1575, %v1502, 0
        %v1670 = vsel %vm1575, %v1503, 0
        %v1673 = vsel %vm1575, %v1504, 0
        %v1676 = vsel %vm1575, %v1505, 0
        %v1679 = vsel %vm1575, %v1506, 0
        %v1682 = vsel %vm1575, %v1507, 0
        %v1685 = vsel %vm1575, %v1508, 0
        %v1688 = vsel %vm1575, %v1509, 0
        %v1691 = vsel %vm1575, %v1510, 0
        %v1694 = vsel %vm1575, %v1511, 0
        %v1697 = vsel %vm1575, %v1512, 0
        %v1700 = vsel %vm1575, %v1513, 0
        %v1703 = vsel %vm1575, %v1514, 0
        %v1706 = vsel %vm1575, %v1515, 0
        %v1709 = vsel %vm1575, %v1516, 0
        %v1712 = vsel %vm1575, %v1517, 0
        %v1715 = vsel %vm1575, %v1518, 0
        %v1718 = vsel %vm1575, %v1519, 0
        %v1721 = vsel %vm1575, %v1520, 0
        %v1724 = vsel %vm1575, %v1521, 0
        %v1727 = vsel %vm1575, %v1522, 0
        %v1730 = vsel %vm1575, %v1523, 0
        %v1733 = vsel %vm1575, %v1524, 0
        %v1736 = vsel %vm1575, %v1525, 0
        %v1739 = vsel %vm1575, %v1526, 0
        %v1742 = vsel %vm1575, %v1527, 0
        %v1745 = vsel %vm1575, %v1528, 0
        %v1748 = vsel %vm1575, %v1529, 0
        %v1751 = vsel %vm1575, %v1530, 0
        %v1754 = vsel %vm1575, %v1531, 0
        %v1757 = vsel %vm1575, %v1532, 0
        %v1760 = vsel %vm1575, %v1533, 0
        %v1763 = vsel %vm1575, %v1534, 0
        %v1766 = vsel %vm1575, %v1535, 0
        %1768 = vmatprep.subr.bf16.mxu0 0
        %1769 = vmatpush1.bf16.msra.mxu0 0
        %1770 = vmatprep.subr.bf16.mxu0 0
        %1771 = vmatpush1.bf16.msra.mxu0 0
        %1772 = vmatprep.subr.bf16.mxu0 0
        %1773 = vmatpush1.bf16.msra.mxu0 0
        %1774 = vmatprep.subr.bf16.mxu0 0
        %1775 = vmatpush1.bf16.msra.mxu0 0
        %1776 = vmatprep.subr.bf16.mxu0 0
        %1777 = vmatpush1.bf16.msra.mxu0 %v1570
        %1778 = vmatprep.subr.bf16.mxu0 0
        %1779 = vmatpush1.bf16.msra.mxu0 %v1569
        %1780 = vmatprep.subr.bf16.mxu0 0
        %1781 = vmatpush1.bf16.msra.mxu0 %v1568
        %1782 = vmatprep.subr.bf16.mxu0 0
        %1783 = vmatpush1.bf16.msra.mxu0 %v1567
        %1784 = vmatprep.subr.bf16.mxu0 0
        %1785 = vmatpush2.bf16.msra.mxu0 0
        %1786 = vmatprep.subr.bf16.mxu0 0
        %1787 = vmatpush2.bf16.msra.mxu0 0
        %1788 = vmatprep.subr.bf16.mxu0 0
        %1789 = vmatpush2.bf16.msra.mxu0 0
        %1790 = vmatprep.subr.bf16.mxu0 0
        %1791 = vmatpush2.bf16.msra.mxu0 0
        %1792 = vmatprep.subr.bf16.mxu0 0
        %1793 = vmatpush2.bf16.msra.mxu0 0
        %1794 = vmatprep.subr.bf16.mxu0 0
        %1795 = vmatpush2.bf16.msra.mxu0 0
        %1796 = vmatprep.subr.bf16.mxu0 0
        %1797 = vmatpush2.bf16.msra.mxu0 0
        %1798 = vmatprep.subr.bf16.mxu0 0
        %1799 = vmatpush2.bf16.msra.mxu0 0
        %1800 = vmatprep.mubr.bf16.mxu0 0
        %1801 = vmatmul.mubr.bf16.gmra.mxu0 %v1577
        %v1802 = vpop.f32.mrf.mxu0
        %v1803 = vadd.f32 %v1549, %v1802
        %v1804 = vpop.f32.mrf.mxu0
        %v1805 = vpop.f32.mrf.mxu0
        %v1806 = vadd.f32 %v1549, %v1805
        %v1807 = vpop.f32.mrf.mxu0
        %1808 = vmatprep.mubr.bf16.mxu0 0
        %1809 = vmatmul.mubr.bf16.gmra.mxu0 %v1580
        %v1810 = vpop.f32.mrf.mxu0
        %v1811 = vadd.f32 %v1549, %v1810
        %v1812 = vpop.f32.mrf.mxu0
        %v1813 = vpop.f32.mrf.mxu0
        %v1814 = vadd.f32 %v1549, %v1813
        %v1815 = vpop.f32.mrf.mxu0
        %1816 = vmatprep.mubr.bf16.mxu0 0
        %1817 = vmatmul.mubr.bf16.gmra.mxu0 %v1583
        %v1818 = vpop.f32.mrf.mxu0
        %v1819 = vadd.f32 %v1549, %v1818
        %v1820 = vpop.f32.mrf.mxu0
        %v1821 = vpop.f32.mrf.mxu0
        %v1822 = vadd.f32 %v1549, %v1821
        %v1823 = vpop.f32.mrf.mxu0
        %1824 = vmatprep.mubr.bf16.mxu0 0
        %1825 = vmatmul.mubr.bf16.gmra.mxu0 %v1586
        %v1826 = vpop.f32.mrf.mxu0
        %v1827 = vadd.f32 %v1549, %v1826
        %v1828 = vpop.f32.mrf.mxu0
        %v1829 = vpop.f32.mrf.mxu0
        %v1830 = vadd.f32 %v1549, %v1829
        %v1831 = vpop.f32.mrf.mxu0
        %1832 = vmatprep.mubr.bf16.mxu0 0
        %1833 = vmatmul.mubr.bf16.gmra.mxu0 %v1589
        %v1834 = vpop.f32.mrf.mxu0
        %v1835 = vadd.f32 %v1549, %v1834
        %v1836 = vpop.f32.mrf.mxu0
        %v1837 = vpop.f32.mrf.mxu0
        %v1838 = vadd.f32 %v1549, %v1837
        %v1839 = vpop.f32.mrf.mxu0
        %1840 = vmatprep.mubr.bf16.mxu0 0
        %1841 = vmatmul.mubr.bf16.gmra.mxu0 %v1592
        %v1842 = vpop.f32.mrf.mxu0
        %v1843 = vadd.f32 %v1549, %v1842
        %v1844 = vpop.f32.mrf.mxu0
        %v1845 = vpop.f32.mrf.mxu0
        %v1846 = vadd.f32 %v1549, %v1845
        %v1847 = vpop.f32.mrf.mxu0
        %1848 = vmatprep.mubr.bf16.mxu0 0
        %1849 = vmatmul.mubr.bf16.gmra.mxu0 %v1595
        %v1850 = vpop.f32.mrf.mxu0
        %v1851 = vadd.f32 %v1549, %v1850
        %v1852 = vpop.f32.mrf.mxu0
        %v1853 = vpop.f32.mrf.mxu0
        %v1854 = vadd.f32 %v1549, %v1853
        %v1855 = vpop.f32.mrf.mxu0
        %1856 = vmatprep.mubr.bf16.mxu0 0
        %1857 = vmatmul.mubr.bf16.gmra.mxu0 %v1598
        %v1858 = vpop.f32.mrf.mxu0
        %v1859 = vadd.f32 %v1549, %v1858
        %v1860 = vpop.f32.mrf.mxu0
        %v1861 = vpop.f32.mrf.mxu0
        %v1862 = vadd.f32 %v1549, %v1861
        %v1863 = vpop.f32.mrf.mxu0
        %1864 = vmatprep.mubr.bf16.mxu0 0
        %1865 = vmatmul.mubr.bf16.gmra.mxu0 %v1601
        %v1866 = vpop.f32.mrf.mxu0
        %v1867 = vadd.f32 %v1549, %v1866
        %v1868 = vpop.f32.mrf.mxu0
        %v1869 = vpop.f32.mrf.mxu0
        %v1870 = vadd.f32 %v1549, %v1869
        %v1871 = vpop.f32.mrf.mxu0
        %1872 = vmatprep.mubr.bf16.mxu0 0
        %1873 = vmatmul.mubr.bf16.gmra.mxu0 %v1604
        %v1874 = vpop.f32.mrf.mxu0
        %v1875 = vadd.f32 %v1549, %v1874
        %v1876 = vpop.f32.mrf.mxu0
        %v1877 = vpop.f32.mrf.mxu0
        %v1878 = vadd.f32 %v1549, %v1877
        %v1879 = vpop.f32.mrf.mxu0
        %1880 = vmatprep.mubr.bf16.mxu0 0
        %1881 = vmatmul.mubr.bf16.gmra.mxu0 %v1607
        %v1882 = vpop.f32.mrf.mxu0
        %v1883 = vadd.f32 %v1549, %v1882
        %v1884 = vpop.f32.mrf.mxu0
        %v1885 = vpop.f32.mrf.mxu0
        %v1886 = vadd.f32 %v1549, %v1885
        %v1887 = vpop.f32.mrf.mxu0
        %1888 = vmatprep.mubr.bf16.mxu0 0
        %1889 = vmatmul.mubr.bf16.gmra.mxu0 %v1610
        %v1890 = vpop.f32.mrf.mxu0
        %v1891 = vadd.f32 %v1549, %v1890
        %v1892 = vpop.f32.mrf.mxu0
        %v1893 = vpop.f32.mrf.mxu0
        %v1894 = vadd.f32 %v1549, %v1893
        %v1895 = vpop.f32.mrf.mxu0
        %1896 = vmatprep.mubr.bf16.mxu0 0
        %1897 = vmatmul.mubr.bf16.gmra.mxu0 %v1613
        %v1898 = vpop.f32.mrf.mxu0
        %v1899 = vadd.f32 %v1549, %v1898
        %v1900 = vpop.f32.mrf.mxu0
        %v1901 = vpop.f32.mrf.mxu0
        %v1902 = vadd.f32 %v1549, %v1901
        %v1903 = vpop.f32.mrf.mxu0
        %1904 = vmatprep.mubr.bf16.mxu0 0
        %1905 = vmatmul.mubr.bf16.gmra.mxu0 %v1616
        %v1906 = vpop.f32.mrf.mxu0
        %v1907 = vadd.f32 %v1549, %v1906
        %v1908 = vpop.f32.mrf.mxu0
        %v1909 = vpop.f32.mrf.mxu0
        %v1910 = vadd.f32 %v1549, %v1909
        %v1911 = vpop.f32.mrf.mxu0
        %1912 = vmatprep.mubr.bf16.mxu0 0
        %1913 = vmatmul.mubr.bf16.gmra.mxu0 %v1619
        %v1914 = vpop.f32.mrf.mxu0
        %v1915 = vadd.f32 %v1549, %v1914
        %v1916 = vpop.f32.mrf.mxu0
        %v1917 = vpop.f32.mrf.mxu0
        %v1918 = vadd.f32 %v1549, %v1917
        %v1919 = vpop.f32.mrf.mxu0
        %1920 = vmatprep.mubr.bf16.mxu0 0
        %1921 = vmatmul.mubr.bf16.gmra.mxu0 %v1622
        %v1922 = vpop.f32.mrf.mxu0
        %v1923 = vadd.f32 %v1549, %v1922
        %v1924 = vpop.f32.mrf.mxu0
        %v1925 = vpop.f32.mrf.mxu0
        %v1926 = vadd.f32 %v1549, %v1925
        %v1927 = vpop.f32.mrf.mxu0
        %1928 = vmatprep.mubr.bf16.mxu0 0
        %1929 = vmatmul.mubr.bf16.gmra.mxu0 %v1625
        %v1930 = vpop.f32.mrf.mxu0
        %v1931 = vadd.f32 %v1549, %v1930
        %v1932 = vpop.f32.mrf.mxu0
        %v1933 = vpop.f32.mrf.mxu0
        %v1934 = vadd.f32 %v1549, %v1933
        %v1935 = vpop.f32.mrf.mxu0
        %1936 = vmatprep.mubr.bf16.mxu0 0
        %1937 = vmatmul.mubr.bf16.gmra.mxu0 %v1628
        %v1938 = vpop.f32.mrf.mxu0
        %v1939 = vadd.f32 %v1549, %v1938
        %v1940 = vpop.f32.mrf.mxu0
        %v1941 = vpop.f32.mrf.mxu0
        %v1942 = vadd.f32 %v1549, %v1941
        %v1943 = vpop.f32.mrf.mxu0
        %1944 = vmatprep.mubr.bf16.mxu0 0
        %1945 = vmatmul.mubr.bf16.gmra.mxu0 %v1631
        %v1946 = vpop.f32.mrf.mxu0
        %v1947 = vadd.f32 %v1549, %v1946
        %v1948 = vpop.f32.mrf.mxu0
        %v1949 = vpop.f32.mrf.mxu0
        %v1950 = vadd.f32 %v1549, %v1949
        %v1951 = vpop.f32.mrf.mxu0
        %1952 = vmatprep.mubr.bf16.mxu0 0
        %1953 = vmatmul.mubr.bf16.gmra.mxu0 %v1634
        %v1954 = vpop.f32.mrf.mxu0
        %v1955 = vadd.f32 %v1549, %v1954
        %v1956 = vpop.f32.mrf.mxu0
        %v1957 = vpop.f32.mrf.mxu0
        %v1958 = vadd.f32 %v1549, %v1957
        %v1959 = vpop.f32.mrf.mxu0
        %1960 = vmatprep.mubr.bf16.mxu0 0
        %1961 = vmatmul.mubr.bf16.gmra.mxu0 %v1637
        %v1962 = vpop.f32.mrf.mxu0
        %v1963 = vadd.f32 %v1549, %v1962
        %v1964 = vpop.f32.mrf.mxu0
        %v1965 = vpop.f32.mrf.mxu0
        %v1966 = vadd.f32 %v1549, %v1965
        %v1967 = vpop.f32.mrf.mxu0
        %1968 = vmatprep.mubr.bf16.mxu0 0
        %1969 = vmatmul.mubr.bf16.gmra.mxu0 %v1640
        %v1970 = vpop.f32.mrf.mxu0
        %v1971 = vadd.f32 %v1549, %v1970
        %v1972 = vpop.f32.mrf.mxu0
        %v1973 = vpop.f32.mrf.mxu0
        %v1974 = vadd.f32 %v1549, %v1973
        %v1975 = vpop.f32.mrf.mxu0
        %1976 = vmatprep.mubr.bf16.mxu0 0
        %1977 = vmatmul.mubr.bf16.gmra.mxu0 %v1643
        %v1978 = vpop.f32.mrf.mxu0
        %v1979 = vadd.f32 %v1549, %v1978
        %v1980 = vpop.f32.mrf.mxu0
        %v1981 = vpop.f32.mrf.mxu0
        %v1982 = vadd.f32 %v1549, %v1981
        %v1983 = vpop.f32.mrf.mxu0
        %1984 = vmatprep.mubr.bf16.mxu0 0
        %1985 = vmatmul.mubr.bf16.gmra.mxu0 %v1646
        %v1986 = vpop.f32.mrf.mxu0
        %v1987 = vadd.f32 %v1549, %v1986
        %v1988 = vpop.f32.mrf.mxu0
        %v1989 = vpop.f32.mrf.mxu0
        %v1990 = vadd.f32 %v1549, %v1989
        %v1991 = vpop.f32.mrf.mxu0
        %1992 = vmatprep.mubr.bf16.mxu0 0
        %1993 = vmatmul.mubr.bf16.gmra.mxu0 %v1649
        %v1994 = vpop.f32.mrf.mxu0
        %v1995 = vadd.f32 %v1549, %v1994
        %v1996 = vpop.f32.mrf.mxu0
        %v1997 = vpop.f32.mrf.mxu0
        %v1998 = vadd.f32 %v1549, %v1997
        %v1999 = vpop.f32.mrf.mxu0
        %2000 = vmatprep.mubr.bf16.mxu0 0
        %2001 = vmatmul.mubr.bf16.gmra.mxu0 %v1652
        %v2002 = vpop.f32.mrf.mxu0
        %v2003 = vadd.f32 %v1549, %v2002
        %v2004 = vpop.f32.mrf.mxu0
        %v2005 = vpop.f32.mrf.mxu0
        %v2006 = vadd.f32 %v1549, %v2005
        %v2007 = vpop.f32.mrf.mxu0
        %2008 = vmatprep.mubr.bf16.mxu0 0
        %2009 = vmatmul.mubr.bf16.gmra.mxu0 %v1655
        %v2010 = vpop.f32.mrf.mxu0
        %v2011 = vadd.f32 %v1549, %v2010
        %v2012 = vpop.f32.mrf.mxu0
        %v2013 = vpop.f32.mrf.mxu0
        %v2014 = vadd.f32 %v1549, %v2013
        %v2015 = vpop.f32.mrf.mxu0
        %2016 = vmatprep.mubr.bf16.mxu0 0
        %2017 = vmatmul.mubr.bf16.gmra.mxu0 %v1658
        %v2018 = vpop.f32.mrf.mxu0
        %v2019 = vadd.f32 %v1549, %v2018
        %v2020 = vpop.f32.mrf.mxu0
        %v2021 = vpop.f32.mrf.mxu0
        %v2022 = vadd.f32 %v1549, %v2021
        %v2023 = vpop.f32.mrf.mxu0
        %2024 = vmatprep.mubr.bf16.mxu0 0
        %2025 = vmatmul.mubr.bf16.gmra.mxu0 %v1661
        %v2026 = vpop.f32.mrf.mxu0
        %v2027 = vadd.f32 %v1549, %v2026
        %v2028 = vpop.f32.mrf.mxu0
        %v2029 = vpop.f32.mrf.mxu0
        %v2030 = vadd.f32 %v1549, %v2029
        %v2031 = vpop.f32.mrf.mxu0
        %2032 = vmatprep.mubr.bf16.mxu0 0
        %2033 = vmatmul.mubr.bf16.gmra.mxu0 %v1664
        %v2034 = vpop.f32.mrf.mxu0
        %v2035 = vadd.f32 %v1549, %v2034
        %v2036 = vpop.f32.mrf.mxu0
        %v2037 = vpop.f32.mrf.mxu0
        %v2038 = vadd.f32 %v1549, %v2037
        %v2039 = vpop.f32.mrf.mxu0
        %2040 = vmatprep.mubr.bf16.mxu0 0
        %2041 = vmatmul.mubr.bf16.gmra.mxu0 %v1667
        %v2042 = vpop.f32.mrf.mxu0
        %v2043 = vadd.f32 %v1549, %v2042
        %v2044 = vpop.f32.mrf.mxu0
        %v2045 = vpop.f32.mrf.mxu0
        %v2046 = vadd.f32 %v1549, %v2045
        %v2047 = vpop.f32.mrf.mxu0
        %2048 = vmatprep.mubr.bf16.mxu0 0
        %2049 = vmatmul.mubr.bf16.gmra.mxu0 %v1670
        %v2050 = vpop.f32.mrf.mxu0
        %v2051 = vadd.f32 %v1549, %v2050
        %v2052 = vpop.f32.mrf.mxu0
        %v2053 = vpop.f32.mrf.mxu0
        %v2054 = vadd.f32 %v1549, %v2053
        %v2055 = vpop.f32.mrf.mxu0
        %2056 = vmatprep.mubr.bf16.mxu0 0
        %2057 = vmatmul.mubr.bf16.gmra.mxu0 %v1673
        %v2058 = vpop.f32.mrf.mxu0
        %v2059 = vadd.f32 %v1549, %v2058
        %v2060 = vpop.f32.mrf.mxu0
        %v2061 = vpop.f32.mrf.mxu0
        %v2062 = vadd.f32 %v1549, %v2061
        %v2063 = vpop.f32.mrf.mxu0
        %2064 = vmatprep.mubr.bf16.mxu0 0
        %2065 = vmatmul.mubr.bf16.gmra.mxu0 %v1676
        %v2066 = vpop.f32.mrf.mxu0
        %v2067 = vadd.f32 %v1549, %v2066
        %v2068 = vpop.f32.mrf.mxu0
        %v2069 = vpop.f32.mrf.mxu0
        %v2070 = vadd.f32 %v1549, %v2069
        %v2071 = vpop.f32.mrf.mxu0
        %2072 = vmatprep.mubr.bf16.mxu0 0
        %2073 = vmatmul.mubr.bf16.gmra.mxu0 %v1679
        %v2074 = vpop.f32.mrf.mxu0
        %v2075 = vadd.f32 %v1549, %v2074
        %v2076 = vpop.f32.mrf.mxu0
        %v2077 = vpop.f32.mrf.mxu0
        %v2078 = vadd.f32 %v1549, %v2077
        %v2079 = vpop.f32.mrf.mxu0
        %2080 = vmatprep.mubr.bf16.mxu0 0
        %2081 = vmatmul.mubr.bf16.gmra.mxu0 %v1682
        %v2082 = vpop.f32.mrf.mxu0
        %v2083 = vadd.f32 %v1549, %v2082
        %v2084 = vpop.f32.mrf.mxu0
        %v2085 = vpop.f32.mrf.mxu0
        %v2086 = vadd.f32 %v1549, %v2085
        %v2087 = vpop.f32.mrf.mxu0
        %2088 = vmatprep.mubr.bf16.mxu0 0
        %2089 = vmatmul.mubr.bf16.gmra.mxu0 %v1685
        %v2090 = vpop.f32.mrf.mxu0
        %v2091 = vadd.f32 %v1549, %v2090
        %v2092 = vpop.f32.mrf.mxu0
        %v2093 = vpop.f32.mrf.mxu0
        %v2094 = vadd.f32 %v1549, %v2093
        %v2095 = vpop.f32.mrf.mxu0
        %2096 = vmatprep.mubr.bf16.mxu0 0
        %2097 = vmatmul.mubr.bf16.gmra.mxu0 %v1688
        %v2098 = vpop.f32.mrf.mxu0
        %v2099 = vadd.f32 %v1549, %v2098
        %v2100 = vpop.f32.mrf.mxu0
        %v2101 = vpop.f32.mrf.mxu0
        %v2102 = vadd.f32 %v1549, %v2101
        %v2103 = vpop.f32.mrf.mxu0
        %2104 = vmatprep.mubr.bf16.mxu0 0
        %2105 = vmatmul.mubr.bf16.gmra.mxu0 %v1691
        %v2106 = vpop.f32.mrf.mxu0
        %v2107 = vadd.f32 %v1549, %v2106
        %v2108 = vpop.f32.mrf.mxu0
        %v2109 = vpop.f32.mrf.mxu0
        %v2110 = vadd.f32 %v1549, %v2109
        %v2111 = vpop.f32.mrf.mxu0
        %2112 = vmatprep.mubr.bf16.mxu0 0
        %2113 = vmatmul.mubr.bf16.gmra.mxu0 %v1694
        %v2114 = vpop.f32.mrf.mxu0
        %v2115 = vadd.f32 %v1549, %v2114
        %v2116 = vpop.f32.mrf.mxu0
        %v2117 = vpop.f32.mrf.mxu0
        %v2118 = vadd.f32 %v1549, %v2117
        %v2119 = vpop.f32.mrf.mxu0
        %2120 = vmatprep.mubr.bf16.mxu0 0
        %2121 = vmatmul.mubr.bf16.gmra.mxu0 %v1697
        %v2122 = vpop.f32.mrf.mxu0
        %v2123 = vadd.f32 %v1549, %v2122
        %v2124 = vpop.f32.mrf.mxu0
        %v2125 = vpop.f32.mrf.mxu0
        %v2126 = vadd.f32 %v1549, %v2125
        %v2127 = vpop.f32.mrf.mxu0
        %2128 = vmatprep.mubr.bf16.mxu0 0
        %2129 = vmatmul.mubr.bf16.gmra.mxu0 %v1700
        %v2130 = vpop.f32.mrf.mxu0
        %v2131 = vadd.f32 %v1549, %v2130
        %v2132 = vpop.f32.mrf.mxu0
        %v2133 = vpop.f32.mrf.mxu0
        %v2134 = vadd.f32 %v1549, %v2133
        %v2135 = vpop.f32.mrf.mxu0
        %2136 = vmatprep.mubr.bf16.mxu0 0
        %2137 = vmatmul.mubr.bf16.gmra.mxu0 %v1703
        %v2138 = vpop.f32.mrf.mxu0
        %v2139 = vadd.f32 %v1549, %v2138
        %v2140 = vpop.f32.mrf.mxu0
        %v2141 = vpop.f32.mrf.mxu0
        %v2142 = vadd.f32 %v1549, %v2141
        %v2143 = vpop.f32.mrf.mxu0
        %2144 = vmatprep.mubr.bf16.mxu0 0
        %2145 = vmatmul.mubr.bf16.gmra.mxu0 %v1706
        %v2146 = vpop.f32.mrf.mxu0
        %v2147 = vadd.f32 %v1549, %v2146
        %v2148 = vpop.f32.mrf.mxu0
        %v2149 = vpop.f32.mrf.mxu0
        %v2150 = vadd.f32 %v1549, %v2149
        %v2151 = vpop.f32.mrf.mxu0
        %2152 = vmatprep.mubr.bf16.mxu0 0
        %2153 = vmatmul.mubr.bf16.gmra.mxu0 %v1709
        %v2154 = vpop.f32.mrf.mxu0
        %v2155 = vadd.f32 %v1549, %v2154
        %v2156 = vpop.f32.mrf.mxu0
        %v2157 = vpop.f32.mrf.mxu0
        %v2158 = vadd.f32 %v1549, %v2157
        %v2159 = vpop.f32.mrf.mxu0
        %2160 = vmatprep.mubr.bf16.mxu0 0
        %2161 = vmatmul.mubr.bf16.gmra.mxu0 %v1712
        %v2162 = vpop.f32.mrf.mxu0
        %v2163 = vadd.f32 %v1549, %v2162
        %v2164 = vpop.f32.mrf.mxu0
        %v2165 = vpop.f32.mrf.mxu0
        %v2166 = vadd.f32 %v1549, %v2165
        %v2167 = vpop.f32.mrf.mxu0
        %2168 = vmatprep.mubr.bf16.mxu0 0
        %2169 = vmatmul.mubr.bf16.gmra.mxu0 %v1715
        %v2170 = vpop.f32.mrf.mxu0
        %v2171 = vadd.f32 %v1549, %v2170
        %v2172 = vpop.f32.mrf.mxu0
        %v2173 = vpop.f32.mrf.mxu0
        %v2174 = vadd.f32 %v1549, %v2173
        %v2175 = vpop.f32.mrf.mxu0
        %2176 = vmatprep.mubr.bf16.mxu0 0
        %2177 = vmatmul.mubr.bf16.gmra.mxu0 %v1718
        %v2178 = vpop.f32.mrf.mxu0
        %v2179 = vadd.f32 %v1549, %v2178
        %v2180 = vpop.f32.mrf.mxu0
        %v2181 = vpop.f32.mrf.mxu0
        %v2182 = vadd.f32 %v1549, %v2181
        %v2183 = vpop.f32.mrf.mxu0
        %2184 = vmatprep.mubr.bf16.mxu0 0
        %2185 = vmatmul.mubr.bf16.gmra.mxu0 %v1721
        %v2186 = vpop.f32.mrf.mxu0
        %v2187 = vadd.f32 %v1549, %v2186
        %v2188 = vpop.f32.mrf.mxu0
        %v2189 = vpop.f32.mrf.mxu0
        %v2190 = vadd.f32 %v1549, %v2189
        %v2191 = vpop.f32.mrf.mxu0
        %2192 = vmatprep.mubr.bf16.mxu0 0
        %2193 = vmatmul.mubr.bf16.gmra.mxu0 %v1724
        %v2194 = vpop.f32.mrf.mxu0
        %v2195 = vadd.f32 %v1549, %v2194
        %v2196 = vpop.f32.mrf.mxu0
        %v2197 = vpop.f32.mrf.mxu0
        %v2198 = vadd.f32 %v1549, %v2197
        %v2199 = vpop.f32.mrf.mxu0
        %2200 = vmatprep.mubr.bf16.mxu0 0
        %2201 = vmatmul.mubr.bf16.gmra.mxu0 %v1727
        %v2202 = vpop.f32.mrf.mxu0
        %v2203 = vadd.f32 %v1549, %v2202
        %v2204 = vpop.f32.mrf.mxu0
        %v2205 = vpop.f32.mrf.mxu0
        %v2206 = vadd.f32 %v1549, %v2205
        %v2207 = vpop.f32.mrf.mxu0
        %2208 = vmatprep.mubr.bf16.mxu0 0
        %2209 = vmatmul.mubr.bf16.gmra.mxu0 %v1730
        %v2210 = vpop.f32.mrf.mxu0
        %v2211 = vadd.f32 %v1549, %v2210
        %v2212 = vpop.f32.mrf.mxu0
        %v2213 = vpop.f32.mrf.mxu0
        %v2214 = vadd.f32 %v1549, %v2213
        %v2215 = vpop.f32.mrf.mxu0
        %2216 = vmatprep.mubr.bf16.mxu0 0
        %2217 = vmatmul.mubr.bf16.gmra.mxu0 %v1733
        %v2218 = vpop.f32.mrf.mxu0
        %v2219 = vadd.f32 %v1549, %v2218
        %v2220 = vpop.f32.mrf.mxu0
        %v2221 = vpop.f32.mrf.mxu0
        %v2222 = vadd.f32 %v1549, %v2221
        %v2223 = vpop.f32.mrf.mxu0
        %2224 = vmatprep.mubr.bf16.mxu0 0
        %2225 = vmatmul.mubr.bf16.gmra.mxu0 %v1736
        %v2226 = vpop.f32.mrf.mxu0
        %v2227 = vadd.f32 %v1549, %v2226
        %v2228 = vpop.f32.mrf.mxu0
        %v2229 = vpop.f32.mrf.mxu0
        %v2230 = vadd.f32 %v1549, %v2229
        %v2231 = vpop.f32.mrf.mxu0
        %2232 = vmatprep.mubr.bf16.mxu0 0
        %2233 = vmatmul.mubr.bf16.gmra.mxu0 %v1739
        %v2234 = vpop.f32.mrf.mxu0
        %v2235 = vadd.f32 %v1549, %v2234
        %v2236 = vpop.f32.mrf.mxu0
        %v2237 = vpop.f32.mrf.mxu0
        %v2238 = vadd.f32 %v1549, %v2237
        %v2239 = vpop.f32.mrf.mxu0
        %2240 = vmatprep.mubr.bf16.mxu0 0
        %2241 = vmatmul.mubr.bf16.gmra.mxu0 %v1742
        %v2242 = vpop.f32.mrf.mxu0
        %v2243 = vadd.f32 %v1549, %v2242
        %v2244 = vpop.f32.mrf.mxu0
        %v2245 = vpop.f32.mrf.mxu0
        %v2246 = vadd.f32 %v1549, %v2245
        %v2247 = vpop.f32.mrf.mxu0
        %2248 = vmatprep.mubr.bf16.mxu0 0
        %2249 = vmatmul.mubr.bf16.gmra.mxu0 %v1745
        %v2250 = vpop.f32.mrf.mxu0
        %v2251 = vadd.f32 %v1549, %v2250
        %v2252 = vpop.f32.mrf.mxu0
        %v2253 = vpop.f32.mrf.mxu0
        %v2254 = vadd.f32 %v1549, %v2253
        %v2255 = vpop.f32.mrf.mxu0
        %2256 = vmatprep.mubr.bf16.mxu0 0
        %2257 = vmatmul.mubr.bf16.gmra.mxu0 %v1748
        %v2258 = vpop.f32.mrf.mxu0
        %v2259 = vadd.f32 %v1549, %v2258
        %v2260 = vpop.f32.mrf.mxu0
        %v2261 = vpop.f32.mrf.mxu0
        %v2262 = vadd.f32 %v1549, %v2261
        %v2263 = vpop.f32.mrf.mxu0
        %2264 = vmatprep.mubr.bf16.mxu0 0
        %2265 = vmatmul.mubr.bf16.gmra.mxu0 %v1751
        %v2266 = vpop.f32.mrf.mxu0
        %v2267 = vadd.f32 %v1549, %v2266
        %v2268 = vpop.f32.mrf.mxu0
        %v2269 = vpop.f32.mrf.mxu0
        %v2270 = vadd.f32 %v1549, %v2269
        %v2271 = vpop.f32.mrf.mxu0
        %2272 = vmatprep.mubr.bf16.mxu0 0
        %2273 = vmatmul.mubr.bf16.gmra.mxu0 %v1754
        %v2274 = vpop.f32.mrf.mxu0
        %v2275 = vadd.f32 %v1549, %v2274
        %v2276 = vpop.f32.mrf.mxu0
        %v2277 = vpop.f32.mrf.mxu0
        %v2278 = vadd.f32 %v1549, %v2277
        %v2279 = vpop.f32.mrf.mxu0
        %2280 = vmatprep.mubr.bf16.mxu0 0
        %2281 = vmatmul.mubr.bf16.gmra.mxu0 %v1757
        %v2282 = vpop.f32.mrf.mxu0
        %v2283 = vadd.f32 %v1549, %v2282
        %v2284 = vpop.f32.mrf.mxu0
        %v2285 = vpop.f32.mrf.mxu0
        %v2286 = vadd.f32 %v1549, %v2285
        %v2287 = vpop.f32.mrf.mxu0
        %2288 = vmatprep.mubr.bf16.mxu0 0
        %2289 = vmatmul.mubr.bf16.gmra.mxu0 %v1760
        %v2290 = vpop.f32.mrf.mxu0
        %v2291 = vadd.f32 %v1549, %v2290
        %v2292 = vpop.f32.mrf.mxu0
        %v2293 = vpop.f32.mrf.mxu0
        %v2294 = vadd.f32 %v1549, %v2293
        %v2295 = vpop.f32.mrf.mxu0
        %2296 = vmatprep.mubr.bf16.mxu0 0
        %2297 = vmatmul.mubr.bf16.gmra.mxu0 %v1763
        %v2298 = vpop.f32.mrf.mxu0
        %v2299 = vadd.f32 %v1549, %v2298
        %v2300 = vpop.f32.mrf.mxu0
        %v2301 = vpop.f32.mrf.mxu0
        %v2302 = vadd.f32 %v1549, %v2301
        %v2303 = vpop.f32.mrf.mxu0
        %2304 = vmatprep.mubr.bf16.mxu0 0
        %2305 = vmatmul.mubr.bf16.gmra.mxu0 %v1766
        %v2306 = vpop.f32.mrf.mxu0
        %v2307 = vadd.f32 %v1549, %v2306
        %v2308 = vpop.f32.mrf.mxu0
        %v2309 = vpop.f32.mrf.mxu0
        %v2310 = vadd.f32 %v1549, %v2309
        %v2311 = vpop.f32.mrf.mxu0
        %2312 = vdwg.mxu0
        %v2313 = vmax.f32 %v1803, 0.0
        %v2314 = vmax.f32 %v1806, 0.0
        %v2315 = vmax.f32 %v1811, 0.0
        %v2316 = vmax.f32 %v1814, 0.0
        %v2317 = vmax.f32 %v1819, 0.0
        %v2318 = vmax.f32 %v1822, 0.0
        %v2319 = vmax.f32 %v1827, 0.0
        %v2320 = vmax.f32 %v1830, 0.0
        %v2321 = vmax.f32 %v1835, 0.0
        %v2322 = vmax.f32 %v1838, 0.0
        %v2323 = vmax.f32 %v1843, 0.0
        %v2324 = vmax.f32 %v1846, 0.0
        %v2325 = vmax.f32 %v1851, 0.0
        %v2326 = vmax.f32 %v1854, 0.0
        %v2327 = vmax.f32 %v1859, 0.0
        %v2328 = vmax.f32 %v1862, 0.0
        %v2329 = vmax.f32 %v1867, 0.0
        %v2330 = vmax.f32 %v1870, 0.0
        %v2331 = vmax.f32 %v1875, 0.0
        %v2332 = vmax.f32 %v1878, 0.0
        %v2333 = vmax.f32 %v1883, 0.0
        %v2334 = vmax.f32 %v1886, 0.0
        %v2335 = vmax.f32 %v1891, 0.0
        %v2336 = vmax.f32 %v1894, 0.0
        %v2337 = vmax.f32 %v1899, 0.0
        %v2338 = vmax.f32 %v1902, 0.0
        %v2339 = vmax.f32 %v1907, 0.0
        %v2340 = vmax.f32 %v1910, 0.0
        %v2341 = vmax.f32 %v1915, 0.0
        %v2342 = vmax.f32 %v1918, 0.0
        %v2343 = vmax.f32 %v1923, 0.0
        %v2344 = vmax.f32 %v1926, 0.0
        %v2345 = vmax.f32 %v1931, 0.0
        %v2346 = vmax.f32 %v1934, 0.0
        %v2347 = vmax.f32 %v1939, 0.0
        %v2348 = vmax.f32 %v1942, 0.0
        %v2349 = vmax.f32 %v1947, 0.0
        %v2350 = vmax.f32 %v1950, 0.0
        %v2351 = vmax.f32 %v1955, 0.0
        %v2352 = vmax.f32 %v1958, 0.0
        %v2353 = vmax.f32 %v1963, 0.0
        %v2354 = vmax.f32 %v1966, 0.0
        %v2355 = vmax.f32 %v1971, 0.0
        %v2356 = vmax.f32 %v1974, 0.0
        %v2357 = vmax.f32 %v1979, 0.0
        %v2358 = vmax.f32 %v1982, 0.0
        %v2359 = vmax.f32 %v1987, 0.0
        %v2360 = vmax.f32 %v1990, 0.0
        %v2361 = vmax.f32 %v1995, 0.0
        %v2362 = vmax.f32 %v1998, 0.0
        %v2363 = vmax.f32 %v2003, 0.0
        %v2364 = vmax.f32 %v2006, 0.0
        %v2365 = vmax.f32 %v2011, 0.0
        %v2366 = vmax.f32 %v2014, 0.0
        %v2367 = vmax.f32 %v2019, 0.0
        %v2368 = vmax.f32 %v2022, 0.0
        %v2369 = vmax.f32 %v2027, 0.0
        %v2370 = vmax.f32 %v2030, 0.0
        %v2371 = vmax.f32 %v2035, 0.0
        %v2372 = vmax.f32 %v2038, 0.0
        %v2373 = vmax.f32 %v2043, 0.0
        %v2374 = vmax.f32 %v2046, 0.0
        %v2375 = vmax.f32 %v2051, 0.0
        %v2376 = vmax.f32 %v2054, 0.0
        %v2377 = vmax.f32 %v2059, 0.0
        %v2378 = vmax.f32 %v2062, 0.0
        %v2379 = vmax.f32 %v2067, 0.0
        %v2380 = vmax.f32 %v2070, 0.0
        %v2381 = vmax.f32 %v2075, 0.0
        %v2382 = vmax.f32 %v2078, 0.0
        %v2383 = vmax.f32 %v2083, 0.0
        %v2384 = vmax.f32 %v2086, 0.0
        %v2385 = vmax.f32 %v2091, 0.0
        %v2386 = vmax.f32 %v2094, 0.0
        %v2387 = vmax.f32 %v2099, 0.0
        %v2388 = vmax.f32 %v2102, 0.0
        %v2389 = vmax.f32 %v2107, 0.0
        %v2390 = vmax.f32 %v2110, 0.0
        %v2391 = vmax.f32 %v2115, 0.0
        %v2392 = vmax.f32 %v2118, 0.0
        %v2393 = vmax.f32 %v2123, 0.0
        %v2394 = vmax.f32 %v2126, 0.0
        %v2395 = vmax.f32 %v2131, 0.0
        %v2396 = vmax.f32 %v2134, 0.0
        %v2397 = vmax.f32 %v2139, 0.0
        %v2398 = vmax.f32 %v2142, 0.0
        %v2399 = vmax.f32 %v2147, 0.0
        %v2400 = vmax.f32 %v2150, 0.0
        %v2401 = vmax.f32 %v2155, 0.0
        %v2402 = vmax.f32 %v2158, 0.0
        %v2403 = vmax.f32 %v2163, 0.0
        %v2404 = vmax.f32 %v2166, 0.0
        %v2405 = vmax.f32 %v2171, 0.0
        %v2406 = vmax.f32 %v2174, 0.0
        %v2407 = vmax.f32 %v2179, 0.0
        %v2408 = vmax.f32 %v2182, 0.0
        %v2409 = vmax.f32 %v2187, 0.0
        %v2410 = vmax.f32 %v2190, 0.0
        %v2411 = vmax.f32 %v2195, 0.0
        %v2412 = vmax.f32 %v2198, 0.0
        %v2413 = vmax.f32 %v2203, 0.0
        %v2414 = vmax.f32 %v2206, 0.0
        %v2415 = vmax.f32 %v2211, 0.0
        %v2416 = vmax.f32 %v2214, 0.0
        %v2417 = vmax.f32 %v2219, 0.0
        %v2418 = vmax.f32 %v2222, 0.0
        %v2419 = vmax.f32 %v2227, 0.0
        %v2420 = vmax.f32 %v2230, 0.0
        %v2421 = vmax.f32 %v2235, 0.0
        %v2422 = vmax.f32 %v2238, 0.0
        %v2423 = vmax.f32 %v2243, 0.0
        %v2424 = vmax.f32 %v2246, 0.0
        %v2425 = vmax.f32 %v2251, 0.0
        %v2426 = vmax.f32 %v2254, 0.0
        %v2427 = vmax.f32 %v2259, 0.0
        %v2428 = vmax.f32 %v2262, 0.0
        %v2429 = vmax.f32 %v2267, 0.0
        %v2430 = vmax.f32 %v2270, 0.0
        %v2431 = vmax.f32 %v2275, 0.0
        %v2432 = vmax.f32 %v2278, 0.0
        %v2433 = vmax.f32 %v2283, 0.0
        %v2434 = vmax.f32 %v2286, 0.0
        %v2435 = vmax.f32 %v2291, 0.0
        %v2436 = vmax.f32 %v2294, 0.0
        %v2437 = vmax.f32 %v2299, 0.0
        %v2438 = vmax.f32 %v2302, 0.0
        %v2439 = vmax.f32 %v2307, 0.0
        %v2440 = vmax.f32 %v2310, 0.0
        %v2441 = vpack.c.bf16 %v2314, %v2313
        %v2442 = vpack.c.bf16 %v2316, %v2315
        %v2443 = vpack.c.bf16 %v2318, %v2317
        %v2444 = vpack.c.bf16 %v2320, %v2319
        %v2445 = vpack.c.bf16 %v2322, %v2321
        %v2446 = vpack.c.bf16 %v2324, %v2323
        %v2447 = vpack.c.bf16 %v2326, %v2325
        %v2448 = vpack.c.bf16 %v2328, %v2327
        %v2449 = vpack.c.bf16 %v2330, %v2329
        %v2450 = vpack.c.bf16 %v2332, %v2331
        %v2451 = vpack.c.bf16 %v2334, %v2333
        %v2452 = vpack.c.bf16 %v2336, %v2335
        %v2453 = vpack.c.bf16 %v2338, %v2337
        %v2454 = vpack.c.bf16 %v2340, %v2339
        %v2455 = vpack.c.bf16 %v2342, %v2341
        %v2456 = vpack.c.bf16 %v2344, %v2343
        %v2457 = vpack.c.bf16 %v2346, %v2345
        %v2458 = vpack.c.bf16 %v2348, %v2347
        %v2459 = vpack.c.bf16 %v2350, %v2349
        %v2460 = vpack.c.bf16 %v2352, %v2351
        %v2461 = vpack.c.bf16 %v2354, %v2353
        %v2462 = vpack.c.bf16 %v2356, %v2355
        %v2463 = vpack.c.bf16 %v2358, %v2357
        %v2464 = vpack.c.bf16 %v2360, %v2359
        %v2465 = vpack.c.bf16 %v2362, %v2361
        %v2466 = vpack.c.bf16 %v2364, %v2363
        %v2467 = vpack.c.bf16 %v2366, %v2365
        %v2468 = vpack.c.bf16 %v2368, %v2367
        %v2469 = vpack.c.bf16 %v2370, %v2369
        %v2470 = vpack.c.bf16 %v2372, %v2371
        %v2471 = vpack.c.bf16 %v2374, %v2373
        %v2472 = vpack.c.bf16 %v2376, %v2375
        %v2473 = vpack.c.bf16 %v2378, %v2377
        %v2474 = vpack.c.bf16 %v2380, %v2379
        %v2475 = vpack.c.bf16 %v2382, %v2381
        %v2476 = vpack.c.bf16 %v2384, %v2383
        %v2477 = vpack.c.bf16 %v2386, %v2385
        %v2478 = vpack.c.bf16 %v2388, %v2387
        %v2479 = vpack.c.bf16 %v2390, %v2389
        %v2480 = vpack.c.bf16 %v2392, %v2391
        %v2481 = vpack.c.bf16 %v2394, %v2393
        %v2482 = vpack.c.bf16 %v2396, %v2395
        %v2483 = vpack.c.bf16 %v2398, %v2397
        %v2484 = vpack.c.bf16 %v2400, %v2399
        %v2485 = vpack.c.bf16 %v2402, %v2401
        %v2486 = vpack.c.bf16 %v2404, %v2403
        %v2487 = vpack.c.bf16 %v2406, %v2405
        %v2488 = vpack.c.bf16 %v2408, %v2407
        %v2489 = vpack.c.bf16 %v2410, %v2409
        %v2490 = vpack.c.bf16 %v2412, %v2411
        %v2491 = vpack.c.bf16 %v2414, %v2413
        %v2492 = vpack.c.bf16 %v2416, %v2415
        %v2493 = vpack.c.bf16 %v2418, %v2417
        %v2494 = vpack.c.bf16 %v2420, %v2419
        %v2495 = vpack.c.bf16 %v2422, %v2421
        %v2496 = vpack.c.bf16 %v2424, %v2423
        %v2497 = vpack.c.bf16 %v2426, %v2425
        %v2498 = vpack.c.bf16 %v2428, %v2427
        %v2499 = vpack.c.bf16 %v2430, %v2429
        %v2500 = vpack.c.bf16 %v2432, %v2431
        %v2501 = vpack.c.bf16 %v2434, %v2433
        %v2502 = vpack.c.bf16 %v2436, %v2435
        %v2503 = vpack.c.bf16 %v2438, %v2437
        %v2504 = vpack.c.bf16 %v2440, %v2439
        %v2505 = vld [vmem:[#allocation7] sm:$0xf]
        %v2506 = vld [vmem:[#allocation7 + $0x4] sm:$0xf]
        %v2507 = vld [vmem:[#allocation7 + $0x8] sm:$0xf]
        %v2508 = vld [vmem:[#allocation7 + $0xc] sm:$0xf]
        %v2509 = vld [vmem:[#allocation7 + $0x10] sm:$0xf]
        %v2510 = vld [vmem:[#allocation7 + $0x14] sm:$0xf]
        %v2511 = vld [vmem:[#allocation7 + $0x18] sm:$0xf]
        %v2512 = vld [vmem:[#allocation7 + $0x1c] sm:$0xf]
        %v2513 = vld [vmem:[#allocation7 + $0x20] sm:$0xf]
        %v2514 = vld [vmem:[#allocation7 + $0x24] sm:$0xf]
        %v2515 = vld [vmem:[#allocation7 + $0x28] sm:$0xf]
        %v2516 = vld [vmem:[#allocation7 + $0x2c] sm:$0xf]
        %v2517 = vld [vmem:[#allocation7 + $0x30] sm:$0xf]
        %v2518 = vld [vmem:[#allocation7 + $0x34] sm:$0xf]
        %v2519 = vld [vmem:[#allocation7 + $0x38] sm:$0xf]
        %v2520 = vld [vmem:[#allocation7 + $0x3c] sm:$0xf]
        %v2521 = vld [vmem:[#allocation13] sm:$0x1]
        %v2523 = vlaneseq
        %v2524 = vshrl.u32 %v2523, 7
        %v2525 = vsub.s32 0, %v2524
        %v2526 = vrot.slane %v2521, %v2525
        %v2544 = vunpack.c.l.b16 %v2505
        %v2545 = vunpack.c.l.b16 %v2506
        %v2546 = vunpack.c.l.b16 %v2507
        %v2547 = vunpack.c.l.b16 %v2508
        %v2548 = vunpack.c.l.b16 %v2509
        %v2549 = vunpack.c.l.b16 %v2510
        %v2550 = vunpack.c.l.b16 %v2511
        %v2551 = vunpack.c.l.b16 %v2512
        %v2552 = vunpack.c.l.b16 %v2513
        %v2553 = vunpack.c.l.b16 %v2514
        %v2554 = vunpack.c.l.b16 %v2515
        %v2555 = vunpack.c.l.b16 %v2516
        %v2556 = vunpack.c.l.b16 %v2517
        %v2557 = vunpack.c.l.b16 %v2518
        %v2558 = vunpack.c.l.b16 %v2519
        %v2559 = vunpack.c.l.b16 %v2520
        %v2560 = vpack.c.b16 %v2545, %v2544
        %v2561 = vpack.c.b16 %v2547, %v2546
        %v2562 = vpack.c.b16 %v2549, %v2548
        %v2563 = vpack.c.b16 %v2551, %v2550
        %v2564 = vpack.c.b16 %v2553, %v2552
        %v2565 = vpack.c.b16 %v2555, %v2554
        %v2566 = vpack.c.b16 %v2557, %v2556
        %v2567 = vpack.c.b16 %v2559, %v2558
        %2576 = vmatprep.subr.bf16.mxu0 0
        %2577 = vmatpush1.bf16.msra.mxu0 %v2567
        %2578 = vmatprep.subr.bf16.mxu0 0
        %2579 = vmatpush1.bf16.msra.mxu0 %v2566
        %2580 = vmatprep.subr.bf16.mxu0 0
        %2581 = vmatpush1.bf16.msra.mxu0 %v2565
        %2582 = vmatprep.subr.bf16.mxu0 0
        %2583 = vmatpush1.bf16.msra.mxu0 %v2564
        %2584 = vmatprep.subr.bf16.mxu0 0
        %2585 = vmatpush1.bf16.msra.mxu0 %v2563
        %2586 = vmatprep.subr.bf16.mxu0 0
        %2587 = vmatpush1.bf16.msra.mxu0 %v2562
        %2588 = vmatprep.subr.bf16.mxu0 0
        %2589 = vmatpush1.bf16.msra.mxu0 %v2561
        %2590 = vmatprep.subr.bf16.mxu0 0
        %2591 = vmatpush1.bf16.msra.mxu0 %v2560
        %2592 = vmatprep.subr.bf16.mxu0 0
        %2593 = vmatpush2.bf16.msra.mxu0 0
        %2594 = vmatprep.subr.bf16.mxu0 0
        %2595 = vmatpush2.bf16.msra.mxu0 0
        %2596 = vmatprep.subr.bf16.mxu0 0
        %2597 = vmatpush2.bf16.msra.mxu0 0
        %2598 = vmatprep.subr.bf16.mxu0 0
        %2599 = vmatpush2.bf16.msra.mxu0 0
        %2600 = vmatprep.subr.bf16.mxu0 0
        %2601 = vmatpush2.bf16.msra.mxu0 0
        %2602 = vmatprep.subr.bf16.mxu0 0
        %2603 = vmatpush2.bf16.msra.mxu0 0
        %2604 = vmatprep.subr.bf16.mxu0 0
        %2605 = vmatpush2.bf16.msra.mxu0 0
        %2606 = vmatprep.subr.bf16.mxu0 0
        %2607 = vmatpush2.bf16.msra.mxu0 0
        %2608 = vmatprep.mubr.bf16.mxu0 0
        %2609 = vmatmul.mubr.bf16.gmra.mxu0 %v2441
        %v2610 = vpop.f32.mrf.mxu0
        %v2611 = vadd.f32 %v2526, %v2610
        %v2612 = vpop.f32.mrf.mxu0
        %v2613 = vpop.f32.mrf.mxu0
        %v2614 = vadd.f32 %v2526, %v2613
        %v2615 = vpop.f32.mrf.mxu0
        %2616 = vmatprep.mubr.bf16.mxu0 0
        %2617 = vmatmul.mubr.bf16.gmra.mxu0 %v2442
        %v2618 = vpop.f32.mrf.mxu0
        %v2619 = vadd.f32 %v2526, %v2618
        %v2620 = vpop.f32.mrf.mxu0
        %v2621 = vpop.f32.mrf.mxu0
        %v2622 = vadd.f32 %v2526, %v2621
        %v2623 = vpop.f32.mrf.mxu0
        %2624 = vmatprep.mubr.bf16.mxu0 0
        %2625 = vmatmul.mubr.bf16.gmra.mxu0 %v2443
        %v2626 = vpop.f32.mrf.mxu0
        %v2627 = vadd.f32 %v2526, %v2626
        %v2628 = vpop.f32.mrf.mxu0
        %v2629 = vpop.f32.mrf.mxu0
        %v2630 = vadd.f32 %v2526, %v2629
        %v2631 = vpop.f32.mrf.mxu0
        %2632 = vmatprep.mubr.bf16.mxu0 0
        %2633 = vmatmul.mubr.bf16.gmra.mxu0 %v2444
        %v2634 = vpop.f32.mrf.mxu0
        %v2635 = vadd.f32 %v2526, %v2634
        %v2636 = vpop.f32.mrf.mxu0
        %v2637 = vpop.f32.mrf.mxu0
        %v2638 = vadd.f32 %v2526, %v2637
        %v2639 = vpop.f32.mrf.mxu0
        %2640 = vmatprep.mubr.bf16.mxu0 0
        %2641 = vmatmul.mubr.bf16.gmra.mxu0 %v2445
        %v2642 = vpop.f32.mrf.mxu0
        %v2643 = vadd.f32 %v2526, %v2642
        %v2644 = vpop.f32.mrf.mxu0
        %v2645 = vpop.f32.mrf.mxu0
        %v2646 = vadd.f32 %v2526, %v2645
        %v2647 = vpop.f32.mrf.mxu0
        %2648 = vmatprep.mubr.bf16.mxu0 0
        %2649 = vmatmul.mubr.bf16.gmra.mxu0 %v2446
        %v2650 = vpop.f32.mrf.mxu0
        %v2651 = vadd.f32 %v2526, %v2650
        %v2652 = vpop.f32.mrf.mxu0
        %v2653 = vpop.f32.mrf.mxu0
        %v2654 = vadd.f32 %v2526, %v2653
        %v2655 = vpop.f32.mrf.mxu0
        %2656 = vmatprep.mubr.bf16.mxu0 0
        %2657 = vmatmul.mubr.bf16.gmra.mxu0 %v2447
        %v2658 = vpop.f32.mrf.mxu0
        %v2659 = vadd.f32 %v2526, %v2658
        %v2660 = vpop.f32.mrf.mxu0
        %v2661 = vpop.f32.mrf.mxu0
        %v2662 = vadd.f32 %v2526, %v2661
        %v2663 = vpop.f32.mrf.mxu0
        %2664 = vmatprep.mubr.bf16.mxu0 0
        %2665 = vmatmul.mubr.bf16.gmra.mxu0 %v2448
        %v2666 = vpop.f32.mrf.mxu0
        %v2667 = vadd.f32 %v2526, %v2666
        %v2668 = vpop.f32.mrf.mxu0
        %v2669 = vpop.f32.mrf.mxu0
        %v2670 = vadd.f32 %v2526, %v2669
        %v2671 = vpop.f32.mrf.mxu0
        %2672 = vmatprep.mubr.bf16.mxu0 0
        %2673 = vmatmul.mubr.bf16.gmra.mxu0 %v2449
        %v2674 = vpop.f32.mrf.mxu0
        %v2675 = vadd.f32 %v2526, %v2674
        %v2676 = vpop.f32.mrf.mxu0
        %v2677 = vpop.f32.mrf.mxu0
        %v2678 = vadd.f32 %v2526, %v2677
        %v2679 = vpop.f32.mrf.mxu0
        %2680 = vmatprep.mubr.bf16.mxu0 0
        %2681 = vmatmul.mubr.bf16.gmra.mxu0 %v2450
        %v2682 = vpop.f32.mrf.mxu0
        %v2683 = vadd.f32 %v2526, %v2682
        %v2684 = vpop.f32.mrf.mxu0
        %v2685 = vpop.f32.mrf.mxu0
        %v2686 = vadd.f32 %v2526, %v2685
        %v2687 = vpop.f32.mrf.mxu0
        %2688 = vmatprep.mubr.bf16.mxu0 0
        %2689 = vmatmul.mubr.bf16.gmra.mxu0 %v2451
        %v2690 = vpop.f32.mrf.mxu0
        %v2691 = vadd.f32 %v2526, %v2690
        %v2692 = vpop.f32.mrf.mxu0
        %v2693 = vpop.f32.mrf.mxu0
        %v2694 = vadd.f32 %v2526, %v2693
        %v2695 = vpop.f32.mrf.mxu0
        %2696 = vmatprep.mubr.bf16.mxu0 0
        %2697 = vmatmul.mubr.bf16.gmra.mxu0 %v2452
        %v2698 = vpop.f32.mrf.mxu0
        %v2699 = vadd.f32 %v2526, %v2698
        %v2700 = vpop.f32.mrf.mxu0
        %v2701 = vpop.f32.mrf.mxu0
        %v2702 = vadd.f32 %v2526, %v2701
        %v2703 = vpop.f32.mrf.mxu0
        %2704 = vmatprep.mubr.bf16.mxu0 0
        %2705 = vmatmul.mubr.bf16.gmra.mxu0 %v2453
        %v2706 = vpop.f32.mrf.mxu0
        %v2707 = vadd.f32 %v2526, %v2706
        %v2708 = vpop.f32.mrf.mxu0
        %v2709 = vpop.f32.mrf.mxu0
        %v2710 = vadd.f32 %v2526, %v2709
        %v2711 = vpop.f32.mrf.mxu0
        %2712 = vmatprep.mubr.bf16.mxu0 0
        %2713 = vmatmul.mubr.bf16.gmra.mxu0 %v2454
        %v2714 = vpop.f32.mrf.mxu0
        %v2715 = vadd.f32 %v2526, %v2714
        %v2716 = vpop.f32.mrf.mxu0
        %v2717 = vpop.f32.mrf.mxu0
        %v2718 = vadd.f32 %v2526, %v2717
        %v2719 = vpop.f32.mrf.mxu0
        %2720 = vmatprep.mubr.bf16.mxu0 0
        %2721 = vmatmul.mubr.bf16.gmra.mxu0 %v2455
        %v2722 = vpop.f32.mrf.mxu0
        %v2723 = vadd.f32 %v2526, %v2722
        %v2724 = vpop.f32.mrf.mxu0
        %v2725 = vpop.f32.mrf.mxu0
        %v2726 = vadd.f32 %v2526, %v2725
        %v2727 = vpop.f32.mrf.mxu0
        %2728 = vmatprep.mubr.bf16.mxu0 0
        %2729 = vmatmul.mubr.bf16.gmra.mxu0 %v2456
        %v2730 = vpop.f32.mrf.mxu0
        %v2731 = vadd.f32 %v2526, %v2730
        %v2732 = vpop.f32.mrf.mxu0
        %v2733 = vpop.f32.mrf.mxu0
        %v2734 = vadd.f32 %v2526, %v2733
        %v2735 = vpop.f32.mrf.mxu0
        %2736 = vmatprep.mubr.bf16.mxu0 0
        %2737 = vmatmul.mubr.bf16.gmra.mxu0 %v2457
        %v2738 = vpop.f32.mrf.mxu0
        %v2739 = vadd.f32 %v2526, %v2738
        %v2740 = vpop.f32.mrf.mxu0
        %v2741 = vpop.f32.mrf.mxu0
        %v2742 = vadd.f32 %v2526, %v2741
        %v2743 = vpop.f32.mrf.mxu0
        %2744 = vmatprep.mubr.bf16.mxu0 0
        %2745 = vmatmul.mubr.bf16.gmra.mxu0 %v2458
        %v2746 = vpop.f32.mrf.mxu0
        %v2747 = vadd.f32 %v2526, %v2746
        %v2748 = vpop.f32.mrf.mxu0
        %v2749 = vpop.f32.mrf.mxu0
        %v2750 = vadd.f32 %v2526, %v2749
        %v2751 = vpop.f32.mrf.mxu0
        %2752 = vmatprep.mubr.bf16.mxu0 0
        %2753 = vmatmul.mubr.bf16.gmra.mxu0 %v2459
        %v2754 = vpop.f32.mrf.mxu0
        %v2755 = vadd.f32 %v2526, %v2754
        %v2756 = vpop.f32.mrf.mxu0
        %v2757 = vpop.f32.mrf.mxu0
        %v2758 = vadd.f32 %v2526, %v2757
        %v2759 = vpop.f32.mrf.mxu0
        %2760 = vmatprep.mubr.bf16.mxu0 0
        %2761 = vmatmul.mubr.bf16.gmra.mxu0 %v2460
        %v2762 = vpop.f32.mrf.mxu0
        %v2763 = vadd.f32 %v2526, %v2762
        %v2764 = vpop.f32.mrf.mxu0
        %v2765 = vpop.f32.mrf.mxu0
        %v2766 = vadd.f32 %v2526, %v2765
        %v2767 = vpop.f32.mrf.mxu0
        %2768 = vmatprep.mubr.bf16.mxu0 0
        %2769 = vmatmul.mubr.bf16.gmra.mxu0 %v2461
        %v2770 = vpop.f32.mrf.mxu0
        %v2771 = vadd.f32 %v2526, %v2770
        %v2772 = vpop.f32.mrf.mxu0
        %v2773 = vpop.f32.mrf.mxu0
        %v2774 = vadd.f32 %v2526, %v2773
        %v2775 = vpop.f32.mrf.mxu0
        %2776 = vmatprep.mubr.bf16.mxu0 0
        %2777 = vmatmul.mubr.bf16.gmra.mxu0 %v2462
        %v2778 = vpop.f32.mrf.mxu0
        %v2779 = vadd.f32 %v2526, %v2778
        %v2780 = vpop.f32.mrf.mxu0
        %v2781 = vpop.f32.mrf.mxu0
        %v2782 = vadd.f32 %v2526, %v2781
        %v2783 = vpop.f32.mrf.mxu0
        %2784 = vmatprep.mubr.bf16.mxu0 0
        %2785 = vmatmul.mubr.bf16.gmra.mxu0 %v2463
        %v2786 = vpop.f32.mrf.mxu0
        %v2787 = vadd.f32 %v2526, %v2786
        %v2788 = vpop.f32.mrf.mxu0
        %v2789 = vpop.f32.mrf.mxu0
        %v2790 = vadd.f32 %v2526, %v2789
        %v2791 = vpop.f32.mrf.mxu0
        %2792 = vmatprep.mubr.bf16.mxu0 0
        %2793 = vmatmul.mubr.bf16.gmra.mxu0 %v2464
        %v2794 = vpop.f32.mrf.mxu0
        %v2795 = vadd.f32 %v2526, %v2794
        %v2796 = vpop.f32.mrf.mxu0
        %v2797 = vpop.f32.mrf.mxu0
        %v2798 = vadd.f32 %v2526, %v2797
        %v2799 = vpop.f32.mrf.mxu0
        %2800 = vmatprep.mubr.bf16.mxu0 0
        %2801 = vmatmul.mubr.bf16.gmra.mxu0 %v2465
        %v2802 = vpop.f32.mrf.mxu0
        %v2803 = vadd.f32 %v2526, %v2802
        %v2804 = vpop.f32.mrf.mxu0
        %v2805 = vpop.f32.mrf.mxu0
        %v2806 = vadd.f32 %v2526, %v2805
        %v2807 = vpop.f32.mrf.mxu0
        %2808 = vmatprep.mubr.bf16.mxu0 0
        %2809 = vmatmul.mubr.bf16.gmra.mxu0 %v2466
        %v2810 = vpop.f32.mrf.mxu0
        %v2811 = vadd.f32 %v2526, %v2810
        %v2812 = vpop.f32.mrf.mxu0
        %v2813 = vpop.f32.mrf.mxu0
        %v2814 = vadd.f32 %v2526, %v2813
        %v2815 = vpop.f32.mrf.mxu0
        %2816 = vmatprep.mubr.bf16.mxu0 0
        %2817 = vmatmul.mubr.bf16.gmra.mxu0 %v2467
        %v2818 = vpop.f32.mrf.mxu0
        %v2819 = vadd.f32 %v2526, %v2818
        %v2820 = vpop.f32.mrf.mxu0
        %v2821 = vpop.f32.mrf.mxu0
        %v2822 = vadd.f32 %v2526, %v2821
        %v2823 = vpop.f32.mrf.mxu0
        %2824 = vmatprep.mubr.bf16.mxu0 0
        %2825 = vmatmul.mubr.bf16.gmra.mxu0 %v2468
        %v2826 = vpop.f32.mrf.mxu0
        %v2827 = vadd.f32 %v2526, %v2826
        %v2828 = vpop.f32.mrf.mxu0
        %v2829 = vpop.f32.mrf.mxu0
        %v2830 = vadd.f32 %v2526, %v2829
        %v2831 = vpop.f32.mrf.mxu0
        %2832 = vmatprep.mubr.bf16.mxu0 0
        %2833 = vmatmul.mubr.bf16.gmra.mxu0 %v2469
        %v2834 = vpop.f32.mrf.mxu0
        %v2835 = vadd.f32 %v2526, %v2834
        %v2836 = vpop.f32.mrf.mxu0
        %v2837 = vpop.f32.mrf.mxu0
        %v2838 = vadd.f32 %v2526, %v2837
        %v2839 = vpop.f32.mrf.mxu0
        %2840 = vmatprep.mubr.bf16.mxu0 0
        %2841 = vmatmul.mubr.bf16.gmra.mxu0 %v2470
        %v2842 = vpop.f32.mrf.mxu0
        %v2843 = vadd.f32 %v2526, %v2842
        %v2844 = vpop.f32.mrf.mxu0
        %v2845 = vpop.f32.mrf.mxu0
        %v2846 = vadd.f32 %v2526, %v2845
        %v2847 = vpop.f32.mrf.mxu0
        %2848 = vmatprep.mubr.bf16.mxu0 0
        %2849 = vmatmul.mubr.bf16.gmra.mxu0 %v2471
        %v2850 = vpop.f32.mrf.mxu0
        %v2851 = vadd.f32 %v2526, %v2850
        %v2852 = vpop.f32.mrf.mxu0
        %v2853 = vpop.f32.mrf.mxu0
        %v2854 = vadd.f32 %v2526, %v2853
        %v2855 = vpop.f32.mrf.mxu0
        %2856 = vmatprep.mubr.bf16.mxu0 0
        %2857 = vmatmul.mubr.bf16.gmra.mxu0 %v2472
        %v2858 = vpop.f32.mrf.mxu0
        %v2859 = vadd.f32 %v2526, %v2858
        %v2860 = vpop.f32.mrf.mxu0
        %v2861 = vpop.f32.mrf.mxu0
        %v2862 = vadd.f32 %v2526, %v2861
        %v2863 = vpop.f32.mrf.mxu0
        %2864 = vmatprep.mubr.bf16.mxu0 0
        %2865 = vmatmul.mubr.bf16.gmra.mxu0 %v2473
        %v2866 = vpop.f32.mrf.mxu0
        %v2867 = vadd.f32 %v2526, %v2866
        %v2868 = vpop.f32.mrf.mxu0
        %v2869 = vpop.f32.mrf.mxu0
        %v2870 = vadd.f32 %v2526, %v2869
        %v2871 = vpop.f32.mrf.mxu0
        %2872 = vmatprep.mubr.bf16.mxu0 0
        %2873 = vmatmul.mubr.bf16.gmra.mxu0 %v2474
        %v2874 = vpop.f32.mrf.mxu0
        %v2875 = vadd.f32 %v2526, %v2874
        %v2876 = vpop.f32.mrf.mxu0
        %v2877 = vpop.f32.mrf.mxu0
        %v2878 = vadd.f32 %v2526, %v2877
        %v2879 = vpop.f32.mrf.mxu0
        %2880 = vmatprep.mubr.bf16.mxu0 0
        %2881 = vmatmul.mubr.bf16.gmra.mxu0 %v2475
        %v2882 = vpop.f32.mrf.mxu0
        %v2883 = vadd.f32 %v2526, %v2882
        %v2884 = vpop.f32.mrf.mxu0
        %v2885 = vpop.f32.mrf.mxu0
        %v2886 = vadd.f32 %v2526, %v2885
        %v2887 = vpop.f32.mrf.mxu0
        %2888 = vmatprep.mubr.bf16.mxu0 0
        %2889 = vmatmul.mubr.bf16.gmra.mxu0 %v2476
        %v2890 = vpop.f32.mrf.mxu0
        %v2891 = vadd.f32 %v2526, %v2890
        %v2892 = vpop.f32.mrf.mxu0
        %v2893 = vpop.f32.mrf.mxu0
        %v2894 = vadd.f32 %v2526, %v2893
        %v2895 = vpop.f32.mrf.mxu0
        %2896 = vmatprep.mubr.bf16.mxu0 0
        %2897 = vmatmul.mubr.bf16.gmra.mxu0 %v2477
        %v2898 = vpop.f32.mrf.mxu0
        %v2899 = vadd.f32 %v2526, %v2898
        %v2900 = vpop.f32.mrf.mxu0
        %v2901 = vpop.f32.mrf.mxu0
        %v2902 = vadd.f32 %v2526, %v2901
        %v2903 = vpop.f32.mrf.mxu0
        %2904 = vmatprep.mubr.bf16.mxu0 0
        %2905 = vmatmul.mubr.bf16.gmra.mxu0 %v2478
        %v2906 = vpop.f32.mrf.mxu0
        %v2907 = vadd.f32 %v2526, %v2906
        %v2908 = vpop.f32.mrf.mxu0
        %v2909 = vpop.f32.mrf.mxu0
        %v2910 = vadd.f32 %v2526, %v2909
        %v2911 = vpop.f32.mrf.mxu0
        %2912 = vmatprep.mubr.bf16.mxu0 0
        %2913 = vmatmul.mubr.bf16.gmra.mxu0 %v2479
        %v2914 = vpop.f32.mrf.mxu0
        %v2915 = vadd.f32 %v2526, %v2914
        %v2916 = vpop.f32.mrf.mxu0
        %v2917 = vpop.f32.mrf.mxu0
        %v2918 = vadd.f32 %v2526, %v2917
        %v2919 = vpop.f32.mrf.mxu0
        %2920 = vmatprep.mubr.bf16.mxu0 0
        %2921 = vmatmul.mubr.bf16.gmra.mxu0 %v2480
        %v2922 = vpop.f32.mrf.mxu0
        %v2923 = vadd.f32 %v2526, %v2922
        %v2924 = vpop.f32.mrf.mxu0
        %v2925 = vpop.f32.mrf.mxu0
        %v2926 = vadd.f32 %v2526, %v2925
        %v2927 = vpop.f32.mrf.mxu0
        %2928 = vmatprep.mubr.bf16.mxu0 0
        %2929 = vmatmul.mubr.bf16.gmra.mxu0 %v2481
        %v2930 = vpop.f32.mrf.mxu0
        %v2931 = vadd.f32 %v2526, %v2930
        %v2932 = vpop.f32.mrf.mxu0
        %v2933 = vpop.f32.mrf.mxu0
        %v2934 = vadd.f32 %v2526, %v2933
        %v2935 = vpop.f32.mrf.mxu0
        %2936 = vmatprep.mubr.bf16.mxu0 0
        %2937 = vmatmul.mubr.bf16.gmra.mxu0 %v2482
        %v2938 = vpop.f32.mrf.mxu0
        %v2939 = vadd.f32 %v2526, %v2938
        %v2940 = vpop.f32.mrf.mxu0
        %v2941 = vpop.f32.mrf.mxu0
        %v2942 = vadd.f32 %v2526, %v2941
        %v2943 = vpop.f32.mrf.mxu0
        %2944 = vmatprep.mubr.bf16.mxu0 0
        %2945 = vmatmul.mubr.bf16.gmra.mxu0 %v2483
        %v2946 = vpop.f32.mrf.mxu0
        %v2947 = vadd.f32 %v2526, %v2946
        %v2948 = vpop.f32.mrf.mxu0
        %v2949 = vpop.f32.mrf.mxu0
        %v2950 = vadd.f32 %v2526, %v2949
        %v2951 = vpop.f32.mrf.mxu0
        %2952 = vmatprep.mubr.bf16.mxu0 0
        %2953 = vmatmul.mubr.bf16.gmra.mxu0 %v2484
        %v2954 = vpop.f32.mrf.mxu0
        %v2955 = vadd.f32 %v2526, %v2954
        %v2956 = vpop.f32.mrf.mxu0
        %v2957 = vpop.f32.mrf.mxu0
        %v2958 = vadd.f32 %v2526, %v2957
        %v2959 = vpop.f32.mrf.mxu0
        %2960 = vmatprep.mubr.bf16.mxu0 0
        %2961 = vmatmul.mubr.bf16.gmra.mxu0 %v2485
        %v2962 = vpop.f32.mrf.mxu0
        %v2963 = vadd.f32 %v2526, %v2962
        %v2964 = vpop.f32.mrf.mxu0
        %v2965 = vpop.f32.mrf.mxu0
        %v2966 = vadd.f32 %v2526, %v2965
        %v2967 = vpop.f32.mrf.mxu0
        %2968 = vmatprep.mubr.bf16.mxu0 0
        %2969 = vmatmul.mubr.bf16.gmra.mxu0 %v2486
        %v2970 = vpop.f32.mrf.mxu0
        %v2971 = vadd.f32 %v2526, %v2970
        %v2972 = vpop.f32.mrf.mxu0
        %v2973 = vpop.f32.mrf.mxu0
        %v2974 = vadd.f32 %v2526, %v2973
        %v2975 = vpop.f32.mrf.mxu0
        %2976 = vmatprep.mubr.bf16.mxu0 0
        %2977 = vmatmul.mubr.bf16.gmra.mxu0 %v2487
        %v2978 = vpop.f32.mrf.mxu0
        %v2979 = vadd.f32 %v2526, %v2978
        %v2980 = vpop.f32.mrf.mxu0
        %v2981 = vpop.f32.mrf.mxu0
        %v2982 = vadd.f32 %v2526, %v2981
        %v2983 = vpop.f32.mrf.mxu0
        %2984 = vmatprep.mubr.bf16.mxu0 0
        %2985 = vmatmul.mubr.bf16.gmra.mxu0 %v2488
        %v2986 = vpop.f32.mrf.mxu0
        %v2987 = vadd.f32 %v2526, %v2986
        %v2988 = vpop.f32.mrf.mxu0
        %v2989 = vpop.f32.mrf.mxu0
        %v2990 = vadd.f32 %v2526, %v2989
        %v2991 = vpop.f32.mrf.mxu0
        %2992 = vmatprep.mubr.bf16.mxu0 0
        %2993 = vmatmul.mubr.bf16.gmra.mxu0 %v2489
        %v2994 = vpop.f32.mrf.mxu0
        %v2995 = vadd.f32 %v2526, %v2994
        %v2996 = vpop.f32.mrf.mxu0
        %v2997 = vpop.f32.mrf.mxu0
        %v2998 = vadd.f32 %v2526, %v2997
        %v2999 = vpop.f32.mrf.mxu0
        %3000 = vmatprep.mubr.bf16.mxu0 0
        %3001 = vmatmul.mubr.bf16.gmra.mxu0 %v2490
        %v3002 = vpop.f32.mrf.mxu0
        %v3003 = vadd.f32 %v2526, %v3002
        %v3004 = vpop.f32.mrf.mxu0
        %v3005 = vpop.f32.mrf.mxu0
        %v3006 = vadd.f32 %v2526, %v3005
        %v3007 = vpop.f32.mrf.mxu0
        %3008 = vmatprep.mubr.bf16.mxu0 0
        %3009 = vmatmul.mubr.bf16.gmra.mxu0 %v2491
        %v3010 = vpop.f32.mrf.mxu0
        %v3011 = vadd.f32 %v2526, %v3010
        %v3012 = vpop.f32.mrf.mxu0
        %v3013 = vpop.f32.mrf.mxu0
        %v3014 = vadd.f32 %v2526, %v3013
        %v3015 = vpop.f32.mrf.mxu0
        %3016 = vmatprep.mubr.bf16.mxu0 0
        %3017 = vmatmul.mubr.bf16.gmra.mxu0 %v2492
        %v3018 = vpop.f32.mrf.mxu0
        %v3019 = vadd.f32 %v2526, %v3018
        %v3020 = vpop.f32.mrf.mxu0
        %v3021 = vpop.f32.mrf.mxu0
        %v3022 = vadd.f32 %v2526, %v3021
        %v3023 = vpop.f32.mrf.mxu0
        %3024 = vmatprep.mubr.bf16.mxu0 0
        %3025 = vmatmul.mubr.bf16.gmra.mxu0 %v2493
        %v3026 = vpop.f32.mrf.mxu0
        %v3027 = vadd.f32 %v2526, %v3026
        %v3028 = vpop.f32.mrf.mxu0
        %v3029 = vpop.f32.mrf.mxu0
        %v3030 = vadd.f32 %v2526, %v3029
        %v3031 = vpop.f32.mrf.mxu0
        %3032 = vmatprep.mubr.bf16.mxu0 0
        %3033 = vmatmul.mubr.bf16.gmra.mxu0 %v2494
        %v3034 = vpop.f32.mrf.mxu0
        %v3035 = vadd.f32 %v2526, %v3034
        %v3036 = vpop.f32.mrf.mxu0
        %v3037 = vpop.f32.mrf.mxu0
        %v3038 = vadd.f32 %v2526, %v3037
        %v3039 = vpop.f32.mrf.mxu0
        %3040 = vmatprep.mubr.bf16.mxu0 0
        %3041 = vmatmul.mubr.bf16.gmra.mxu0 %v2495
        %v3042 = vpop.f32.mrf.mxu0
        %v3043 = vadd.f32 %v2526, %v3042
        %v3044 = vpop.f32.mrf.mxu0
        %v3045 = vpop.f32.mrf.mxu0
        %v3046 = vadd.f32 %v2526, %v3045
        %v3047 = vpop.f32.mrf.mxu0
        %3048 = vmatprep.mubr.bf16.mxu0 0
        %3049 = vmatmul.mubr.bf16.gmra.mxu0 %v2496
        %v3050 = vpop.f32.mrf.mxu0
        %v3051 = vadd.f32 %v2526, %v3050
        %v3052 = vpop.f32.mrf.mxu0
        %v3053 = vpop.f32.mrf.mxu0
        %v3054 = vadd.f32 %v2526, %v3053
        %v3055 = vpop.f32.mrf.mxu0
        %3056 = vmatprep.mubr.bf16.mxu0 0
        %3057 = vmatmul.mubr.bf16.gmra.mxu0 %v2497
        %v3058 = vpop.f32.mrf.mxu0
        %v3059 = vadd.f32 %v2526, %v3058
        %v3060 = vpop.f32.mrf.mxu0
        %v3061 = vpop.f32.mrf.mxu0
        %v3062 = vadd.f32 %v2526, %v3061
        %v3063 = vpop.f32.mrf.mxu0
        %3064 = vmatprep.mubr.bf16.mxu0 0
        %3065 = vmatmul.mubr.bf16.gmra.mxu0 %v2498
        %v3066 = vpop.f32.mrf.mxu0
        %v3067 = vadd.f32 %v2526, %v3066
        %v3068 = vpop.f32.mrf.mxu0
        %v3069 = vpop.f32.mrf.mxu0
        %v3070 = vadd.f32 %v2526, %v3069
        %v3071 = vpop.f32.mrf.mxu0
        %3072 = vmatprep.mubr.bf16.mxu0 0
        %3073 = vmatmul.mubr.bf16.gmra.mxu0 %v2499
        %v3074 = vpop.f32.mrf.mxu0
        %v3075 = vadd.f32 %v2526, %v3074
        %v3076 = vpop.f32.mrf.mxu0
        %v3077 = vpop.f32.mrf.mxu0
        %v3078 = vadd.f32 %v2526, %v3077
        %v3079 = vpop.f32.mrf.mxu0
        %3080 = vmatprep.mubr.bf16.mxu0 0
        %3081 = vmatmul.mubr.bf16.gmra.mxu0 %v2500
        %v3082 = vpop.f32.mrf.mxu0
        %v3083 = vadd.f32 %v2526, %v3082
        %v3084 = vpop.f32.mrf.mxu0
        %v3085 = vpop.f32.mrf.mxu0
        %v3086 = vadd.f32 %v2526, %v3085
        %v3087 = vpop.f32.mrf.mxu0
        %3088 = vmatprep.mubr.bf16.mxu0 0
        %3089 = vmatmul.mubr.bf16.gmra.mxu0 %v2501
        %v3090 = vpop.f32.mrf.mxu0
        %v3091 = vadd.f32 %v2526, %v3090
        %v3092 = vpop.f32.mrf.mxu0
        %v3093 = vpop.f32.mrf.mxu0
        %v3094 = vadd.f32 %v2526, %v3093
        %v3095 = vpop.f32.mrf.mxu0
        %3096 = vmatprep.mubr.bf16.mxu0 0
        %3097 = vmatmul.mubr.bf16.gmra.mxu0 %v2502
        %v3098 = vpop.f32.mrf.mxu0
        %v3099 = vadd.f32 %v2526, %v3098
        %v3100 = vpop.f32.mrf.mxu0
        %v3101 = vpop.f32.mrf.mxu0
        %v3102 = vadd.f32 %v2526, %v3101
        %v3103 = vpop.f32.mrf.mxu0
        %3104 = vmatprep.mubr.bf16.mxu0 0
        %3105 = vmatmul.mubr.bf16.gmra.mxu0 %v2503
        %v3106 = vpop.f32.mrf.mxu0
        %v3107 = vadd.f32 %v2526, %v3106
        %v3108 = vpop.f32.mrf.mxu0
        %v3109 = vpop.f32.mrf.mxu0
        %v3110 = vadd.f32 %v2526, %v3109
        %v3111 = vpop.f32.mrf.mxu0
        %3112 = vmatprep.mubr.bf16.mxu0 0
        %3113 = vmatmul.mubr.bf16.gmra.mxu0 %v2504
        %v3114 = vpop.f32.mrf.mxu0
        %v3115 = vadd.f32 %v2526, %v3114
        %v3116 = vpop.f32.mrf.mxu0
        %v3117 = vpop.f32.mrf.mxu0
        %v3118 = vadd.f32 %v2526, %v3117
        %v3119 = vpop.f32.mrf.mxu0
        %3120 = vdwg.mxu0
        %v3121 = vmax.f32 %v2611, 0.0
        %v3122 = vmax.f32 %v2614, 0.0
        %v3123 = vmax.f32 %v2619, 0.0
        %v3124 = vmax.f32 %v2622, 0.0
        %v3125 = vmax.f32 %v2627, 0.0
        %v3126 = vmax.f32 %v2630, 0.0
        %v3127 = vmax.f32 %v2635, 0.0
        %v3128 = vmax.f32 %v2638, 0.0
        %v3129 = vmax.f32 %v2643, 0.0
        %v3130 = vmax.f32 %v2646, 0.0
        %v3131 = vmax.f32 %v2651, 0.0
        %v3132 = vmax.f32 %v2654, 0.0
        %v3133 = vmax.f32 %v2659, 0.0
        %v3134 = vmax.f32 %v2662, 0.0
        %v3135 = vmax.f32 %v2667, 0.0
        %v3136 = vmax.f32 %v2670, 0.0
        %v3137 = vmax.f32 %v2675, 0.0
        %v3138 = vmax.f32 %v2678, 0.0
        %v3139 = vmax.f32 %v2683, 0.0
        %v3140 = vmax.f32 %v2686, 0.0
        %v3141 = vmax.f32 %v2691, 0.0
        %v3142 = vmax.f32 %v2694, 0.0
        %v3143 = vmax.f32 %v2699, 0.0
        %v3144 = vmax.f32 %v2702, 0.0
        %v3145 = vmax.f32 %v2707, 0.0
        %v3146 = vmax.f32 %v2710, 0.0
        %v3147 = vmax.f32 %v2715, 0.0
        %v3148 = vmax.f32 %v2718, 0.0
        %v3149 = vmax.f32 %v2723, 0.0
        %v3150 = vmax.f32 %v2726, 0.0
        %v3151 = vmax.f32 %v2731, 0.0
        %v3152 = vmax.f32 %v2734, 0.0
        %v3153 = vmax.f32 %v2739, 0.0
        %v3154 = vmax.f32 %v2742, 0.0
        %v3155 = vmax.f32 %v2747, 0.0
        %v3156 = vmax.f32 %v2750, 0.0
        %v3157 = vmax.f32 %v2755, 0.0
        %v3158 = vmax.f32 %v2758, 0.0
        %v3159 = vmax.f32 %v2763, 0.0
        %v3160 = vmax.f32 %v2766, 0.0
        %v3161 = vmax.f32 %v2771, 0.0
        %v3162 = vmax.f32 %v2774, 0.0
        %v3163 = vmax.f32 %v2779, 0.0
        %v3164 = vmax.f32 %v2782, 0.0
        %v3165 = vmax.f32 %v2787, 0.0
        %v3166 = vmax.f32 %v2790, 0.0
        %v3167 = vmax.f32 %v2795, 0.0
        %v3168 = vmax.f32 %v2798, 0.0
        %v3169 = vmax.f32 %v2803, 0.0
        %v3170 = vmax.f32 %v2806, 0.0
        %v3171 = vmax.f32 %v2811, 0.0
        %v3172 = vmax.f32 %v2814, 0.0
        %v3173 = vmax.f32 %v2819, 0.0
        %v3174 = vmax.f32 %v2822, 0.0
        %v3175 = vmax.f32 %v2827, 0.0
        %v3176 = vmax.f32 %v2830, 0.0
        %v3177 = vmax.f32 %v2835, 0.0
        %v3178 = vmax.f32 %v2838, 0.0
        %v3179 = vmax.f32 %v2843, 0.0
        %v3180 = vmax.f32 %v2846, 0.0
        %v3181 = vmax.f32 %v2851, 0.0
        %v3182 = vmax.f32 %v2854, 0.0
        %v3183 = vmax.f32 %v2859, 0.0
        %v3184 = vmax.f32 %v2862, 0.0
        %v3185 = vmax.f32 %v2867, 0.0
        %v3186 = vmax.f32 %v2870, 0.0
        %v3187 = vmax.f32 %v2875, 0.0
        %v3188 = vmax.f32 %v2878, 0.0
        %v3189 = vmax.f32 %v2883, 0.0
        %v3190 = vmax.f32 %v2886, 0.0
        %v3191 = vmax.f32 %v2891, 0.0
        %v3192 = vmax.f32 %v2894, 0.0
        %v3193 = vmax.f32 %v2899, 0.0
        %v3194 = vmax.f32 %v2902, 0.0
        %v3195 = vmax.f32 %v2907, 0.0
        %v3196 = vmax.f32 %v2910, 0.0
        %v3197 = vmax.f32 %v2915, 0.0
        %v3198 = vmax.f32 %v2918, 0.0
        %v3199 = vmax.f32 %v2923, 0.0
        %v3200 = vmax.f32 %v2926, 0.0
        %v3201 = vmax.f32 %v2931, 0.0
        %v3202 = vmax.f32 %v2934, 0.0
        %v3203 = vmax.f32 %v2939, 0.0
        %v3204 = vmax.f32 %v2942, 0.0
        %v3205 = vmax.f32 %v2947, 0.0
        %v3206 = vmax.f32 %v2950, 0.0
        %v3207 = vmax.f32 %v2955, 0.0
        %v3208 = vmax.f32 %v2958, 0.0
        %v3209 = vmax.f32 %v2963, 0.0
        %v3210 = vmax.f32 %v2966, 0.0
        %v3211 = vmax.f32 %v2971, 0.0
        %v3212 = vmax.f32 %v2974, 0.0
        %v3213 = vmax.f32 %v2979, 0.0
        %v3214 = vmax.f32 %v2982, 0.0
        %v3215 = vmax.f32 %v2987, 0.0
        %v3216 = vmax.f32 %v2990, 0.0
        %v3217 = vmax.f32 %v2995, 0.0
        %v3218 = vmax.f32 %v2998, 0.0
        %v3219 = vmax.f32 %v3003, 0.0
        %v3220 = vmax.f32 %v3006, 0.0
        %v3221 = vmax.f32 %v3011, 0.0
        %v3222 = vmax.f32 %v3014, 0.0
        %v3223 = vmax.f32 %v3019, 0.0
        %v3224 = vmax.f32 %v3022, 0.0
        %v3225 = vmax.f32 %v3027, 0.0
        %v3226 = vmax.f32 %v3030, 0.0
        %v3227 = vmax.f32 %v3035, 0.0
        %v3228 = vmax.f32 %v3038, 0.0
        %v3229 = vmax.f32 %v3043, 0.0
        %v3230 = vmax.f32 %v3046, 0.0
        %v3231 = vmax.f32 %v3051, 0.0
        %v3232 = vmax.f32 %v3054, 0.0
        %v3233 = vmax.f32 %v3059, 0.0
        %v3234 = vmax.f32 %v3062, 0.0
        %v3235 = vmax.f32 %v3067, 0.0
        %v3236 = vmax.f32 %v3070, 0.0
        %v3237 = vmax.f32 %v3075, 0.0
        %v3238 = vmax.f32 %v3078, 0.0
        %v3239 = vmax.f32 %v3083, 0.0
        %v3240 = vmax.f32 %v3086, 0.0
        %v3241 = vmax.f32 %v3091, 0.0
        %v3242 = vmax.f32 %v3094, 0.0
        %v3243 = vmax.f32 %v3099, 0.0
        %v3244 = vmax.f32 %v3102, 0.0
        %v3245 = vmax.f32 %v3107, 0.0
        %v3246 = vmax.f32 %v3110, 0.0
        %v3247 = vmax.f32 %v3115, 0.0
        %v3248 = vmax.f32 %v3118, 0.0
        %v3249 = vpack.c.bf16 %v3122, %v3121
        %v3250 = vpack.c.bf16 %v3124, %v3123
        %v3251 = vpack.c.bf16 %v3126, %v3125
        %v3252 = vpack.c.bf16 %v3128, %v3127
        %v3253 = vpack.c.bf16 %v3130, %v3129
        %v3254 = vpack.c.bf16 %v3132, %v3131
        %v3255 = vpack.c.bf16 %v3134, %v3133
        %v3256 = vpack.c.bf16 %v3136, %v3135
        %v3257 = vpack.c.bf16 %v3138, %v3137
        %v3258 = vpack.c.bf16 %v3140, %v3139
        %v3259 = vpack.c.bf16 %v3142, %v3141
        %v3260 = vpack.c.bf16 %v3144, %v3143
        %v3261 = vpack.c.bf16 %v3146, %v3145
        %v3262 = vpack.c.bf16 %v3148, %v3147
        %v3263 = vpack.c.bf16 %v3150, %v3149
        %v3264 = vpack.c.bf16 %v3152, %v3151
        %v3265 = vpack.c.bf16 %v3154, %v3153
        %v3266 = vpack.c.bf16 %v3156, %v3155
        %v3267 = vpack.c.bf16 %v3158, %v3157
        %v3268 = vpack.c.bf16 %v3160, %v3159
        %v3269 = vpack.c.bf16 %v3162, %v3161
        %v3270 = vpack.c.bf16 %v3164, %v3163
        %v3271 = vpack.c.bf16 %v3166, %v3165
        %v3272 = vpack.c.bf16 %v3168, %v3167
        %v3273 = vpack.c.bf16 %v3170, %v3169
        %v3274 = vpack.c.bf16 %v3172, %v3171
        %v3275 = vpack.c.bf16 %v3174, %v3173
        %v3276 = vpack.c.bf16 %v3176, %v3175
        %v3277 = vpack.c.bf16 %v3178, %v3177
        %v3278 = vpack.c.bf16 %v3180, %v3179
        %v3279 = vpack.c.bf16 %v3182, %v3181
        %v3280 = vpack.c.bf16 %v3184, %v3183
        %v3281 = vpack.c.bf16 %v3186, %v3185
        %v3282 = vpack.c.bf16 %v3188, %v3187
        %v3283 = vpack.c.bf16 %v3190, %v3189
        %v3284 = vpack.c.bf16 %v3192, %v3191
        %v3285 = vpack.c.bf16 %v3194, %v3193
        %v3286 = vpack.c.bf16 %v3196, %v3195
        %v3287 = vpack.c.bf16 %v3198, %v3197
        %v3288 = vpack.c.bf16 %v3200, %v3199
        %v3289 = vpack.c.bf16 %v3202, %v3201
        %v3290 = vpack.c.bf16 %v3204, %v3203
        %v3291 = vpack.c.bf16 %v3206, %v3205
        %v3292 = vpack.c.bf16 %v3208, %v3207
        %v3293 = vpack.c.bf16 %v3210, %v3209
        %v3294 = vpack.c.bf16 %v3212, %v3211
        %v3295 = vpack.c.bf16 %v3214, %v3213
        %v3296 = vpack.c.bf16 %v3216, %v3215
        %v3297 = vpack.c.bf16 %v3218, %v3217
        %v3298 = vpack.c.bf16 %v3220, %v3219
        %v3299 = vpack.c.bf16 %v3222, %v3221
        %v3300 = vpack.c.bf16 %v3224, %v3223
        %v3301 = vpack.c.bf16 %v3226, %v3225
        %v3302 = vpack.c.bf16 %v3228, %v3227
        %v3303 = vpack.c.bf16 %v3230, %v3229
        %v3304 = vpack.c.bf16 %v3232, %v3231
        %v3305 = vpack.c.bf16 %v3234, %v3233
        %v3306 = vpack.c.bf16 %v3236, %v3235
        %v3307 = vpack.c.bf16 %v3238, %v3237
        %v3308 = vpack.c.bf16 %v3240, %v3239
        %v3309 = vpack.c.bf16 %v3242, %v3241
        %v3310 = vpack.c.bf16 %v3244, %v3243
        %v3311 = vpack.c.bf16 %v3246, %v3245
        %v3312 = vpack.c.bf16 %v3248, %v3247
        %v3313 = vld [vmem:[#allocation8] sm:$0xff]
        %v3314 = vld [vmem:[#allocation8 + $0x8] sm:$0xff]
        %v3315 = vld [vmem:[#allocation8 + $0x10] sm:$0xff]
        %v3316 = vld [vmem:[#allocation8 + $0x18] sm:$0xff]
        %v3317 = vld [vmem:[#allocation8 + $0x20] sm:$0xff]
        %v3318 = vld [vmem:[#allocation8 + $0x28] sm:$0xff]
        %v3319 = vld [vmem:[#allocation8 + $0x30] sm:$0xff]
        %v3320 = vld [vmem:[#allocation8 + $0x38] sm:$0xff]
        %v3321 = vld [vmem:[#allocation8 + $0x40] sm:$0xff]
        %v3322 = vld [vmem:[#allocation8 + $0x48] sm:$0xff]
        %v3323 = vld [vmem:[#allocation8 + $0x50] sm:$0xff]
        %v3324 = vld [vmem:[#allocation8 + $0x58] sm:$0xff]
        %v3325 = vld [vmem:[#allocation8 + $0x60] sm:$0xff]
        %v3326 = vld [vmem:[#allocation8 + $0x68] sm:$0xff]
        %v3327 = vld [vmem:[#allocation8 + $0x70] sm:$0xff]
        %v3328 = vld [vmem:[#allocation8 + $0x78] sm:$0xff]
        %v3329 = vld [vmem:[#allocation8 + $0x80] sm:$0xff]
        %v3330 = vld [vmem:[#allocation8 + $0x88] sm:$0xff]
        %v3331 = vld [vmem:[#allocation8 + $0x90] sm:$0xff]
        %v3332 = vld [vmem:[#allocation8 + $0x98] sm:$0xff]
        %v3333 = vld [vmem:[#allocation8 + $0xa0] sm:$0xff]
        %v3334 = vld [vmem:[#allocation8 + $0xa8] sm:$0xff]
        %v3335 = vld [vmem:[#allocation8 + $0xb0] sm:$0xff]
        %v3336 = vld [vmem:[#allocation8 + $0xb8] sm:$0xff]
        %v3337 = vld [vmem:[#allocation8 + $0xc0] sm:$0xff]
        %v3338 = vld [vmem:[#allocation8 + $0xc8] sm:$0xff]
        %v3339 = vld [vmem:[#allocation8 + $0xd0] sm:$0xff]
        %v3340 = vld [vmem:[#allocation8 + $0xd8] sm:$0xff]
        %v3341 = vld [vmem:[#allocation8 + $0xe0] sm:$0xff]
        %v3342 = vld [vmem:[#allocation8 + $0xe8] sm:$0xff]
        %v3343 = vld [vmem:[#allocation8 + $0xf0] sm:$0xff]
        %v3344 = vld [vmem:[#allocation8 + $0xf8] sm:$0xff]
        %v3377 = vunpack.c.l.b16 %v3313
        %v3378 = vunpack.c.h.b16 %v3313
        %v3379 = vunpack.c.l.b16 %v3314
        %v3380 = vunpack.c.h.b16 %v3314
        %v3381 = vunpack.c.l.b16 %v3315
        %v3382 = vunpack.c.h.b16 %v3315
        %v3383 = vunpack.c.l.b16 %v3316
        %v3384 = vunpack.c.h.b16 %v3316
        %v3385 = vunpack.c.l.b16 %v3317
        %v3386 = vunpack.c.h.b16 %v3317
        %v3387 = vunpack.c.l.b16 %v3318
        %v3388 = vunpack.c.h.b16 %v3318
        %v3389 = vunpack.c.l.b16 %v3319
        %v3390 = vunpack.c.h.b16 %v3319
        %v3391 = vunpack.c.l.b16 %v3320
        %v3392 = vunpack.c.h.b16 %v3320
        %v3393 = vunpack.c.l.b16 %v3321
        %v3394 = vunpack.c.h.b16 %v3321
        %v3395 = vunpack.c.l.b16 %v3322
        %v3396 = vunpack.c.h.b16 %v3322
        %v3397 = vunpack.c.l.b16 %v3323
        %v3398 = vunpack.c.h.b16 %v3323
        %v3399 = vunpack.c.l.b16 %v3324
        %v3400 = vunpack.c.h.b16 %v3324
        %v3401 = vunpack.c.l.b16 %v3325
        %v3402 = vunpack.c.h.b16 %v3325
        %v3403 = vunpack.c.l.b16 %v3326
        %v3404 = vunpack.c.h.b16 %v3326
        %v3405 = vunpack.c.l.b16 %v3327
        %v3406 = vunpack.c.h.b16 %v3327
        %v3407 = vunpack.c.l.b16 %v3328
        %v3408 = vunpack.c.h.b16 %v3328
        %v3409 = vunpack.c.l.b16 %v3329
        %v3410 = vunpack.c.h.b16 %v3329
        %v3411 = vunpack.c.l.b16 %v3330
        %v3412 = vunpack.c.h.b16 %v3330
        %v3413 = vunpack.c.l.b16 %v3331
        %v3414 = vunpack.c.h.b16 %v3331
        %v3415 = vunpack.c.l.b16 %v3332
        %v3416 = vunpack.c.h.b16 %v3332
        %v3417 = vunpack.c.l.b16 %v3333
        %v3418 = vunpack.c.h.b16 %v3333
        %v3419 = vunpack.c.l.b16 %v3334
        %v3420 = vunpack.c.h.b16 %v3334
        %v3421 = vunpack.c.l.b16 %v3335
        %v3422 = vunpack.c.h.b16 %v3335
        %v3423 = vunpack.c.l.b16 %v3336
        %v3424 = vunpack.c.h.b16 %v3336
        %v3425 = vunpack.c.l.b16 %v3337
        %v3426 = vunpack.c.h.b16 %v3337
        %v3427 = vunpack.c.l.b16 %v3338
        %v3428 = vunpack.c.h.b16 %v3338
        %v3429 = vunpack.c.l.b16 %v3339
        %v3430 = vunpack.c.h.b16 %v3339
        %v3431 = vunpack.c.l.b16 %v3340
        %v3432 = vunpack.c.h.b16 %v3340
        %v3433 = vunpack.c.l.b16 %v3341
        %v3434 = vunpack.c.h.b16 %v3341
        %v3435 = vunpack.c.l.b16 %v3342
        %v3436 = vunpack.c.h.b16 %v3342
        %v3437 = vunpack.c.l.b16 %v3343
        %v3438 = vunpack.c.h.b16 %v3343
        %v3439 = vunpack.c.l.b16 %v3344
        %v3440 = vunpack.c.h.b16 %v3344
        %v3441 = vpack.c.b16 %v3381, %v3377
        %v3442 = vpack.c.b16 %v3382, %v3378
        %v3443 = vpack.c.b16 %v3383, %v3379
        %v3444 = vpack.c.b16 %v3384, %v3380
        %v3445 = vpack.c.b16 %v3389, %v3385
        %v3446 = vpack.c.b16 %v3390, %v3386
        %v3447 = vpack.c.b16 %v3391, %v3387
        %v3448 = vpack.c.b16 %v3392, %v3388
        %v3449 = vpack.c.b16 %v3397, %v3393
        %v3450 = vpack.c.b16 %v3398, %v3394
        %v3451 = vpack.c.b16 %v3399, %v3395
        %v3452 = vpack.c.b16 %v3400, %v3396
        %v3453 = vpack.c.b16 %v3405, %v3401
        %v3454 = vpack.c.b16 %v3406, %v3402
        %v3455 = vpack.c.b16 %v3407, %v3403
        %v3456 = vpack.c.b16 %v3408, %v3404
        %v3457 = vpack.c.b16 %v3413, %v3409
        %v3458 = vpack.c.b16 %v3414, %v3410
        %v3459 = vpack.c.b16 %v3415, %v3411
        %v3460 = vpack.c.b16 %v3416, %v3412
        %v3461 = vpack.c.b16 %v3421, %v3417
        %v3462 = vpack.c.b16 %v3422, %v3418
        %v3463 = vpack.c.b16 %v3423, %v3419
        %v3464 = vpack.c.b16 %v3424, %v3420
        %v3465 = vpack.c.b16 %v3429, %v3425
        %v3466 = vpack.c.b16 %v3430, %v3426
        %v3467 = vpack.c.b16 %v3431, %v3427
        %v3468 = vpack.c.b16 %v3432, %v3428
        %v3469 = vpack.c.b16 %v3437, %v3433
        %v3470 = vpack.c.b16 %v3438, %v3434
        %v3471 = vpack.c.b16 %v3439, %v3435
        %v3472 = vpack.c.b16 %v3440, %v3436
        %3505 = vmatprep.subr.bf16.mxu0 %v3470
        %3506 = vmatpush1.bf16.msra.mxu0 %v3469
        %3507 = vmatprep.subr.bf16.mxu0 %v3466
        %3508 = vmatpush1.bf16.msra.mxu0 %v3465
        %3509 = vmatprep.subr.bf16.mxu0 %v3462
        %3510 = vmatpush1.bf16.msra.mxu0 %v3461
        %3511 = vmatprep.subr.bf16.mxu0 %v3458
        %3512 = vmatpush1.bf16.msra.mxu0 %v3457
        %3513 = vmatprep.subr.bf16.mxu0 %v3454
        %3514 = vmatpush1.bf16.msra.mxu0 %v3453
        %3515 = vmatprep.subr.bf16.mxu0 %v3450
        %3516 = vmatpush1.bf16.msra.mxu0 %v3449
        %3517 = vmatprep.subr.bf16.mxu0 %v3446
        %3518 = vmatpush1.bf16.msra.mxu0 %v3445
        %3519 = vmatprep.subr.bf16.mxu0 %v3442
        %3520 = vmatpush1.bf16.msra.mxu0 %v3441
        %3521 = vmatprep.subr.bf16.mxu0 0
        %3522 = vmatpush2.bf16.msra.mxu0 0
        %3523 = vmatprep.subr.bf16.mxu0 0
        %3524 = vmatpush2.bf16.msra.mxu0 0
        %3525 = vmatprep.subr.bf16.mxu0 0
        %3526 = vmatpush2.bf16.msra.mxu0 0
        %3527 = vmatprep.subr.bf16.mxu0 0
        %3528 = vmatpush2.bf16.msra.mxu0 0
        %3529 = vmatprep.subr.bf16.mxu0 0
        %3530 = vmatpush2.bf16.msra.mxu0 0
        %3531 = vmatprep.subr.bf16.mxu0 0
        %3532 = vmatpush2.bf16.msra.mxu0 0
        %3533 = vmatprep.subr.bf16.mxu0 0
        %3534 = vmatpush2.bf16.msra.mxu0 0
        %3535 = vmatprep.subr.bf16.mxu0 0
        %3536 = vmatpush2.bf16.msra.mxu0 0
        %3537 = vmatprep.mubr.bf16.mxu0 0
        %3538 = vmatmul.mubr.bf16.gmra.mxu0 %v3249
        %v3539 = vpop.f32.mrf.mxu0
        %v3540 = vadd.f32 0.0, %v3539
        %v3541 = vpop.f32.mrf.mxu0
        %v3542 = vadd.f32 0.0, %v3541
        %v3543 = vpop.f32.mrf.mxu0
        %v3544 = vadd.f32 0.0, %v3543
        %v3545 = vpop.f32.mrf.mxu0
        %v3546 = vadd.f32 0.0, %v3545
        %3547 = vmatprep.mubr.bf16.mxu0 0
        %3548 = vmatmul.mubr.bf16.gmra.mxu0 %v3250
        %v3549 = vpop.f32.mrf.mxu0
        %v3550 = vadd.f32 0.0, %v3549
        %v3551 = vpop.f32.mrf.mxu0
        %v3552 = vadd.f32 0.0, %v3551
        %v3553 = vpop.f32.mrf.mxu0
        %v3554 = vadd.f32 0.0, %v3553
        %v3555 = vpop.f32.mrf.mxu0
        %v3556 = vadd.f32 0.0, %v3555
        %3557 = vmatprep.mubr.bf16.mxu0 0
        %3558 = vmatmul.mubr.bf16.gmra.mxu0 %v3251
        %v3559 = vpop.f32.mrf.mxu0
        %v3560 = vadd.f32 0.0, %v3559
        %v3561 = vpop.f32.mrf.mxu0
        %v3562 = vadd.f32 0.0, %v3561
        %v3563 = vpop.f32.mrf.mxu0
        %v3564 = vadd.f32 0.0, %v3563
        %v3565 = vpop.f32.mrf.mxu0
        %v3566 = vadd.f32 0.0, %v3565
        %3567 = vmatprep.mubr.bf16.mxu0 0
        %3568 = vmatmul.mubr.bf16.gmra.mxu0 %v3252
        %v3569 = vpop.f32.mrf.mxu0
        %v3570 = vadd.f32 0.0, %v3569
        %v3571 = vpop.f32.mrf.mxu0
        %v3572 = vadd.f32 0.0, %v3571
        %v3573 = vpop.f32.mrf.mxu0
        %v3574 = vadd.f32 0.0, %v3573
        %v3575 = vpop.f32.mrf.mxu0
        %v3576 = vadd.f32 0.0, %v3575
        %3577 = vmatprep.mubr.bf16.mxu0 0
        %3578 = vmatmul.mubr.bf16.gmra.mxu0 %v3253
        %v3579 = vpop.f32.mrf.mxu0
        %v3580 = vadd.f32 0.0, %v3579
        %v3581 = vpop.f32.mrf.mxu0
        %v3582 = vadd.f32 0.0, %v3581
        %v3583 = vpop.f32.mrf.mxu0
        %v3584 = vadd.f32 0.0, %v3583
        %v3585 = vpop.f32.mrf.mxu0
        %v3586 = vadd.f32 0.0, %v3585
        %3587 = vmatprep.mubr.bf16.mxu0 0
        %3588 = vmatmul.mubr.bf16.gmra.mxu0 %v3254
        %v3589 = vpop.f32.mrf.mxu0
        %v3590 = vadd.f32 0.0, %v3589
        %v3591 = vpop.f32.mrf.mxu0
        %v3592 = vadd.f32 0.0, %v3591
        %v3593 = vpop.f32.mrf.mxu0
        %v3594 = vadd.f32 0.0, %v3593
        %v3595 = vpop.f32.mrf.mxu0
        %v3596 = vadd.f32 0.0, %v3595
        %3597 = vmatprep.mubr.bf16.mxu0 0
        %3598 = vmatmul.mubr.bf16.gmra.mxu0 %v3255
        %v3599 = vpop.f32.mrf.mxu0
        %v3600 = vadd.f32 0.0, %v3599
        %v3601 = vpop.f32.mrf.mxu0
        %v3602 = vadd.f32 0.0, %v3601
        %v3603 = vpop.f32.mrf.mxu0
        %v3604 = vadd.f32 0.0, %v3603
        %v3605 = vpop.f32.mrf.mxu0
        %v3606 = vadd.f32 0.0, %v3605
        %3607 = vmatprep.mubr.bf16.mxu0 0
        %3608 = vmatmul.mubr.bf16.gmra.mxu0 %v3256
        %v3609 = vpop.f32.mrf.mxu0
        %v3610 = vadd.f32 0.0, %v3609
        %v3611 = vpop.f32.mrf.mxu0
        %v3612 = vadd.f32 0.0, %v3611
        %v3613 = vpop.f32.mrf.mxu0
        %v3614 = vadd.f32 0.0, %v3613
        %v3615 = vpop.f32.mrf.mxu0
        %v3616 = vadd.f32 0.0, %v3615
        %3617 = vmatprep.mubr.bf16.mxu0 0
        %3618 = vmatmul.mubr.bf16.gmra.mxu0 %v3257
        %v3619 = vpop.f32.mrf.mxu0
        %v3620 = vadd.f32 0.0, %v3619
        %v3621 = vpop.f32.mrf.mxu0
        %v3622 = vadd.f32 0.0, %v3621
        %v3623 = vpop.f32.mrf.mxu0
        %v3624 = vadd.f32 0.0, %v3623
        %v3625 = vpop.f32.mrf.mxu0
        %v3626 = vadd.f32 0.0, %v3625
        %3627 = vmatprep.mubr.bf16.mxu0 0
        %3628 = vmatmul.mubr.bf16.gmra.mxu0 %v3258
        %v3629 = vpop.f32.mrf.mxu0
        %v3630 = vadd.f32 0.0, %v3629
        %v3631 = vpop.f32.mrf.mxu0
        %v3632 = vadd.f32 0.0, %v3631
        %v3633 = vpop.f32.mrf.mxu0
        %v3634 = vadd.f32 0.0, %v3633
        %v3635 = vpop.f32.mrf.mxu0
        %v3636 = vadd.f32 0.0, %v3635
        %3637 = vmatprep.mubr.bf16.mxu0 0
        %3638 = vmatmul.mubr.bf16.gmra.mxu0 %v3259
        %v3639 = vpop.f32.mrf.mxu0
        %v3640 = vadd.f32 0.0, %v3639
        %v3641 = vpop.f32.mrf.mxu0
        %v3642 = vadd.f32 0.0, %v3641
        %v3643 = vpop.f32.mrf.mxu0
        %v3644 = vadd.f32 0.0, %v3643
        %v3645 = vpop.f32.mrf.mxu0
        %v3646 = vadd.f32 0.0, %v3645
        %3647 = vmatprep.mubr.bf16.mxu0 0
        %3648 = vmatmul.mubr.bf16.gmra.mxu0 %v3260
        %v3649 = vpop.f32.mrf.mxu0
        %v3650 = vadd.f32 0.0, %v3649
        %v3651 = vpop.f32.mrf.mxu0
        %v3652 = vadd.f32 0.0, %v3651
        %v3653 = vpop.f32.mrf.mxu0
        %v3654 = vadd.f32 0.0, %v3653
        %v3655 = vpop.f32.mrf.mxu0
        %v3656 = vadd.f32 0.0, %v3655
        %3657 = vmatprep.mubr.bf16.mxu0 0
        %3658 = vmatmul.mubr.bf16.gmra.mxu0 %v3261
        %v3659 = vpop.f32.mrf.mxu0
        %v3660 = vadd.f32 0.0, %v3659
        %v3661 = vpop.f32.mrf.mxu0
        %v3662 = vadd.f32 0.0, %v3661
        %v3663 = vpop.f32.mrf.mxu0
        %v3664 = vadd.f32 0.0, %v3663
        %v3665 = vpop.f32.mrf.mxu0
        %v3666 = vadd.f32 0.0, %v3665
        %3667 = vmatprep.mubr.bf16.mxu0 0
        %3668 = vmatmul.mubr.bf16.gmra.mxu0 %v3262
        %v3669 = vpop.f32.mrf.mxu0
        %v3670 = vadd.f32 0.0, %v3669
        %v3671 = vpop.f32.mrf.mxu0
        %v3672 = vadd.f32 0.0, %v3671
        %v3673 = vpop.f32.mrf.mxu0
        %v3674 = vadd.f32 0.0, %v3673
        %v3675 = vpop.f32.mrf.mxu0
        %v3676 = vadd.f32 0.0, %v3675
        %3677 = vmatprep.mubr.bf16.mxu0 0
        %3678 = vmatmul.mubr.bf16.gmra.mxu0 %v3263
        %v3679 = vpop.f32.mrf.mxu0
        %v3680 = vadd.f32 0.0, %v3679
        %v3681 = vpop.f32.mrf.mxu0
        %v3682 = vadd.f32 0.0, %v3681
        %v3683 = vpop.f32.mrf.mxu0
        %v3684 = vadd.f32 0.0, %v3683
        %v3685 = vpop.f32.mrf.mxu0
        %v3686 = vadd.f32 0.0, %v3685
        %3687 = vmatprep.mubr.bf16.mxu0 0
        %3688 = vmatmul.mubr.bf16.gmra.mxu0 %v3264
        %v3689 = vpop.f32.mrf.mxu0
        %v3690 = vadd.f32 0.0, %v3689
        %v3691 = vpop.f32.mrf.mxu0
        %v3692 = vadd.f32 0.0, %v3691
        %v3693 = vpop.f32.mrf.mxu0
        %v3694 = vadd.f32 0.0, %v3693
        %v3695 = vpop.f32.mrf.mxu0
        %v3696 = vadd.f32 0.0, %v3695
        %3697 = vmatprep.mubr.bf16.mxu0 0
        %3698 = vmatmul.mubr.bf16.gmra.mxu0 %v3265
        %v3699 = vpop.f32.mrf.mxu0
        %v3700 = vadd.f32 0.0, %v3699
        %v3701 = vpop.f32.mrf.mxu0
        %v3702 = vadd.f32 0.0, %v3701
        %v3703 = vpop.f32.mrf.mxu0
        %v3704 = vadd.f32 0.0, %v3703
        %v3705 = vpop.f32.mrf.mxu0
        %v3706 = vadd.f32 0.0, %v3705
        %3707 = vmatprep.mubr.bf16.mxu0 0
        %3708 = vmatmul.mubr.bf16.gmra.mxu0 %v3266
        %v3709 = vpop.f32.mrf.mxu0
        %v3710 = vadd.f32 0.0, %v3709
        %v3711 = vpop.f32.mrf.mxu0
        %v3712 = vadd.f32 0.0, %v3711
        %v3713 = vpop.f32.mrf.mxu0
        %v3714 = vadd.f32 0.0, %v3713
        %v3715 = vpop.f32.mrf.mxu0
        %v3716 = vadd.f32 0.0, %v3715
        %3717 = vmatprep.mubr.bf16.mxu0 0
        %3718 = vmatmul.mubr.bf16.gmra.mxu0 %v3267
        %v3719 = vpop.f32.mrf.mxu0
        %v3720 = vadd.f32 0.0, %v3719
        %v3721 = vpop.f32.mrf.mxu0
        %v3722 = vadd.f32 0.0, %v3721
        %v3723 = vpop.f32.mrf.mxu0
        %v3724 = vadd.f32 0.0, %v3723
        %v3725 = vpop.f32.mrf.mxu0
        %v3726 = vadd.f32 0.0, %v3725
        %3727 = vmatprep.mubr.bf16.mxu0 0
        %3728 = vmatmul.mubr.bf16.gmra.mxu0 %v3268
        %v3729 = vpop.f32.mrf.mxu0
        %v3730 = vadd.f32 0.0, %v3729
        %v3731 = vpop.f32.mrf.mxu0
        %v3732 = vadd.f32 0.0, %v3731
        %v3733 = vpop.f32.mrf.mxu0
        %v3734 = vadd.f32 0.0, %v3733
        %v3735 = vpop.f32.mrf.mxu0
        %v3736 = vadd.f32 0.0, %v3735
        %3737 = vmatprep.mubr.bf16.mxu0 0
        %3738 = vmatmul.mubr.bf16.gmra.mxu0 %v3269
        %v3739 = vpop.f32.mrf.mxu0
        %v3740 = vadd.f32 0.0, %v3739
        %v3741 = vpop.f32.mrf.mxu0
        %v3742 = vadd.f32 0.0, %v3741
        %v3743 = vpop.f32.mrf.mxu0
        %v3744 = vadd.f32 0.0, %v3743
        %v3745 = vpop.f32.mrf.mxu0
        %v3746 = vadd.f32 0.0, %v3745
        %3747 = vmatprep.mubr.bf16.mxu0 0
        %3748 = vmatmul.mubr.bf16.gmra.mxu0 %v3270
        %v3749 = vpop.f32.mrf.mxu0
        %v3750 = vadd.f32 0.0, %v3749
        %v3751 = vpop.f32.mrf.mxu0
        %v3752 = vadd.f32 0.0, %v3751
        %v3753 = vpop.f32.mrf.mxu0
        %v3754 = vadd.f32 0.0, %v3753
        %v3755 = vpop.f32.mrf.mxu0
        %v3756 = vadd.f32 0.0, %v3755
        %3757 = vmatprep.mubr.bf16.mxu0 0
        %3758 = vmatmul.mubr.bf16.gmra.mxu0 %v3271
        %v3759 = vpop.f32.mrf.mxu0
        %v3760 = vadd.f32 0.0, %v3759
        %v3761 = vpop.f32.mrf.mxu0
        %v3762 = vadd.f32 0.0, %v3761
        %v3763 = vpop.f32.mrf.mxu0
        %v3764 = vadd.f32 0.0, %v3763
        %v3765 = vpop.f32.mrf.mxu0
        %v3766 = vadd.f32 0.0, %v3765
        %3767 = vmatprep.mubr.bf16.mxu0 0
        %3768 = vmatmul.mubr.bf16.gmra.mxu0 %v3272
        %v3769 = vpop.f32.mrf.mxu0
        %v3770 = vadd.f32 0.0, %v3769
        %v3771 = vpop.f32.mrf.mxu0
        %v3772 = vadd.f32 0.0, %v3771
        %v3773 = vpop.f32.mrf.mxu0
        %v3774 = vadd.f32 0.0, %v3773
        %v3775 = vpop.f32.mrf.mxu0
        %v3776 = vadd.f32 0.0, %v3775
        %3777 = vmatprep.mubr.bf16.mxu0 0
        %3778 = vmatmul.mubr.bf16.gmra.mxu0 %v3273
        %v3779 = vpop.f32.mrf.mxu0
        %v3780 = vadd.f32 0.0, %v3779
        %v3781 = vpop.f32.mrf.mxu0
        %v3782 = vadd.f32 0.0, %v3781
        %v3783 = vpop.f32.mrf.mxu0
        %v3784 = vadd.f32 0.0, %v3783
        %v3785 = vpop.f32.mrf.mxu0
        %v3786 = vadd.f32 0.0, %v3785
        %3787 = vmatprep.mubr.bf16.mxu0 0
        %3788 = vmatmul.mubr.bf16.gmra.mxu0 %v3274
        %v3789 = vpop.f32.mrf.mxu0
        %v3790 = vadd.f32 0.0, %v3789
        %v3791 = vpop.f32.mrf.mxu0
        %v3792 = vadd.f32 0.0, %v3791
        %v3793 = vpop.f32.mrf.mxu0
        %v3794 = vadd.f32 0.0, %v3793
        %v3795 = vpop.f32.mrf.mxu0
        %v3796 = vadd.f32 0.0, %v3795
        %3797 = vmatprep.mubr.bf16.mxu0 0
        %3798 = vmatmul.mubr.bf16.gmra.mxu0 %v3275
        %v3799 = vpop.f32.mrf.mxu0
        %v3800 = vadd.f32 0.0, %v3799
        %v3801 = vpop.f32.mrf.mxu0
        %v3802 = vadd.f32 0.0, %v3801
        %v3803 = vpop.f32.mrf.mxu0
        %v3804 = vadd.f32 0.0, %v3803
        %v3805 = vpop.f32.mrf.mxu0
        %v3806 = vadd.f32 0.0, %v3805
        %3807 = vmatprep.mubr.bf16.mxu0 0
        %3808 = vmatmul.mubr.bf16.gmra.mxu0 %v3276
        %v3809 = vpop.f32.mrf.mxu0
        %v3810 = vadd.f32 0.0, %v3809
        %v3811 = vpop.f32.mrf.mxu0
        %v3812 = vadd.f32 0.0, %v3811
        %v3813 = vpop.f32.mrf.mxu0
        %v3814 = vadd.f32 0.0, %v3813
        %v3815 = vpop.f32.mrf.mxu0
        %v3816 = vadd.f32 0.0, %v3815
        %3817 = vmatprep.mubr.bf16.mxu0 0
        %3818 = vmatmul.mubr.bf16.gmra.mxu0 %v3277
        %v3819 = vpop.f32.mrf.mxu0
        %v3820 = vadd.f32 0.0, %v3819
        %v3821 = vpop.f32.mrf.mxu0
        %v3822 = vadd.f32 0.0, %v3821
        %v3823 = vpop.f32.mrf.mxu0
        %v3824 = vadd.f32 0.0, %v3823
        %v3825 = vpop.f32.mrf.mxu0
        %v3826 = vadd.f32 0.0, %v3825
        %3827 = vmatprep.mubr.bf16.mxu0 0
        %3828 = vmatmul.mubr.bf16.gmra.mxu0 %v3278
        %v3829 = vpop.f32.mrf.mxu0
        %v3830 = vadd.f32 0.0, %v3829
        %v3831 = vpop.f32.mrf.mxu0
        %v3832 = vadd.f32 0.0, %v3831
        %v3833 = vpop.f32.mrf.mxu0
        %v3834 = vadd.f32 0.0, %v3833
        %v3835 = vpop.f32.mrf.mxu0
        %v3836 = vadd.f32 0.0, %v3835
        %3837 = vmatprep.mubr.bf16.mxu0 0
        %3838 = vmatmul.mubr.bf16.gmra.mxu0 %v3279
        %v3839 = vpop.f32.mrf.mxu0
        %v3840 = vadd.f32 0.0, %v3839
        %v3841 = vpop.f32.mrf.mxu0
        %v3842 = vadd.f32 0.0, %v3841
        %v3843 = vpop.f32.mrf.mxu0
        %v3844 = vadd.f32 0.0, %v3843
        %v3845 = vpop.f32.mrf.mxu0
        %v3846 = vadd.f32 0.0, %v3845
        %3847 = vmatprep.mubr.bf16.mxu0 0
        %3848 = vmatmul.mubr.bf16.gmra.mxu0 %v3280
        %v3849 = vpop.f32.mrf.mxu0
        %v3850 = vadd.f32 0.0, %v3849
        %v3851 = vpop.f32.mrf.mxu0
        %v3852 = vadd.f32 0.0, %v3851
        %v3853 = vpop.f32.mrf.mxu0
        %v3854 = vadd.f32 0.0, %v3853
        %v3855 = vpop.f32.mrf.mxu0
        %v3856 = vadd.f32 0.0, %v3855
        %3857 = vmatprep.mubr.bf16.mxu0 0
        %3858 = vmatmul.mubr.bf16.gmra.mxu0 %v3281
        %v3859 = vpop.f32.mrf.mxu0
        %v3860 = vadd.f32 0.0, %v3859
        %v3861 = vpop.f32.mrf.mxu0
        %v3862 = vadd.f32 0.0, %v3861
        %v3863 = vpop.f32.mrf.mxu0
        %v3864 = vadd.f32 0.0, %v3863
        %v3865 = vpop.f32.mrf.mxu0
        %v3866 = vadd.f32 0.0, %v3865
        %3867 = vmatprep.mubr.bf16.mxu0 0
        %3868 = vmatmul.mubr.bf16.gmra.mxu0 %v3282
        %v3869 = vpop.f32.mrf.mxu0
        %v3870 = vadd.f32 0.0, %v3869
        %v3871 = vpop.f32.mrf.mxu0
        %v3872 = vadd.f32 0.0, %v3871
        %v3873 = vpop.f32.mrf.mxu0
        %v3874 = vadd.f32 0.0, %v3873
        %v3875 = vpop.f32.mrf.mxu0
        %v3876 = vadd.f32 0.0, %v3875
        %3877 = vmatprep.mubr.bf16.mxu0 0
        %3878 = vmatmul.mubr.bf16.gmra.mxu0 %v3283
        %v3879 = vpop.f32.mrf.mxu0
        %v3880 = vadd.f32 0.0, %v3879
        %v3881 = vpop.f32.mrf.mxu0
        %v3882 = vadd.f32 0.0, %v3881
        %v3883 = vpop.f32.mrf.mxu0
        %v3884 = vadd.f32 0.0, %v3883
        %v3885 = vpop.f32.mrf.mxu0
        %v3886 = vadd.f32 0.0, %v3885
        %3887 = vmatprep.mubr.bf16.mxu0 0
        %3888 = vmatmul.mubr.bf16.gmra.mxu0 %v3284
        %v3889 = vpop.f32.mrf.mxu0
        %v3890 = vadd.f32 0.0, %v3889
        %v3891 = vpop.f32.mrf.mxu0
        %v3892 = vadd.f32 0.0, %v3891
        %v3893 = vpop.f32.mrf.mxu0
        %v3894 = vadd.f32 0.0, %v3893
        %v3895 = vpop.f32.mrf.mxu0
        %v3896 = vadd.f32 0.0, %v3895
        %3897 = vmatprep.mubr.bf16.mxu0 0
        %3898 = vmatmul.mubr.bf16.gmra.mxu0 %v3285
        %v3899 = vpop.f32.mrf.mxu0
        %v3900 = vadd.f32 0.0, %v3899
        %v3901 = vpop.f32.mrf.mxu0
        %v3902 = vadd.f32 0.0, %v3901
        %v3903 = vpop.f32.mrf.mxu0
        %v3904 = vadd.f32 0.0, %v3903
        %v3905 = vpop.f32.mrf.mxu0
        %v3906 = vadd.f32 0.0, %v3905
        %3907 = vmatprep.mubr.bf16.mxu0 0
        %3908 = vmatmul.mubr.bf16.gmra.mxu0 %v3286
        %v3909 = vpop.f32.mrf.mxu0
        %v3910 = vadd.f32 0.0, %v3909
        %v3911 = vpop.f32.mrf.mxu0
        %v3912 = vadd.f32 0.0, %v3911
        %v3913 = vpop.f32.mrf.mxu0
        %v3914 = vadd.f32 0.0, %v3913
        %v3915 = vpop.f32.mrf.mxu0
        %v3916 = vadd.f32 0.0, %v3915
        %3917 = vmatprep.mubr.bf16.mxu0 0
        %3918 = vmatmul.mubr.bf16.gmra.mxu0 %v3287
        %v3919 = vpop.f32.mrf.mxu0
        %v3920 = vadd.f32 0.0, %v3919
        %v3921 = vpop.f32.mrf.mxu0
        %v3922 = vadd.f32 0.0, %v3921
        %v3923 = vpop.f32.mrf.mxu0
        %v3924 = vadd.f32 0.0, %v3923
        %v3925 = vpop.f32.mrf.mxu0
        %v3926 = vadd.f32 0.0, %v3925
        %3927 = vmatprep.mubr.bf16.mxu0 0
        %3928 = vmatmul.mubr.bf16.gmra.mxu0 %v3288
        %v3929 = vpop.f32.mrf.mxu0
        %v3930 = vadd.f32 0.0, %v3929
        %v3931 = vpop.f32.mrf.mxu0
        %v3932 = vadd.f32 0.0, %v3931
        %v3933 = vpop.f32.mrf.mxu0
        %v3934 = vadd.f32 0.0, %v3933
        %v3935 = vpop.f32.mrf.mxu0
        %v3936 = vadd.f32 0.0, %v3935
        %3937 = vmatprep.mubr.bf16.mxu0 0
        %3938 = vmatmul.mubr.bf16.gmra.mxu0 %v3289
        %v3939 = vpop.f32.mrf.mxu0
        %v3940 = vadd.f32 0.0, %v3939
        %v3941 = vpop.f32.mrf.mxu0
        %v3942 = vadd.f32 0.0, %v3941
        %v3943 = vpop.f32.mrf.mxu0
        %v3944 = vadd.f32 0.0, %v3943
        %v3945 = vpop.f32.mrf.mxu0
        %v3946 = vadd.f32 0.0, %v3945
        %3947 = vmatprep.mubr.bf16.mxu0 0
        %3948 = vmatmul.mubr.bf16.gmra.mxu0 %v3290
        %v3949 = vpop.f32.mrf.mxu0
        %v3950 = vadd.f32 0.0, %v3949
        %v3951 = vpop.f32.mrf.mxu0
        %v3952 = vadd.f32 0.0, %v3951
        %v3953 = vpop.f32.mrf.mxu0
        %v3954 = vadd.f32 0.0, %v3953
        %v3955 = vpop.f32.mrf.mxu0
        %v3956 = vadd.f32 0.0, %v3955
        %3957 = vmatprep.mubr.bf16.mxu0 0
        %3958 = vmatmul.mubr.bf16.gmra.mxu0 %v3291
        %v3959 = vpop.f32.mrf.mxu0
        %v3960 = vadd.f32 0.0, %v3959
        %v3961 = vpop.f32.mrf.mxu0
        %v3962 = vadd.f32 0.0, %v3961
        %v3963 = vpop.f32.mrf.mxu0
        %v3964 = vadd.f32 0.0, %v3963
        %v3965 = vpop.f32.mrf.mxu0
        %v3966 = vadd.f32 0.0, %v3965
        %3967 = vmatprep.mubr.bf16.mxu0 0
        %3968 = vmatmul.mubr.bf16.gmra.mxu0 %v3292
        %v3969 = vpop.f32.mrf.mxu0
        %v3970 = vadd.f32 0.0, %v3969
        %v3971 = vpop.f32.mrf.mxu0
        %v3972 = vadd.f32 0.0, %v3971
        %v3973 = vpop.f32.mrf.mxu0
        %v3974 = vadd.f32 0.0, %v3973
        %v3975 = vpop.f32.mrf.mxu0
        %v3976 = vadd.f32 0.0, %v3975
        %3977 = vmatprep.mubr.bf16.mxu0 0
        %3978 = vmatmul.mubr.bf16.gmra.mxu0 %v3293
        %v3979 = vpop.f32.mrf.mxu0
        %v3980 = vadd.f32 0.0, %v3979
        %v3981 = vpop.f32.mrf.mxu0
        %v3982 = vadd.f32 0.0, %v3981
        %v3983 = vpop.f32.mrf.mxu0
        %v3984 = vadd.f32 0.0, %v3983
        %v3985 = vpop.f32.mrf.mxu0
        %v3986 = vadd.f32 0.0, %v3985
        %3987 = vmatprep.mubr.bf16.mxu0 0
        %3988 = vmatmul.mubr.bf16.gmra.mxu0 %v3294
        %v3989 = vpop.f32.mrf.mxu0
        %v3990 = vadd.f32 0.0, %v3989
        %v3991 = vpop.f32.mrf.mxu0
        %v3992 = vadd.f32 0.0, %v3991
        %v3993 = vpop.f32.mrf.mxu0
        %v3994 = vadd.f32 0.0, %v3993
        %v3995 = vpop.f32.mrf.mxu0
        %v3996 = vadd.f32 0.0, %v3995
        %3997 = vmatprep.mubr.bf16.mxu0 0
        %3998 = vmatmul.mubr.bf16.gmra.mxu0 %v3295
        %v3999 = vpop.f32.mrf.mxu0
        %v4000 = vadd.f32 0.0, %v3999
        %v4001 = vpop.f32.mrf.mxu0
        %v4002 = vadd.f32 0.0, %v4001
        %v4003 = vpop.f32.mrf.mxu0
        %v4004 = vadd.f32 0.0, %v4003
        %v4005 = vpop.f32.mrf.mxu0
        %v4006 = vadd.f32 0.0, %v4005
        %4007 = vmatprep.mubr.bf16.mxu0 0
        %4008 = vmatmul.mubr.bf16.gmra.mxu0 %v3296
        %v4009 = vpop.f32.mrf.mxu0
        %v4010 = vadd.f32 0.0, %v4009
        %v4011 = vpop.f32.mrf.mxu0
        %v4012 = vadd.f32 0.0, %v4011
        %v4013 = vpop.f32.mrf.mxu0
        %v4014 = vadd.f32 0.0, %v4013
        %v4015 = vpop.f32.mrf.mxu0
        %v4016 = vadd.f32 0.0, %v4015
        %4017 = vmatprep.mubr.bf16.mxu0 0
        %4018 = vmatmul.mubr.bf16.gmra.mxu0 %v3297
        %v4019 = vpop.f32.mrf.mxu0
        %v4020 = vadd.f32 0.0, %v4019
        %v4021 = vpop.f32.mrf.mxu0
        %v4022 = vadd.f32 0.0, %v4021
        %v4023 = vpop.f32.mrf.mxu0
        %v4024 = vadd.f32 0.0, %v4023
        %v4025 = vpop.f32.mrf.mxu0
        %v4026 = vadd.f32 0.0, %v4025
        %4027 = vmatprep.mubr.bf16.mxu0 0
        %4028 = vmatmul.mubr.bf16.gmra.mxu0 %v3298
        %v4029 = vpop.f32.mrf.mxu0
        %v4030 = vadd.f32 0.0, %v4029
        %v4031 = vpop.f32.mrf.mxu0
        %v4032 = vadd.f32 0.0, %v4031
        %v4033 = vpop.f32.mrf.mxu0
        %v4034 = vadd.f32 0.0, %v4033
        %v4035 = vpop.f32.mrf.mxu0
        %v4036 = vadd.f32 0.0, %v4035
        %4037 = vmatprep.mubr.bf16.mxu0 0
        %4038 = vmatmul.mubr.bf16.gmra.mxu0 %v3299
        %v4039 = vpop.f32.mrf.mxu0
        %v4040 = vadd.f32 0.0, %v4039
        %v4041 = vpop.f32.mrf.mxu0
        %v4042 = vadd.f32 0.0, %v4041
        %v4043 = vpop.f32.mrf.mxu0
        %v4044 = vadd.f32 0.0, %v4043
        %v4045 = vpop.f32.mrf.mxu0
        %v4046 = vadd.f32 0.0, %v4045
        %4047 = vmatprep.mubr.bf16.mxu0 0
        %4048 = vmatmul.mubr.bf16.gmra.mxu0 %v3300
        %v4049 = vpop.f32.mrf.mxu0
        %v4050 = vadd.f32 0.0, %v4049
        %v4051 = vpop.f32.mrf.mxu0
        %v4052 = vadd.f32 0.0, %v4051
        %v4053 = vpop.f32.mrf.mxu0
        %v4054 = vadd.f32 0.0, %v4053
        %v4055 = vpop.f32.mrf.mxu0
        %v4056 = vadd.f32 0.0, %v4055
        %4057 = vmatprep.mubr.bf16.mxu0 0
        %4058 = vmatmul.mubr.bf16.gmra.mxu0 %v3301
        %v4059 = vpop.f32.mrf.mxu0
        %v4060 = vadd.f32 0.0, %v4059
        %v4061 = vpop.f32.mrf.mxu0
        %v4062 = vadd.f32 0.0, %v4061
        %v4063 = vpop.f32.mrf.mxu0
        %v4064 = vadd.f32 0.0, %v4063
        %v4065 = vpop.f32.mrf.mxu0
        %v4066 = vadd.f32 0.0, %v4065
        %4067 = vmatprep.mubr.bf16.mxu0 0
        %4068 = vmatmul.mubr.bf16.gmra.mxu0 %v3302
        %v4069 = vpop.f32.mrf.mxu0
        %v4070 = vadd.f32 0.0, %v4069
        %v4071 = vpop.f32.mrf.mxu0
        %v4072 = vadd.f32 0.0, %v4071
        %v4073 = vpop.f32.mrf.mxu0
        %v4074 = vadd.f32 0.0, %v4073
        %v4075 = vpop.f32.mrf.mxu0
        %v4076 = vadd.f32 0.0, %v4075
        %4077 = vmatprep.mubr.bf16.mxu0 0
        %4078 = vmatmul.mubr.bf16.gmra.mxu0 %v3303
        %v4079 = vpop.f32.mrf.mxu0
        %v4080 = vadd.f32 0.0, %v4079
        %v4081 = vpop.f32.mrf.mxu0
        %v4082 = vadd.f32 0.0, %v4081
        %v4083 = vpop.f32.mrf.mxu0
        %v4084 = vadd.f32 0.0, %v4083
        %v4085 = vpop.f32.mrf.mxu0
        %v4086 = vadd.f32 0.0, %v4085
        %4087 = vmatprep.mubr.bf16.mxu0 0
        %4088 = vmatmul.mubr.bf16.gmra.mxu0 %v3304
        %v4089 = vpop.f32.mrf.mxu0
        %v4090 = vadd.f32 0.0, %v4089
        %v4091 = vpop.f32.mrf.mxu0
        %v4092 = vadd.f32 0.0, %v4091
        %v4093 = vpop.f32.mrf.mxu0
        %v4094 = vadd.f32 0.0, %v4093
        %v4095 = vpop.f32.mrf.mxu0
        %v4096 = vadd.f32 0.0, %v4095
        %4097 = vmatprep.mubr.bf16.mxu0 0
        %4098 = vmatmul.mubr.bf16.gmra.mxu0 %v3305
        %v4099 = vpop.f32.mrf.mxu0
        %v4100 = vadd.f32 0.0, %v4099
        %v4101 = vpop.f32.mrf.mxu0
        %v4102 = vadd.f32 0.0, %v4101
        %v4103 = vpop.f32.mrf.mxu0
        %v4104 = vadd.f32 0.0, %v4103
        %v4105 = vpop.f32.mrf.mxu0
        %v4106 = vadd.f32 0.0, %v4105
        %4107 = vmatprep.mubr.bf16.mxu0 0
        %4108 = vmatmul.mubr.bf16.gmra.mxu0 %v3306
        %v4109 = vpop.f32.mrf.mxu0
        %v4110 = vadd.f32 0.0, %v4109
        %v4111 = vpop.f32.mrf.mxu0
        %v4112 = vadd.f32 0.0, %v4111
        %v4113 = vpop.f32.mrf.mxu0
        %v4114 = vadd.f32 0.0, %v4113
        %v4115 = vpop.f32.mrf.mxu0
        %v4116 = vadd.f32 0.0, %v4115
        %4117 = vmatprep.mubr.bf16.mxu0 0
        %4118 = vmatmul.mubr.bf16.gmra.mxu0 %v3307
        %v4119 = vpop.f32.mrf.mxu0
        %v4120 = vadd.f32 0.0, %v4119
        %v4121 = vpop.f32.mrf.mxu0
        %v4122 = vadd.f32 0.0, %v4121
        %v4123 = vpop.f32.mrf.mxu0
        %v4124 = vadd.f32 0.0, %v4123
        %v4125 = vpop.f32.mrf.mxu0
        %v4126 = vadd.f32 0.0, %v4125
        %4127 = vmatprep.mubr.bf16.mxu0 0
        %4128 = vmatmul.mubr.bf16.gmra.mxu0 %v3308
        %v4129 = vpop.f32.mrf.mxu0
        %v4130 = vadd.f32 0.0, %v4129
        %v4131 = vpop.f32.mrf.mxu0
        %v4132 = vadd.f32 0.0, %v4131
        %v4133 = vpop.f32.mrf.mxu0
        %v4134 = vadd.f32 0.0, %v4133
        %v4135 = vpop.f32.mrf.mxu0
        %v4136 = vadd.f32 0.0, %v4135
        %4137 = vmatprep.mubr.bf16.mxu0 0
        %4138 = vmatmul.mubr.bf16.gmra.mxu0 %v3309
        %v4139 = vpop.f32.mrf.mxu0
        %v4140 = vadd.f32 0.0, %v4139
        %v4141 = vpop.f32.mrf.mxu0
        %v4142 = vadd.f32 0.0, %v4141
        %v4143 = vpop.f32.mrf.mxu0
        %v4144 = vadd.f32 0.0, %v4143
        %v4145 = vpop.f32.mrf.mxu0
        %v4146 = vadd.f32 0.0, %v4145
        %4147 = vmatprep.mubr.bf16.mxu0 0
        %4148 = vmatmul.mubr.bf16.gmra.mxu0 %v3310
        %v4149 = vpop.f32.mrf.mxu0
        %v4150 = vadd.f32 0.0, %v4149
        %v4151 = vpop.f32.mrf.mxu0
        %v4152 = vadd.f32 0.0, %v4151
        %v4153 = vpop.f32.mrf.mxu0
        %v4154 = vadd.f32 0.0, %v4153
        %v4155 = vpop.f32.mrf.mxu0
        %v4156 = vadd.f32 0.0, %v4155
        %4157 = vmatprep.mubr.bf16.mxu0 0
        %4158 = vmatmul.mubr.bf16.gmra.mxu0 %v3311
        %v4159 = vpop.f32.mrf.mxu0
        %v4160 = vadd.f32 0.0, %v4159
        %v4161 = vpop.f32.mrf.mxu0
        %v4162 = vadd.f32 0.0, %v4161
        %v4163 = vpop.f32.mrf.mxu0
        %v4164 = vadd.f32 0.0, %v4163
        %v4165 = vpop.f32.mrf.mxu0
        %v4166 = vadd.f32 0.0, %v4165
        %4167 = vmatprep.mubr.bf16.mxu0 0
        %4168 = vmatmul.mubr.bf16.gmra.mxu0 %v3312
        %v4169 = vpop.f32.mrf.mxu0
        %v4170 = vadd.f32 0.0, %v4169
        %v4171 = vpop.f32.mrf.mxu0
        %v4172 = vadd.f32 0.0, %v4171
        %v4173 = vpop.f32.mrf.mxu0
        %v4174 = vadd.f32 0.0, %v4173
        %v4175 = vpop.f32.mrf.mxu0
        %v4176 = vadd.f32 0.0, %v4175
        %4177 = vdwg.mxu0
        %4178 = vmatprep.subr.bf16.mxu0 %v3472
        %4179 = vmatpush1.bf16.msra.mxu0 %v3471
        %4180 = vmatprep.subr.bf16.mxu0 %v3468
        %4181 = vmatpush1.bf16.msra.mxu0 %v3467
        %4182 = vmatprep.subr.bf16.mxu0 %v3464
        %4183 = vmatpush1.bf16.msra.mxu0 %v3463
        %4184 = vmatprep.subr.bf16.mxu0 %v3460
        %4185 = vmatpush1.bf16.msra.mxu0 %v3459
        %4186 = vmatprep.subr.bf16.mxu0 %v3456
        %4187 = vmatpush1.bf16.msra.mxu0 %v3455
        %4188 = vmatprep.subr.bf16.mxu0 %v3452
        %4189 = vmatpush1.bf16.msra.mxu0 %v3451
        %4190 = vmatprep.subr.bf16.mxu0 %v3448
        %4191 = vmatpush1.bf16.msra.mxu0 %v3447
        %4192 = vmatprep.subr.bf16.mxu0 %v3444
        %4193 = vmatpush1.bf16.msra.mxu0 %v3443
        %4194 = vmatprep.subr.bf16.mxu0 0
        %4195 = vmatpush2.bf16.msra.mxu0 0
        %4196 = vmatprep.subr.bf16.mxu0 0
        %4197 = vmatpush2.bf16.msra.mxu0 0
        %4198 = vmatprep.subr.bf16.mxu0 0
        %4199 = vmatpush2.bf16.msra.mxu0 0
        %4200 = vmatprep.subr.bf16.mxu0 0
        %4201 = vmatpush2.bf16.msra.mxu0 0
        %4202 = vmatprep.subr.bf16.mxu0 0
        %4203 = vmatpush2.bf16.msra.mxu0 0
        %4204 = vmatprep.subr.bf16.mxu0 0
        %4205 = vmatpush2.bf16.msra.mxu0 0
        %4206 = vmatprep.subr.bf16.mxu0 0
        %4207 = vmatpush2.bf16.msra.mxu0 0
        %4208 = vmatprep.subr.bf16.mxu0 0
        %4209 = vmatpush2.bf16.msra.mxu0 0
        %4210 = vmatprep.mubr.bf16.mxu0 0
        %4211 = vmatmul.mubr.bf16.gmra.mxu0 %v3249
        %v4212 = vpop.f32.mrf.mxu0
        %v4213 = vadd.f32 0.0, %v4212
        %v4214 = vpop.f32.mrf.mxu0
        %v4215 = vadd.f32 0.0, %v4214
        %v4216 = vpop.f32.mrf.mxu0
        %v4217 = vadd.f32 0.0, %v4216
        %v4218 = vpop.f32.mrf.mxu0
        %v4219 = vadd.f32 0.0, %v4218
        %4220 = vmatprep.mubr.bf16.mxu0 0
        %4221 = vmatmul.mubr.bf16.gmra.mxu0 %v3250
        %v4222 = vpop.f32.mrf.mxu0
        %v4223 = vadd.f32 0.0, %v4222
        %v4224 = vpop.f32.mrf.mxu0
        %v4225 = vadd.f32 0.0, %v4224
        %v4226 = vpop.f32.mrf.mxu0
        %v4227 = vadd.f32 0.0, %v4226
        %v4228 = vpop.f32.mrf.mxu0
        %v4229 = vadd.f32 0.0, %v4228
        %4230 = vmatprep.mubr.bf16.mxu0 0
        %4231 = vmatmul.mubr.bf16.gmra.mxu0 %v3251
        %v4232 = vpop.f32.mrf.mxu0
        %v4233 = vadd.f32 0.0, %v4232
        %v4234 = vpop.f32.mrf.mxu0
        %v4235 = vadd.f32 0.0, %v4234
        %v4236 = vpop.f32.mrf.mxu0
        %v4237 = vadd.f32 0.0, %v4236
        %v4238 = vpop.f32.mrf.mxu0
        %v4239 = vadd.f32 0.0, %v4238
        %4240 = vmatprep.mubr.bf16.mxu0 0
        %4241 = vmatmul.mubr.bf16.gmra.mxu0 %v3252
        %v4242 = vpop.f32.mrf.mxu0
        %v4243 = vadd.f32 0.0, %v4242
        %v4244 = vpop.f32.mrf.mxu0
        %v4245 = vadd.f32 0.0, %v4244
        %v4246 = vpop.f32.mrf.mxu0
        %v4247 = vadd.f32 0.0, %v4246
        %v4248 = vpop.f32.mrf.mxu0
        %v4249 = vadd.f32 0.0, %v4248
        %4250 = vmatprep.mubr.bf16.mxu0 0
        %4251 = vmatmul.mubr.bf16.gmra.mxu0 %v3253
        %v4252 = vpop.f32.mrf.mxu0
        %v4253 = vadd.f32 0.0, %v4252
        %v4254 = vpop.f32.mrf.mxu0
        %v4255 = vadd.f32 0.0, %v4254
        %v4256 = vpop.f32.mrf.mxu0
        %v4257 = vadd.f32 0.0, %v4256
        %v4258 = vpop.f32.mrf.mxu0
        %v4259 = vadd.f32 0.0, %v4258
        %4260 = vmatprep.mubr.bf16.mxu0 0
        %4261 = vmatmul.mubr.bf16.gmra.mxu0 %v3254
        %v4262 = vpop.f32.mrf.mxu0
        %v4263 = vadd.f32 0.0, %v4262
        %v4264 = vpop.f32.mrf.mxu0
        %v4265 = vadd.f32 0.0, %v4264
        %v4266 = vpop.f32.mrf.mxu0
        %v4267 = vadd.f32 0.0, %v4266
        %v4268 = vpop.f32.mrf.mxu0
        %v4269 = vadd.f32 0.0, %v4268
        %4270 = vmatprep.mubr.bf16.mxu0 0
        %4271 = vmatmul.mubr.bf16.gmra.mxu0 %v3255
        %v4272 = vpop.f32.mrf.mxu0
        %v4273 = vadd.f32 0.0, %v4272
        %v4274 = vpop.f32.mrf.mxu0
        %v4275 = vadd.f32 0.0, %v4274
        %v4276 = vpop.f32.mrf.mxu0
        %v4277 = vadd.f32 0.0, %v4276
        %v4278 = vpop.f32.mrf.mxu0
        %v4279 = vadd.f32 0.0, %v4278
        %4280 = vmatprep.mubr.bf16.mxu0 0
        %4281 = vmatmul.mubr.bf16.gmra.mxu0 %v3256
        %v4282 = vpop.f32.mrf.mxu0
        %v4283 = vadd.f32 0.0, %v4282
        %v4284 = vpop.f32.mrf.mxu0
        %v4285 = vadd.f32 0.0, %v4284
        %v4286 = vpop.f32.mrf.mxu0
        %v4287 = vadd.f32 0.0, %v4286
        %v4288 = vpop.f32.mrf.mxu0
        %v4289 = vadd.f32 0.0, %v4288
        %4290 = vmatprep.mubr.bf16.mxu0 0
        %4291 = vmatmul.mubr.bf16.gmra.mxu0 %v3257
        %v4292 = vpop.f32.mrf.mxu0
        %v4293 = vadd.f32 0.0, %v4292
        %v4294 = vpop.f32.mrf.mxu0
        %v4295 = vadd.f32 0.0, %v4294
        %v4296 = vpop.f32.mrf.mxu0
        %v4297 = vadd.f32 0.0, %v4296
        %v4298 = vpop.f32.mrf.mxu0
        %v4299 = vadd.f32 0.0, %v4298
        %4300 = vmatprep.mubr.bf16.mxu0 0
        %4301 = vmatmul.mubr.bf16.gmra.mxu0 %v3258
        %v4302 = vpop.f32.mrf.mxu0
        %v4303 = vadd.f32 0.0, %v4302
        %v4304 = vpop.f32.mrf.mxu0
        %v4305 = vadd.f32 0.0, %v4304
        %v4306 = vpop.f32.mrf.mxu0
        %v4307 = vadd.f32 0.0, %v4306
        %v4308 = vpop.f32.mrf.mxu0
        %v4309 = vadd.f32 0.0, %v4308
        %4310 = vmatprep.mubr.bf16.mxu0 0
        %4311 = vmatmul.mubr.bf16.gmra.mxu0 %v3259
        %v4312 = vpop.f32.mrf.mxu0
        %v4313 = vadd.f32 0.0, %v4312
        %v4314 = vpop.f32.mrf.mxu0
        %v4315 = vadd.f32 0.0, %v4314
        %v4316 = vpop.f32.mrf.mxu0
        %v4317 = vadd.f32 0.0, %v4316
        %v4318 = vpop.f32.mrf.mxu0
        %v4319 = vadd.f32 0.0, %v4318
        %4320 = vmatprep.mubr.bf16.mxu0 0
        %4321 = vmatmul.mubr.bf16.gmra.mxu0 %v3260
        %v4322 = vpop.f32.mrf.mxu0
        %v4323 = vadd.f32 0.0, %v4322
        %v4324 = vpop.f32.mrf.mxu0
        %v4325 = vadd.f32 0.0, %v4324
        %v4326 = vpop.f32.mrf.mxu0
        %v4327 = vadd.f32 0.0, %v4326
        %v4328 = vpop.f32.mrf.mxu0
        %v4329 = vadd.f32 0.0, %v4328
        %4330 = vmatprep.mubr.bf16.mxu0 0
        %4331 = vmatmul.mubr.bf16.gmra.mxu0 %v3261
        %v4332 = vpop.f32.mrf.mxu0
        %v4333 = vadd.f32 0.0, %v4332
        %v4334 = vpop.f32.mrf.mxu0
        %v4335 = vadd.f32 0.0, %v4334
        %v4336 = vpop.f32.mrf.mxu0
        %v4337 = vadd.f32 0.0, %v4336
        %v4338 = vpop.f32.mrf.mxu0
        %v4339 = vadd.f32 0.0, %v4338
        %4340 = vmatprep.mubr.bf16.mxu0 0
        %4341 = vmatmul.mubr.bf16.gmra.mxu0 %v3262
        %v4342 = vpop.f32.mrf.mxu0
        %v4343 = vadd.f32 0.0, %v4342
        %v4344 = vpop.f32.mrf.mxu0
        %v4345 = vadd.f32 0.0, %v4344
        %v4346 = vpop.f32.mrf.mxu0
        %v4347 = vadd.f32 0.0, %v4346
        %v4348 = vpop.f32.mrf.mxu0
        %v4349 = vadd.f32 0.0, %v4348
        %4350 = vmatprep.mubr.bf16.mxu0 0
        %4351 = vmatmul.mubr.bf16.gmra.mxu0 %v3263
        %v4352 = vpop.f32.mrf.mxu0
        %v4353 = vadd.f32 0.0, %v4352
        %v4354 = vpop.f32.mrf.mxu0
        %v4355 = vadd.f32 0.0, %v4354
        %v4356 = vpop.f32.mrf.mxu0
        %v4357 = vadd.f32 0.0, %v4356
        %v4358 = vpop.f32.mrf.mxu0
        %v4359 = vadd.f32 0.0, %v4358
        %4360 = vmatprep.mubr.bf16.mxu0 0
        %4361 = vmatmul.mubr.bf16.gmra.mxu0 %v3264
        %v4362 = vpop.f32.mrf.mxu0
        %v4363 = vadd.f32 0.0, %v4362
        %v4364 = vpop.f32.mrf.mxu0
        %v4365 = vadd.f32 0.0, %v4364
        %v4366 = vpop.f32.mrf.mxu0
        %v4367 = vadd.f32 0.0, %v4366
        %v4368 = vpop.f32.mrf.mxu0
        %v4369 = vadd.f32 0.0, %v4368
        %4370 = vmatprep.mubr.bf16.mxu0 0
        %4371 = vmatmul.mubr.bf16.gmra.mxu0 %v3265
        %v4372 = vpop.f32.mrf.mxu0
        %v4373 = vadd.f32 0.0, %v4372
        %v4374 = vpop.f32.mrf.mxu0
        %v4375 = vadd.f32 0.0, %v4374
        %v4376 = vpop.f32.mrf.mxu0
        %v4377 = vadd.f32 0.0, %v4376
        %v4378 = vpop.f32.mrf.mxu0
        %v4379 = vadd.f32 0.0, %v4378
        %4380 = vmatprep.mubr.bf16.mxu0 0
        %4381 = vmatmul.mubr.bf16.gmra.mxu0 %v3266
        %v4382 = vpop.f32.mrf.mxu0
        %v4383 = vadd.f32 0.0, %v4382
        %v4384 = vpop.f32.mrf.mxu0
        %v4385 = vadd.f32 0.0, %v4384
        %v4386 = vpop.f32.mrf.mxu0
        %v4387 = vadd.f32 0.0, %v4386
        %v4388 = vpop.f32.mrf.mxu0
        %v4389 = vadd.f32 0.0, %v4388
        %4390 = vmatprep.mubr.bf16.mxu0 0
        %4391 = vmatmul.mubr.bf16.gmra.mxu0 %v3267
        %v4392 = vpop.f32.mrf.mxu0
        %v4393 = vadd.f32 0.0, %v4392
        %v4394 = vpop.f32.mrf.mxu0
        %v4395 = vadd.f32 0.0, %v4394
        %v4396 = vpop.f32.mrf.mxu0
        %v4397 = vadd.f32 0.0, %v4396
        %v4398 = vpop.f32.mrf.mxu0
        %v4399 = vadd.f32 0.0, %v4398
        %4400 = vmatprep.mubr.bf16.mxu0 0
        %4401 = vmatmul.mubr.bf16.gmra.mxu0 %v3268
        %v4402 = vpop.f32.mrf.mxu0
        %v4403 = vadd.f32 0.0, %v4402
        %v4404 = vpop.f32.mrf.mxu0
        %v4405 = vadd.f32 0.0, %v4404
        %v4406 = vpop.f32.mrf.mxu0
        %v4407 = vadd.f32 0.0, %v4406
        %v4408 = vpop.f32.mrf.mxu0
        %v4409 = vadd.f32 0.0, %v4408
        %4410 = vmatprep.mubr.bf16.mxu0 0
        %4411 = vmatmul.mubr.bf16.gmra.mxu0 %v3269
        %v4412 = vpop.f32.mrf.mxu0
        %v4413 = vadd.f32 0.0, %v4412
        %v4414 = vpop.f32.mrf.mxu0
        %v4415 = vadd.f32 0.0, %v4414
        %v4416 = vpop.f32.mrf.mxu0
        %v4417 = vadd.f32 0.0, %v4416
        %v4418 = vpop.f32.mrf.mxu0
        %v4419 = vadd.f32 0.0, %v4418
        %4420 = vmatprep.mubr.bf16.mxu0 0
        %4421 = vmatmul.mubr.bf16.gmra.mxu0 %v3270
        %v4422 = vpop.f32.mrf.mxu0
        %v4423 = vadd.f32 0.0, %v4422
        %v4424 = vpop.f32.mrf.mxu0
        %v4425 = vadd.f32 0.0, %v4424
        %v4426 = vpop.f32.mrf.mxu0
        %v4427 = vadd.f32 0.0, %v4426
        %v4428 = vpop.f32.mrf.mxu0
        %v4429 = vadd.f32 0.0, %v4428
        %4430 = vmatprep.mubr.bf16.mxu0 0
        %4431 = vmatmul.mubr.bf16.gmra.mxu0 %v3271
        %v4432 = vpop.f32.mrf.mxu0
        %v4433 = vadd.f32 0.0, %v4432
        %v4434 = vpop.f32.mrf.mxu0
        %v4435 = vadd.f32 0.0, %v4434
        %v4436 = vpop.f32.mrf.mxu0
        %v4437 = vadd.f32 0.0, %v4436
        %v4438 = vpop.f32.mrf.mxu0
        %v4439 = vadd.f32 0.0, %v4438
        %4440 = vmatprep.mubr.bf16.mxu0 0
        %4441 = vmatmul.mubr.bf16.gmra.mxu0 %v3272
        %v4442 = vpop.f32.mrf.mxu0
        %v4443 = vadd.f32 0.0, %v4442
        %v4444 = vpop.f32.mrf.mxu0
        %v4445 = vadd.f32 0.0, %v4444
        %v4446 = vpop.f32.mrf.mxu0
        %v4447 = vadd.f32 0.0, %v4446
        %v4448 = vpop.f32.mrf.mxu0
        %v4449 = vadd.f32 0.0, %v4448
        %4450 = vmatprep.mubr.bf16.mxu0 0
        %4451 = vmatmul.mubr.bf16.gmra.mxu0 %v3273
        %v4452 = vpop.f32.mrf.mxu0
        %v4453 = vadd.f32 0.0, %v4452
        %v4454 = vpop.f32.mrf.mxu0
        %v4455 = vadd.f32 0.0, %v4454
        %v4456 = vpop.f32.mrf.mxu0
        %v4457 = vadd.f32 0.0, %v4456
        %v4458 = vpop.f32.mrf.mxu0
        %v4459 = vadd.f32 0.0, %v4458
        %4460 = vmatprep.mubr.bf16.mxu0 0
        %4461 = vmatmul.mubr.bf16.gmra.mxu0 %v3274
        %v4462 = vpop.f32.mrf.mxu0
        %v4463 = vadd.f32 0.0, %v4462
        %v4464 = vpop.f32.mrf.mxu0
        %v4465 = vadd.f32 0.0, %v4464
        %v4466 = vpop.f32.mrf.mxu0
        %v4467 = vadd.f32 0.0, %v4466
        %v4468 = vpop.f32.mrf.mxu0
        %v4469 = vadd.f32 0.0, %v4468
        %4470 = vmatprep.mubr.bf16.mxu0 0
        %4471 = vmatmul.mubr.bf16.gmra.mxu0 %v3275
        %v4472 = vpop.f32.mrf.mxu0
        %v4473 = vadd.f32 0.0, %v4472
        %v4474 = vpop.f32.mrf.mxu0
        %v4475 = vadd.f32 0.0, %v4474
        %v4476 = vpop.f32.mrf.mxu0
        %v4477 = vadd.f32 0.0, %v4476
        %v4478 = vpop.f32.mrf.mxu0
        %v4479 = vadd.f32 0.0, %v4478
        %4480 = vmatprep.mubr.bf16.mxu0 0
        %4481 = vmatmul.mubr.bf16.gmra.mxu0 %v3276
        %v4482 = vpop.f32.mrf.mxu0
        %v4483 = vadd.f32 0.0, %v4482
        %v4484 = vpop.f32.mrf.mxu0
        %v4485 = vadd.f32 0.0, %v4484
        %v4486 = vpop.f32.mrf.mxu0
        %v4487 = vadd.f32 0.0, %v4486
        %v4488 = vpop.f32.mrf.mxu0
        %v4489 = vadd.f32 0.0, %v4488
        %4490 = vmatprep.mubr.bf16.mxu0 0
        %4491 = vmatmul.mubr.bf16.gmra.mxu0 %v3277
        %v4492 = vpop.f32.mrf.mxu0
        %v4493 = vadd.f32 0.0, %v4492
        %v4494 = vpop.f32.mrf.mxu0
        %v4495 = vadd.f32 0.0, %v4494
        %v4496 = vpop.f32.mrf.mxu0
        %v4497 = vadd.f32 0.0, %v4496
        %v4498 = vpop.f32.mrf.mxu0
        %v4499 = vadd.f32 0.0, %v4498
        %4500 = vmatprep.mubr.bf16.mxu0 0
        %4501 = vmatmul.mubr.bf16.gmra.mxu0 %v3278
        %v4502 = vpop.f32.mrf.mxu0
        %v4503 = vadd.f32 0.0, %v4502
        %v4504 = vpop.f32.mrf.mxu0
        %v4505 = vadd.f32 0.0, %v4504
        %v4506 = vpop.f32.mrf.mxu0
        %v4507 = vadd.f32 0.0, %v4506
        %v4508 = vpop.f32.mrf.mxu0
        %v4509 = vadd.f32 0.0, %v4508
        %4510 = vmatprep.mubr.bf16.mxu0 0
        %4511 = vmatmul.mubr.bf16.gmra.mxu0 %v3279
        %v4512 = vpop.f32.mrf.mxu0
        %v4513 = vadd.f32 0.0, %v4512
        %v4514 = vpop.f32.mrf.mxu0
        %v4515 = vadd.f32 0.0, %v4514
        %v4516 = vpop.f32.mrf.mxu0
        %v4517 = vadd.f32 0.0, %v4516
        %v4518 = vpop.f32.mrf.mxu0
        %v4519 = vadd.f32 0.0, %v4518
        %4520 = vmatprep.mubr.bf16.mxu0 0
        %4521 = vmatmul.mubr.bf16.gmra.mxu0 %v3280
        %v4522 = vpop.f32.mrf.mxu0
        %v4523 = vadd.f32 0.0, %v4522
        %v4524 = vpop.f32.mrf.mxu0
        %v4525 = vadd.f32 0.0, %v4524
        %v4526 = vpop.f32.mrf.mxu0
        %v4527 = vadd.f32 0.0, %v4526
        %v4528 = vpop.f32.mrf.mxu0
        %v4529 = vadd.f32 0.0, %v4528
        %4530 = vmatprep.mubr.bf16.mxu0 0
        %4531 = vmatmul.mubr.bf16.gmra.mxu0 %v3281
        %v4532 = vpop.f32.mrf.mxu0
        %v4533 = vadd.f32 0.0, %v4532
        %v4534 = vpop.f32.mrf.mxu0
        %v4535 = vadd.f32 0.0, %v4534
        %v4536 = vpop.f32.mrf.mxu0
        %v4537 = vadd.f32 0.0, %v4536
        %v4538 = vpop.f32.mrf.mxu0
        %v4539 = vadd.f32 0.0, %v4538
        %4540 = vmatprep.mubr.bf16.mxu0 0
        %4541 = vmatmul.mubr.bf16.gmra.mxu0 %v3282
        %v4542 = vpop.f32.mrf.mxu0
        %v4543 = vadd.f32 0.0, %v4542
        %v4544 = vpop.f32.mrf.mxu0
        %v4545 = vadd.f32 0.0, %v4544
        %v4546 = vpop.f32.mrf.mxu0
        %v4547 = vadd.f32 0.0, %v4546
        %v4548 = vpop.f32.mrf.mxu0
        %v4549 = vadd.f32 0.0, %v4548
        %4550 = vmatprep.mubr.bf16.mxu0 0
        %4551 = vmatmul.mubr.bf16.gmra.mxu0 %v3283
        %v4552 = vpop.f32.mrf.mxu0
        %v4553 = vadd.f32 0.0, %v4552
        %v4554 = vpop.f32.mrf.mxu0
        %v4555 = vadd.f32 0.0, %v4554
        %v4556 = vpop.f32.mrf.mxu0
        %v4557 = vadd.f32 0.0, %v4556
        %v4558 = vpop.f32.mrf.mxu0
        %v4559 = vadd.f32 0.0, %v4558
        %4560 = vmatprep.mubr.bf16.mxu0 0
        %4561 = vmatmul.mubr.bf16.gmra.mxu0 %v3284
        %v4562 = vpop.f32.mrf.mxu0
        %v4563 = vadd.f32 0.0, %v4562
        %v4564 = vpop.f32.mrf.mxu0
        %v4565 = vadd.f32 0.0, %v4564
        %v4566 = vpop.f32.mrf.mxu0
        %v4567 = vadd.f32 0.0, %v4566
        %v4568 = vpop.f32.mrf.mxu0
        %v4569 = vadd.f32 0.0, %v4568
        %4570 = vmatprep.mubr.bf16.mxu0 0
        %4571 = vmatmul.mubr.bf16.gmra.mxu0 %v3285
        %v4572 = vpop.f32.mrf.mxu0
        %v4573 = vadd.f32 0.0, %v4572
        %v4574 = vpop.f32.mrf.mxu0
        %v4575 = vadd.f32 0.0, %v4574
        %v4576 = vpop.f32.mrf.mxu0
        %v4577 = vadd.f32 0.0, %v4576
        %v4578 = vpop.f32.mrf.mxu0
        %v4579 = vadd.f32 0.0, %v4578
        %4580 = vmatprep.mubr.bf16.mxu0 0
        %4581 = vmatmul.mubr.bf16.gmra.mxu0 %v3286
        %v4582 = vpop.f32.mrf.mxu0
        %v4583 = vadd.f32 0.0, %v4582
        %v4584 = vpop.f32.mrf.mxu0
        %v4585 = vadd.f32 0.0, %v4584
        %v4586 = vpop.f32.mrf.mxu0
        %v4587 = vadd.f32 0.0, %v4586
        %v4588 = vpop.f32.mrf.mxu0
        %v4589 = vadd.f32 0.0, %v4588
        %4590 = vmatprep.mubr.bf16.mxu0 0
        %4591 = vmatmul.mubr.bf16.gmra.mxu0 %v3287
        %v4592 = vpop.f32.mrf.mxu0
        %v4593 = vadd.f32 0.0, %v4592
        %v4594 = vpop.f32.mrf.mxu0
        %v4595 = vadd.f32 0.0, %v4594
        %v4596 = vpop.f32.mrf.mxu0
        %v4597 = vadd.f32 0.0, %v4596
        %v4598 = vpop.f32.mrf.mxu0
        %v4599 = vadd.f32 0.0, %v4598
        %4600 = vmatprep.mubr.bf16.mxu0 0
        %4601 = vmatmul.mubr.bf16.gmra.mxu0 %v3288
        %v4602 = vpop.f32.mrf.mxu0
        %v4603 = vadd.f32 0.0, %v4602
        %v4604 = vpop.f32.mrf.mxu0
        %v4605 = vadd.f32 0.0, %v4604
        %v4606 = vpop.f32.mrf.mxu0
        %v4607 = vadd.f32 0.0, %v4606
        %v4608 = vpop.f32.mrf.mxu0
        %v4609 = vadd.f32 0.0, %v4608
        %4610 = vmatprep.mubr.bf16.mxu0 0
        %4611 = vmatmul.mubr.bf16.gmra.mxu0 %v3289
        %v4612 = vpop.f32.mrf.mxu0
        %v4613 = vadd.f32 0.0, %v4612
        %v4614 = vpop.f32.mrf.mxu0
        %v4615 = vadd.f32 0.0, %v4614
        %v4616 = vpop.f32.mrf.mxu0
        %v4617 = vadd.f32 0.0, %v4616
        %v4618 = vpop.f32.mrf.mxu0
        %v4619 = vadd.f32 0.0, %v4618
        %4620 = vmatprep.mubr.bf16.mxu0 0
        %4621 = vmatmul.mubr.bf16.gmra.mxu0 %v3290
        %v4622 = vpop.f32.mrf.mxu0
        %v4623 = vadd.f32 0.0, %v4622
        %v4624 = vpop.f32.mrf.mxu0
        %v4625 = vadd.f32 0.0, %v4624
        %v4626 = vpop.f32.mrf.mxu0
        %v4627 = vadd.f32 0.0, %v4626
        %v4628 = vpop.f32.mrf.mxu0
        %v4629 = vadd.f32 0.0, %v4628
        %4630 = vmatprep.mubr.bf16.mxu0 0
        %4631 = vmatmul.mubr.bf16.gmra.mxu0 %v3291
        %v4632 = vpop.f32.mrf.mxu0
        %v4633 = vadd.f32 0.0, %v4632
        %v4634 = vpop.f32.mrf.mxu0
        %v4635 = vadd.f32 0.0, %v4634
        %v4636 = vpop.f32.mrf.mxu0
        %v4637 = vadd.f32 0.0, %v4636
        %v4638 = vpop.f32.mrf.mxu0
        %v4639 = vadd.f32 0.0, %v4638
        %4640 = vmatprep.mubr.bf16.mxu0 0
        %4641 = vmatmul.mubr.bf16.gmra.mxu0 %v3292
        %v4642 = vpop.f32.mrf.mxu0
        %v4643 = vadd.f32 0.0, %v4642
        %v4644 = vpop.f32.mrf.mxu0
        %v4645 = vadd.f32 0.0, %v4644
        %v4646 = vpop.f32.mrf.mxu0
        %v4647 = vadd.f32 0.0, %v4646
        %v4648 = vpop.f32.mrf.mxu0
        %v4649 = vadd.f32 0.0, %v4648
        %4650 = vmatprep.mubr.bf16.mxu0 0
        %4651 = vmatmul.mubr.bf16.gmra.mxu0 %v3293
        %v4652 = vpop.f32.mrf.mxu0
        %v4653 = vadd.f32 0.0, %v4652
        %v4654 = vpop.f32.mrf.mxu0
        %v4655 = vadd.f32 0.0, %v4654
        %v4656 = vpop.f32.mrf.mxu0
        %v4657 = vadd.f32 0.0, %v4656
        %v4658 = vpop.f32.mrf.mxu0
        %v4659 = vadd.f32 0.0, %v4658
        %4660 = vmatprep.mubr.bf16.mxu0 0
        %4661 = vmatmul.mubr.bf16.gmra.mxu0 %v3294
        %v4662 = vpop.f32.mrf.mxu0
        %v4663 = vadd.f32 0.0, %v4662
        %v4664 = vpop.f32.mrf.mxu0
        %v4665 = vadd.f32 0.0, %v4664
        %v4666 = vpop.f32.mrf.mxu0
        %v4667 = vadd.f32 0.0, %v4666
        %v4668 = vpop.f32.mrf.mxu0
        %v4669 = vadd.f32 0.0, %v4668
        %4670 = vmatprep.mubr.bf16.mxu0 0
        %4671 = vmatmul.mubr.bf16.gmra.mxu0 %v3295
        %v4672 = vpop.f32.mrf.mxu0
        %v4673 = vadd.f32 0.0, %v4672
        %v4674 = vpop.f32.mrf.mxu0
        %v4675 = vadd.f32 0.0, %v4674
        %v4676 = vpop.f32.mrf.mxu0
        %v4677 = vadd.f32 0.0, %v4676
        %v4678 = vpop.f32.mrf.mxu0
        %v4679 = vadd.f32 0.0, %v4678
        %4680 = vmatprep.mubr.bf16.mxu0 0
        %4681 = vmatmul.mubr.bf16.gmra.mxu0 %v3296
        %v4682 = vpop.f32.mrf.mxu0
        %v4683 = vadd.f32 0.0, %v4682
        %v4684 = vpop.f32.mrf.mxu0
        %v4685 = vadd.f32 0.0, %v4684
        %v4686 = vpop.f32.mrf.mxu0
        %v4687 = vadd.f32 0.0, %v4686
        %v4688 = vpop.f32.mrf.mxu0
        %v4689 = vadd.f32 0.0, %v4688
        %4690 = vmatprep.mubr.bf16.mxu0 0
        %4691 = vmatmul.mubr.bf16.gmra.mxu0 %v3297
        %v4692 = vpop.f32.mrf.mxu0
        %v4693 = vadd.f32 0.0, %v4692
        %v4694 = vpop.f32.mrf.mxu0
        %v4695 = vadd.f32 0.0, %v4694
        %v4696 = vpop.f32.mrf.mxu0
        %v4697 = vadd.f32 0.0, %v4696
        %v4698 = vpop.f32.mrf.mxu0
        %v4699 = vadd.f32 0.0, %v4698
        %4700 = vmatprep.mubr.bf16.mxu0 0
        %4701 = vmatmul.mubr.bf16.gmra.mxu0 %v3298
        %v4702 = vpop.f32.mrf.mxu0
        %v4703 = vadd.f32 0.0, %v4702
        %v4704 = vpop.f32.mrf.mxu0
        %v4705 = vadd.f32 0.0, %v4704
        %v4706 = vpop.f32.mrf.mxu0
        %v4707 = vadd.f32 0.0, %v4706
        %v4708 = vpop.f32.mrf.mxu0
        %v4709 = vadd.f32 0.0, %v4708
        %4710 = vmatprep.mubr.bf16.mxu0 0
        %4711 = vmatmul.mubr.bf16.gmra.mxu0 %v3299
        %v4712 = vpop.f32.mrf.mxu0
        %v4713 = vadd.f32 0.0, %v4712
        %v4714 = vpop.f32.mrf.mxu0
        %v4715 = vadd.f32 0.0, %v4714
        %v4716 = vpop.f32.mrf.mxu0
        %v4717 = vadd.f32 0.0, %v4716
        %v4718 = vpop.f32.mrf.mxu0
        %v4719 = vadd.f32 0.0, %v4718
        %4720 = vmatprep.mubr.bf16.mxu0 0
        %4721 = vmatmul.mubr.bf16.gmra.mxu0 %v3300
        %v4722 = vpop.f32.mrf.mxu0
        %v4723 = vadd.f32 0.0, %v4722
        %v4724 = vpop.f32.mrf.mxu0
        %v4725 = vadd.f32 0.0, %v4724
        %v4726 = vpop.f32.mrf.mxu0
        %v4727 = vadd.f32 0.0, %v4726
        %v4728 = vpop.f32.mrf.mxu0
        %v4729 = vadd.f32 0.0, %v4728
        %4730 = vmatprep.mubr.bf16.mxu0 0
        %4731 = vmatmul.mubr.bf16.gmra.mxu0 %v3301
        %v4732 = vpop.f32.mrf.mxu0
        %v4733 = vadd.f32 0.0, %v4732
        %v4734 = vpop.f32.mrf.mxu0
        %v4735 = vadd.f32 0.0, %v4734
        %v4736 = vpop.f32.mrf.mxu0
        %v4737 = vadd.f32 0.0, %v4736
        %v4738 = vpop.f32.mrf.mxu0
        %v4739 = vadd.f32 0.0, %v4738
        %4740 = vmatprep.mubr.bf16.mxu0 0
        %4741 = vmatmul.mubr.bf16.gmra.mxu0 %v3302
        %v4742 = vpop.f32.mrf.mxu0
        %v4743 = vadd.f32 0.0, %v4742
        %v4744 = vpop.f32.mrf.mxu0
        %v4745 = vadd.f32 0.0, %v4744
        %v4746 = vpop.f32.mrf.mxu0
        %v4747 = vadd.f32 0.0, %v4746
        %v4748 = vpop.f32.mrf.mxu0
        %v4749 = vadd.f32 0.0, %v4748
        %4750 = vmatprep.mubr.bf16.mxu0 0
        %4751 = vmatmul.mubr.bf16.gmra.mxu0 %v3303
        %v4752 = vpop.f32.mrf.mxu0
        %v4753 = vadd.f32 0.0, %v4752
        %v4754 = vpop.f32.mrf.mxu0
        %v4755 = vadd.f32 0.0, %v4754
        %v4756 = vpop.f32.mrf.mxu0
        %v4757 = vadd.f32 0.0, %v4756
        %v4758 = vpop.f32.mrf.mxu0
        %v4759 = vadd.f32 0.0, %v4758
        %4760 = vmatprep.mubr.bf16.mxu0 0
        %4761 = vmatmul.mubr.bf16.gmra.mxu0 %v3304
        %v4762 = vpop.f32.mrf.mxu0
        %v4763 = vadd.f32 0.0, %v4762
        %v4764 = vpop.f32.mrf.mxu0
        %v4765 = vadd.f32 0.0, %v4764
        %v4766 = vpop.f32.mrf.mxu0
        %v4767 = vadd.f32 0.0, %v4766
        %v4768 = vpop.f32.mrf.mxu0
        %v4769 = vadd.f32 0.0, %v4768
        %4770 = vmatprep.mubr.bf16.mxu0 0
        %4771 = vmatmul.mubr.bf16.gmra.mxu0 %v3305
        %v4772 = vpop.f32.mrf.mxu0
        %v4773 = vadd.f32 0.0, %v4772
        %v4774 = vpop.f32.mrf.mxu0
        %v4775 = vadd.f32 0.0, %v4774
        %v4776 = vpop.f32.mrf.mxu0
        %v4777 = vadd.f32 0.0, %v4776
        %v4778 = vpop.f32.mrf.mxu0
        %v4779 = vadd.f32 0.0, %v4778
        %4780 = vmatprep.mubr.bf16.mxu0 0
        %4781 = vmatmul.mubr.bf16.gmra.mxu0 %v3306
        %v4782 = vpop.f32.mrf.mxu0
        %v4783 = vadd.f32 0.0, %v4782
        %v4784 = vpop.f32.mrf.mxu0
        %v4785 = vadd.f32 0.0, %v4784
        %v4786 = vpop.f32.mrf.mxu0
        %v4787 = vadd.f32 0.0, %v4786
        %v4788 = vpop.f32.mrf.mxu0
        %v4789 = vadd.f32 0.0, %v4788
        %4790 = vmatprep.mubr.bf16.mxu0 0
        %4791 = vmatmul.mubr.bf16.gmra.mxu0 %v3307
        %v4792 = vpop.f32.mrf.mxu0
        %v4793 = vadd.f32 0.0, %v4792
        %v4794 = vpop.f32.mrf.mxu0
        %v4795 = vadd.f32 0.0, %v4794
        %v4796 = vpop.f32.mrf.mxu0
        %v4797 = vadd.f32 0.0, %v4796
        %v4798 = vpop.f32.mrf.mxu0
        %v4799 = vadd.f32 0.0, %v4798
        %4800 = vmatprep.mubr.bf16.mxu0 0
        %4801 = vmatmul.mubr.bf16.gmra.mxu0 %v3308
        %v4802 = vpop.f32.mrf.mxu0
        %v4803 = vadd.f32 0.0, %v4802
        %v4804 = vpop.f32.mrf.mxu0
        %v4805 = vadd.f32 0.0, %v4804
        %v4806 = vpop.f32.mrf.mxu0
        %v4807 = vadd.f32 0.0, %v4806
        %v4808 = vpop.f32.mrf.mxu0
        %v4809 = vadd.f32 0.0, %v4808
        %4810 = vmatprep.mubr.bf16.mxu0 0
        %4811 = vmatmul.mubr.bf16.gmra.mxu0 %v3309
        %v4812 = vpop.f32.mrf.mxu0
        %v4813 = vadd.f32 0.0, %v4812
        %v4814 = vpop.f32.mrf.mxu0
        %v4815 = vadd.f32 0.0, %v4814
        %v4816 = vpop.f32.mrf.mxu0
        %v4817 = vadd.f32 0.0, %v4816
        %v4818 = vpop.f32.mrf.mxu0
        %v4819 = vadd.f32 0.0, %v4818
        %4820 = vmatprep.mubr.bf16.mxu0 0
        %4821 = vmatmul.mubr.bf16.gmra.mxu0 %v3310
        %v4822 = vpop.f32.mrf.mxu0
        %v4823 = vadd.f32 0.0, %v4822
        %v4824 = vpop.f32.mrf.mxu0
        %v4825 = vadd.f32 0.0, %v4824
        %v4826 = vpop.f32.mrf.mxu0
        %v4827 = vadd.f32 0.0, %v4826
        %v4828 = vpop.f32.mrf.mxu0
        %v4829 = vadd.f32 0.0, %v4828
        %4830 = vmatprep.mubr.bf16.mxu0 0
        %4831 = vmatmul.mubr.bf16.gmra.mxu0 %v3311
        %v4832 = vpop.f32.mrf.mxu0
        %v4833 = vadd.f32 0.0, %v4832
        %v4834 = vpop.f32.mrf.mxu0
        %v4835 = vadd.f32 0.0, %v4834
        %v4836 = vpop.f32.mrf.mxu0
        %v4837 = vadd.f32 0.0, %v4836
        %v4838 = vpop.f32.mrf.mxu0
        %v4839 = vadd.f32 0.0, %v4838
        %4840 = vmatprep.mubr.bf16.mxu0 0
        %4841 = vmatmul.mubr.bf16.gmra.mxu0 %v3312
        %v4842 = vpop.f32.mrf.mxu0
        %v4843 = vadd.f32 0.0, %v4842
        %v4844 = vpop.f32.mrf.mxu0
        %v4845 = vadd.f32 0.0, %v4844
        %v4846 = vpop.f32.mrf.mxu0
        %v4847 = vadd.f32 0.0, %v4846
        %v4848 = vpop.f32.mrf.mxu0
        %v4849 = vadd.f32 0.0, %v4848
        %4850 = vdwg.mxu0
        %4851 = vst [vmem:[%s393] sm:$0xff] %v3540
        %4852 = vst [vmem:[%s393 + $0x8] sm:$0xff] %v3542
        %4853 = vst [vmem:[%s393 + $0x10] sm:$0xff] %v4213
        %4854 = vst [vmem:[%s393 + $0x18] sm:$0xff] %v4215
        %4855 = vst [vmem:[%s393 + $0x20] sm:$0xff] %v3544
        %4856 = vst [vmem:[%s393 + $0x28] sm:$0xff] %v3546
        %4857 = vst [vmem:[%s393 + $0x30] sm:$0xff] %v4217
        %4858 = vst [vmem:[%s393 + $0x38] sm:$0xff] %v4219
        %4859 = vst [vmem:[%s393 + $0x40] sm:$0xff] %v3550
        %4860 = vst [vmem:[%s393 + $0x48] sm:$0xff] %v3552
        %4861 = vst [vmem:[%s393 + $0x50] sm:$0xff] %v4223
        %4862 = vst [vmem:[%s393 + $0x58] sm:$0xff] %v4225
        %4863 = vst [vmem:[%s393 + $0x60] sm:$0xff] %v3554
        %4864 = vst [vmem:[%s393 + $0x68] sm:$0xff] %v3556
        %4865 = vst [vmem:[%s393 + $0x70] sm:$0xff] %v4227
        %4866 = vst [vmem:[%s393 + $0x78] sm:$0xff] %v4229
        %4867 = vst [vmem:[%s393 + $0x80] sm:$0xff] %v3560
        %4868 = vst [vmem:[%s393 + $0x88] sm:$0xff] %v3562
        %4869 = vst [vmem:[%s393 + $0x90] sm:$0xff] %v4233
        %4870 = vst [vmem:[%s393 + $0x98] sm:$0xff] %v4235
        %4871 = vst [vmem:[%s393 + $0xa0] sm:$0xff] %v3564
        %4872 = vst [vmem:[%s393 + $0xa8] sm:$0xff] %v3566
        %4873 = vst [vmem:[%s393 + $0xb0] sm:$0xff] %v4237
        %4874 = vst [vmem:[%s393 + $0xb8] sm:$0xff] %v4239
        %4875 = vst [vmem:[%s393 + $0xc0] sm:$0xff] %v3570
        %4876 = vst [vmem:[%s393 + $0xc8] sm:$0xff] %v3572
        %4877 = vst [vmem:[%s393 + $0xd0] sm:$0xff] %v4243
        %4878 = vst [vmem:[%s393 + $0xd8] sm:$0xff] %v4245
        %4879 = vst [vmem:[%s393 + $0xe0] sm:$0xff] %v3574
        %4880 = vst [vmem:[%s393 + $0xe8] sm:$0xff] %v3576
        %4881 = vst [vmem:[%s393 + $0xf0] sm:$0xff] %v4247
        %4882 = vst [vmem:[%s393 + $0xf8] sm:$0xff] %v4249
        %4883 = vst [vmem:[%s393 + $0x100] sm:$0xff] %v3580
        %4884 = vst [vmem:[%s393 + $0x108] sm:$0xff] %v3582
        %4885 = vst [vmem:[%s393 + $0x110] sm:$0xff] %v4253
        %4886 = vst [vmem:[%s393 + $0x118] sm:$0xff] %v4255
        %4887 = vst [vmem:[%s393 + $0x120] sm:$0xff] %v3584
        %4888 = vst [vmem:[%s393 + $0x128] sm:$0xff] %v3586
        %4889 = vst [vmem:[%s393 + $0x130] sm:$0xff] %v4257
        %4890 = vst [vmem:[%s393 + $0x138] sm:$0xff] %v4259
        %4891 = vst [vmem:[%s393 + $0x140] sm:$0xff] %v3590
        %4892 = vst [vmem:[%s393 + $0x148] sm:$0xff] %v3592
        %4893 = vst [vmem:[%s393 + $0x150] sm:$0xff] %v4263
        %4894 = vst [vmem:[%s393 + $0x158] sm:$0xff] %v4265
        %4895 = vst [vmem:[%s393 + $0x160] sm:$0xff] %v3594
        %4896 = vst [vmem:[%s393 + $0x168] sm:$0xff] %v3596
        %4897 = vst [vmem:[%s393 + $0x170] sm:$0xff] %v4267
        %4898 = vst [vmem:[%s393 + $0x178] sm:$0xff] %v4269
        %4899 = vst [vmem:[%s393 + $0x180] sm:$0xff] %v3600
        %4900 = vst [vmem:[%s393 + $0x188] sm:$0xff] %v3602
        %4901 = vst [vmem:[%s393 + $0x190] sm:$0xff] %v4273
        %4902 = vst [vmem:[%s393 + $0x198] sm:$0xff] %v4275
        %4903 = vst [vmem:[%s393 + $0x1a0] sm:$0xff] %v3604
        %4904 = vst [vmem:[%s393 + $0x1a8] sm:$0xff] %v3606
        %4905 = vst [vmem:[%s393 + $0x1b0] sm:$0xff] %v4277
        %4906 = vst [vmem:[%s393 + $0x1b8] sm:$0xff] %v4279
        %4907 = vst [vmem:[%s393 + $0x1c0] sm:$0xff] %v3610
        %4908 = vst [vmem:[%s393 + $0x1c8] sm:$0xff] %v3612
        %4909 = vst [vmem:[%s393 + $0x1d0] sm:$0xff] %v4283
        %4910 = vst [vmem:[%s393 + $0x1d8] sm:$0xff] %v4285
        %4911 = vst [vmem:[%s393 + $0x1e0] sm:$0xff] %v3614
        %4912 = vst [vmem:[%s393 + $0x1e8] sm:$0xff] %v3616
        %4913 = vst [vmem:[%s393 + $0x1f0] sm:$0xff] %v4287
        %4914 = vst [vmem:[%s393 + $0x1f8] sm:$0xff] %v4289
        %4915 = vst [vmem:[%s393 + $0x200] sm:$0xff] %v3620
        %4916 = vst [vmem:[%s393 + $0x208] sm:$0xff] %v3622
        %4917 = vst [vmem:[%s393 + $0x210] sm:$0xff] %v4293
        %4918 = vst [vmem:[%s393 + $0x218] sm:$0xff] %v4295
        %4919 = vst [vmem:[%s393 + $0x220] sm:$0xff] %v3624
        %4920 = vst [vmem:[%s393 + $0x228] sm:$0xff] %v3626
        %4921 = vst [vmem:[%s393 + $0x230] sm:$0xff] %v4297
        %4922 = vst [vmem:[%s393 + $0x238] sm:$0xff] %v4299
        %4923 = vst [vmem:[%s393 + $0x240] sm:$0xff] %v3630
        %4924 = vst [vmem:[%s393 + $0x248] sm:$0xff] %v3632
        %4925 = vst [vmem:[%s393 + $0x250] sm:$0xff] %v4303
        %4926 = vst [vmem:[%s393 + $0x258] sm:$0xff] %v4305
        %4927 = vst [vmem:[%s393 + $0x260] sm:$0xff] %v3634
        %4928 = vst [vmem:[%s393 + $0x268] sm:$0xff] %v3636
        %4929 = vst [vmem:[%s393 + $0x270] sm:$0xff] %v4307
        %4930 = vst [vmem:[%s393 + $0x278] sm:$0xff] %v4309
        %4931 = vst [vmem:[%s393 + $0x280] sm:$0xff] %v3640
        %4932 = vst [vmem:[%s393 + $0x288] sm:$0xff] %v3642
        %4933 = vst [vmem:[%s393 + $0x290] sm:$0xff] %v4313
        %4934 = vst [vmem:[%s393 + $0x298] sm:$0xff] %v4315
        %4935 = vst [vmem:[%s393 + $0x2a0] sm:$0xff] %v3644
        %4936 = vst [vmem:[%s393 + $0x2a8] sm:$0xff] %v3646
        %4937 = vst [vmem:[%s393 + $0x2b0] sm:$0xff] %v4317
        %4938 = vst [vmem:[%s393 + $0x2b8] sm:$0xff] %v4319
        %4939 = vst [vmem:[%s393 + $0x2c0] sm:$0xff] %v3650
        %4940 = vst [vmem:[%s393 + $0x2c8] sm:$0xff] %v3652
        %4941 = vst [vmem:[%s393 + $0x2d0] sm:$0xff] %v4323
        %4942 = vst [vmem:[%s393 + $0x2d8] sm:$0xff] %v4325
        %4943 = vst [vmem:[%s393 + $0x2e0] sm:$0xff] %v3654
        %4944 = vst [vmem:[%s393 + $0x2e8] sm:$0xff] %v3656
        %4945 = vst [vmem:[%s393 + $0x2f0] sm:$0xff] %v4327
        %4946 = vst [vmem:[%s393 + $0x2f8] sm:$0xff] %v4329
        %4947 = vst [vmem:[%s393 + $0x300] sm:$0xff] %v3660
        %4948 = vst [vmem:[%s393 + $0x308] sm:$0xff] %v3662
        %4949 = vst [vmem:[%s393 + $0x310] sm:$0xff] %v4333
        %4950 = vst [vmem:[%s393 + $0x318] sm:$0xff] %v4335
        %4951 = vst [vmem:[%s393 + $0x320] sm:$0xff] %v3664
        %4952 = vst [vmem:[%s393 + $0x328] sm:$0xff] %v3666
        %4953 = vst [vmem:[%s393 + $0x330] sm:$0xff] %v4337
        %4954 = vst [vmem:[%s393 + $0x338] sm:$0xff] %v4339
        %4955 = vst [vmem:[%s393 + $0x340] sm:$0xff] %v3670
        %4956 = vst [vmem:[%s393 + $0x348] sm:$0xff] %v3672
        %4957 = vst [vmem:[%s393 + $0x350] sm:$0xff] %v4343
        %4958 = vst [vmem:[%s393 + $0x358] sm:$0xff] %v4345
        %4959 = vst [vmem:[%s393 + $0x360] sm:$0xff] %v3674
        %4960 = vst [vmem:[%s393 + $0x368] sm:$0xff] %v3676
        %4961 = vst [vmem:[%s393 + $0x370] sm:$0xff] %v4347
        %4962 = vst [vmem:[%s393 + $0x378] sm:$0xff] %v4349
        %4963 = vst [vmem:[%s393 + $0x380] sm:$0xff] %v3680
        %4964 = vst [vmem:[%s393 + $0x388] sm:$0xff] %v3682
        %4965 = vst [vmem:[%s393 + $0x390] sm:$0xff] %v4353
        %4966 = vst [vmem:[%s393 + $0x398] sm:$0xff] %v4355
        %4967 = vst [vmem:[%s393 + $0x3a0] sm:$0xff] %v3684
        %4968 = vst [vmem:[%s393 + $0x3a8] sm:$0xff] %v3686
        %4969 = vst [vmem:[%s393 + $0x3b0] sm:$0xff] %v4357
        %4970 = vst [vmem:[%s393 + $0x3b8] sm:$0xff] %v4359
        %4971 = vst [vmem:[%s393 + $0x3c0] sm:$0xff] %v3690
        %4972 = vst [vmem:[%s393 + $0x3c8] sm:$0xff] %v3692
        %4973 = vst [vmem:[%s393 + $0x3d0] sm:$0xff] %v4363
        %4974 = vst [vmem:[%s393 + $0x3d8] sm:$0xff] %v4365
        %4975 = vst [vmem:[%s393 + $0x3e0] sm:$0xff] %v3694
        %4976 = vst [vmem:[%s393 + $0x3e8] sm:$0xff] %v3696
        %4977 = vst [vmem:[%s393 + $0x3f0] sm:$0xff] %v4367
        %4978 = vst [vmem:[%s393 + $0x3f8] sm:$0xff] %v4369
        %4979 = vst [vmem:[%s393 + $0x400] sm:$0xff] %v3700
        %4980 = vst [vmem:[%s393 + $0x408] sm:$0xff] %v3702
        %4981 = vst [vmem:[%s393 + $0x410] sm:$0xff] %v4373
        %4982 = vst [vmem:[%s393 + $0x418] sm:$0xff] %v4375
        %4983 = vst [vmem:[%s393 + $0x420] sm:$0xff] %v3704
        %4984 = vst [vmem:[%s393 + $0x428] sm:$0xff] %v3706
        %4985 = vst [vmem:[%s393 + $0x430] sm:$0xff] %v4377
        %4986 = vst [vmem:[%s393 + $0x438] sm:$0xff] %v4379
        %4987 = vst [vmem:[%s393 + $0x440] sm:$0xff] %v3710
        %4988 = vst [vmem:[%s393 + $0x448] sm:$0xff] %v3712
        %4989 = vst [vmem:[%s393 + $0x450] sm:$0xff] %v4383
        %4990 = vst [vmem:[%s393 + $0x458] sm:$0xff] %v4385
        %4991 = vst [vmem:[%s393 + $0x460] sm:$0xff] %v3714
        %4992 = vst [vmem:[%s393 + $0x468] sm:$0xff] %v3716
        %4993 = vst [vmem:[%s393 + $0x470] sm:$0xff] %v4387
        %4994 = vst [vmem:[%s393 + $0x478] sm:$0xff] %v4389
        %4995 = vst [vmem:[%s393 + $0x480] sm:$0xff] %v3720
        %4996 = vst [vmem:[%s393 + $0x488] sm:$0xff] %v3722
        %4997 = vst [vmem:[%s393 + $0x490] sm:$0xff] %v4393
        %4998 = vst [vmem:[%s393 + $0x498] sm:$0xff] %v4395
        %4999 = vst [vmem:[%s393 + $0x4a0] sm:$0xff] %v3724
        %5000 = vst [vmem:[%s393 + $0x4a8] sm:$0xff] %v3726
        %5001 = vst [vmem:[%s393 + $0x4b0] sm:$0xff] %v4397
        %5002 = vst [vmem:[%s393 + $0x4b8] sm:$0xff] %v4399
        %5003 = vst [vmem:[%s393 + $0x4c0] sm:$0xff] %v3730
        %5004 = vst [vmem:[%s393 + $0x4c8] sm:$0xff] %v3732
        %5005 = vst [vmem:[%s393 + $0x4d0] sm:$0xff] %v4403
        %5006 = vst [vmem:[%s393 + $0x4d8] sm:$0xff] %v4405
        %5007 = vst [vmem:[%s393 + $0x4e0] sm:$0xff] %v3734
        %5008 = vst [vmem:[%s393 + $0x4e8] sm:$0xff] %v3736
        %5009 = vst [vmem:[%s393 + $0x4f0] sm:$0xff] %v4407
        %5010 = vst [vmem:[%s393 + $0x4f8] sm:$0xff] %v4409
        %5011 = vst [vmem:[%s393 + $0x500] sm:$0xff] %v3740
        %5012 = vst [vmem:[%s393 + $0x508] sm:$0xff] %v3742
        %5013 = vst [vmem:[%s393 + $0x510] sm:$0xff] %v4413
        %5014 = vst [vmem:[%s393 + $0x518] sm:$0xff] %v4415
        %5015 = vst [vmem:[%s393 + $0x520] sm:$0xff] %v3744
        %5016 = vst [vmem:[%s393 + $0x528] sm:$0xff] %v3746
        %5017 = vst [vmem:[%s393 + $0x530] sm:$0xff] %v4417
        %5018 = vst [vmem:[%s393 + $0x538] sm:$0xff] %v4419
        %5019 = vst [vmem:[%s393 + $0x540] sm:$0xff] %v3750
        %5020 = vst [vmem:[%s393 + $0x548] sm:$0xff] %v3752
        %5021 = vst [vmem:[%s393 + $0x550] sm:$0xff] %v4423
        %5022 = vst [vmem:[%s393 + $0x558] sm:$0xff] %v4425
        %5023 = vst [vmem:[%s393 + $0x560] sm:$0xff] %v3754
        %5024 = vst [vmem:[%s393 + $0x568] sm:$0xff] %v3756
        %5025 = vst [vmem:[%s393 + $0x570] sm:$0xff] %v4427
        %5026 = vst [vmem:[%s393 + $0x578] sm:$0xff] %v4429
        %5027 = vst [vmem:[%s393 + $0x580] sm:$0xff] %v3760
        %5028 = vst [vmem:[%s393 + $0x588] sm:$0xff] %v3762
        %5029 = vst [vmem:[%s393 + $0x590] sm:$0xff] %v4433
        %5030 = vst [vmem:[%s393 + $0x598] sm:$0xff] %v4435
        %5031 = vst [vmem:[%s393 + $0x5a0] sm:$0xff] %v3764
        %5032 = vst [vmem:[%s393 + $0x5a8] sm:$0xff] %v3766
        %5033 = vst [vmem:[%s393 + $0x5b0] sm:$0xff] %v4437
        %5034 = vst [vmem:[%s393 + $0x5b8] sm:$0xff] %v4439
        %5035 = vst [vmem:[%s393 + $0x5c0] sm:$0xff] %v3770
        %5036 = vst [vmem:[%s393 + $0x5c8] sm:$0xff] %v3772
        %5037 = vst [vmem:[%s393 + $0x5d0] sm:$0xff] %v4443
        %5038 = vst [vmem:[%s393 + $0x5d8] sm:$0xff] %v4445
        %5039 = vst [vmem:[%s393 + $0x5e0] sm:$0xff] %v3774
        %5040 = vst [vmem:[%s393 + $0x5e8] sm:$0xff] %v3776
        %5041 = vst [vmem:[%s393 + $0x5f0] sm:$0xff] %v4447
        %5042 = vst [vmem:[%s393 + $0x5f8] sm:$0xff] %v4449
        %5043 = vst [vmem:[%s393 + $0x600] sm:$0xff] %v3780
        %5044 = vst [vmem:[%s393 + $0x608] sm:$0xff] %v3782
        %5045 = vst [vmem:[%s393 + $0x610] sm:$0xff] %v4453
        %5046 = vst [vmem:[%s393 + $0x618] sm:$0xff] %v4455
        %5047 = vst [vmem:[%s393 + $0x620] sm:$0xff] %v3784
        %5048 = vst [vmem:[%s393 + $0x628] sm:$0xff] %v3786
        %5049 = vst [vmem:[%s393 + $0x630] sm:$0xff] %v4457
        %5050 = vst [vmem:[%s393 + $0x638] sm:$0xff] %v4459
        %5051 = vst [vmem:[%s393 + $0x640] sm:$0xff] %v3790
        %5052 = vst [vmem:[%s393 + $0x648] sm:$0xff] %v3792
        %5053 = vst [vmem:[%s393 + $0x650] sm:$0xff] %v4463
        %5054 = vst [vmem:[%s393 + $0x658] sm:$0xff] %v4465
        %5055 = vst [vmem:[%s393 + $0x660] sm:$0xff] %v3794
        %5056 = vst [vmem:[%s393 + $0x668] sm:$0xff] %v3796
        %5057 = vst [vmem:[%s393 + $0x670] sm:$0xff] %v4467
        %5058 = vst [vmem:[%s393 + $0x678] sm:$0xff] %v4469
        %5059 = vst [vmem:[%s393 + $0x680] sm:$0xff] %v3800
        %5060 = vst [vmem:[%s393 + $0x688] sm:$0xff] %v3802
        %5061 = vst [vmem:[%s393 + $0x690] sm:$0xff] %v4473
        %5062 = vst [vmem:[%s393 + $0x698] sm:$0xff] %v4475
        %5063 = vst [vmem:[%s393 + $0x6a0] sm:$0xff] %v3804
        %5064 = vst [vmem:[%s393 + $0x6a8] sm:$0xff] %v3806
        %5065 = vst [vmem:[%s393 + $0x6b0] sm:$0xff] %v4477
        %5066 = vst [vmem:[%s393 + $0x6b8] sm:$0xff] %v4479
        %5067 = vst [vmem:[%s393 + $0x6c0] sm:$0xff] %v3810
        %5068 = vst [vmem:[%s393 + $0x6c8] sm:$0xff] %v3812
        %5069 = vst [vmem:[%s393 + $0x6d0] sm:$0xff] %v4483
        %5070 = vst [vmem:[%s393 + $0x6d8] sm:$0xff] %v4485
        %5071 = vst [vmem:[%s393 + $0x6e0] sm:$0xff] %v3814
        %5072 = vst [vmem:[%s393 + $0x6e8] sm:$0xff] %v3816
        %5073 = vst [vmem:[%s393 + $0x6f0] sm:$0xff] %v4487
        %5074 = vst [vmem:[%s393 + $0x6f8] sm:$0xff] %v4489
        %5075 = vst [vmem:[%s393 + $0x700] sm:$0xff] %v3820
        %5076 = vst [vmem:[%s393 + $0x708] sm:$0xff] %v3822
        %5077 = vst [vmem:[%s393 + $0x710] sm:$0xff] %v4493
        %5078 = vst [vmem:[%s393 + $0x718] sm:$0xff] %v4495
        %5079 = vst [vmem:[%s393 + $0x720] sm:$0xff] %v3824
        %5080 = vst [vmem:[%s393 + $0x728] sm:$0xff] %v3826
        %5081 = vst [vmem:[%s393 + $0x730] sm:$0xff] %v4497
        %5082 = vst [vmem:[%s393 + $0x738] sm:$0xff] %v4499
        %5083 = vst [vmem:[%s393 + $0x740] sm:$0xff] %v3830
        %5084 = vst [vmem:[%s393 + $0x748] sm:$0xff] %v3832
        %5085 = vst [vmem:[%s393 + $0x750] sm:$0xff] %v4503
        %5086 = vst [vmem:[%s393 + $0x758] sm:$0xff] %v4505
        %5087 = vst [vmem:[%s393 + $0x760] sm:$0xff] %v3834
        %5088 = vst [vmem:[%s393 + $0x768] sm:$0xff] %v3836
        %5089 = vst [vmem:[%s393 + $0x770] sm:$0xff] %v4507
        %5090 = vst [vmem:[%s393 + $0x778] sm:$0xff] %v4509
        %5091 = vst [vmem:[%s393 + $0x780] sm:$0xff] %v3840
        %5092 = vst [vmem:[%s393 + $0x788] sm:$0xff] %v3842
        %5093 = vst [vmem:[%s393 + $0x790] sm:$0xff] %v4513
        %5094 = vst [vmem:[%s393 + $0x798] sm:$0xff] %v4515
        %5095 = vst [vmem:[%s393 + $0x7a0] sm:$0xff] %v3844
        %5096 = vst [vmem:[%s393 + $0x7a8] sm:$0xff] %v3846
        %5097 = vst [vmem:[%s393 + $0x7b0] sm:$0xff] %v4517
        %5098 = vst [vmem:[%s393 + $0x7b8] sm:$0xff] %v4519
        %5099 = vst [vmem:[%s393 + $0x7c0] sm:$0xff] %v3850
        %5100 = vst [vmem:[%s393 + $0x7c8] sm:$0xff] %v3852
        %5101 = vst [vmem:[%s393 + $0x7d0] sm:$0xff] %v4523
        %5102 = vst [vmem:[%s393 + $0x7d8] sm:$0xff] %v4525
        %5103 = vst [vmem:[%s393 + $0x7e0] sm:$0xff] %v3854
        %5104 = vst [vmem:[%s393 + $0x7e8] sm:$0xff] %v3856
        %5105 = vst [vmem:[%s393 + $0x7f0] sm:$0xff] %v4527
        %5106 = vst [vmem:[%s393 + $0x7f8] sm:$0xff] %v4529
        %5107 = vst [vmem:[%s393 + $0x800] sm:$0xff] %v3860
        %5108 = vst [vmem:[%s393 + $0x808] sm:$0xff] %v3862
        %5109 = vst [vmem:[%s393 + $0x810] sm:$0xff] %v4533
        %5110 = vst [vmem:[%s393 + $0x818] sm:$0xff] %v4535
        %5111 = vst [vmem:[%s393 + $0x820] sm:$0xff] %v3864
        %5112 = vst [vmem:[%s393 + $0x828] sm:$0xff] %v3866
        %5113 = vst [vmem:[%s393 + $0x830] sm:$0xff] %v4537
        %5114 = vst [vmem:[%s393 + $0x838] sm:$0xff] %v4539
        %5115 = vst [vmem:[%s393 + $0x840] sm:$0xff] %v3870
        %5116 = vst [vmem:[%s393 + $0x848] sm:$0xff] %v3872
        %5117 = vst [vmem:[%s393 + $0x850] sm:$0xff] %v4543
        %5118 = vst [vmem:[%s393 + $0x858] sm:$0xff] %v4545
        %5119 = vst [vmem:[%s393 + $0x860] sm:$0xff] %v3874
        %5120 = vst [vmem:[%s393 + $0x868] sm:$0xff] %v3876
        %5121 = vst [vmem:[%s393 + $0x870] sm:$0xff] %v4547
        %5122 = vst [vmem:[%s393 + $0x878] sm:$0xff] %v4549
        %5123 = vst [vmem:[%s393 + $0x880] sm:$0xff] %v3880
        %5124 = vst [vmem:[%s393 + $0x888] sm:$0xff] %v3882
        %5125 = vst [vmem:[%s393 + $0x890] sm:$0xff] %v4553
        %5126 = vst [vmem:[%s393 + $0x898] sm:$0xff] %v4555
        %5127 = vst [vmem:[%s393 + $0x8a0] sm:$0xff] %v3884
        %5128 = vst [vmem:[%s393 + $0x8a8] sm:$0xff] %v3886
        %5129 = vst [vmem:[%s393 + $0x8b0] sm:$0xff] %v4557
        %5130 = vst [vmem:[%s393 + $0x8b8] sm:$0xff] %v4559
        %5131 = vst [vmem:[%s393 + $0x8c0] sm:$0xff] %v3890
        %5132 = vst [vmem:[%s393 + $0x8c8] sm:$0xff] %v3892
        %5133 = vst [vmem:[%s393 + $0x8d0] sm:$0xff] %v4563
        %5134 = vst [vmem:[%s393 + $0x8d8] sm:$0xff] %v4565
        %5135 = vst [vmem:[%s393 + $0x8e0] sm:$0xff] %v3894
        %5136 = vst [vmem:[%s393 + $0x8e8] sm:$0xff] %v3896
        %5137 = vst [vmem:[%s393 + $0x8f0] sm:$0xff] %v4567
        %5138 = vst [vmem:[%s393 + $0x8f8] sm:$0xff] %v4569
        %5139 = vst [vmem:[%s393 + $0x900] sm:$0xff] %v3900
        %5140 = vst [vmem:[%s393 + $0x908] sm:$0xff] %v3902
        %5141 = vst [vmem:[%s393 + $0x910] sm:$0xff] %v4573
        %5142 = vst [vmem:[%s393 + $0x918] sm:$0xff] %v4575
        %5143 = vst [vmem:[%s393 + $0x920] sm:$0xff] %v3904
        %5144 = vst [vmem:[%s393 + $0x928] sm:$0xff] %v3906
        %5145 = vst [vmem:[%s393 + $0x930] sm:$0xff] %v4577
        %5146 = vst [vmem:[%s393 + $0x938] sm:$0xff] %v4579
        %5147 = vst [vmem:[%s393 + $0x940] sm:$0xff] %v3910
        %5148 = vst [vmem:[%s393 + $0x948] sm:$0xff] %v3912
        %5149 = vst [vmem:[%s393 + $0x950] sm:$0xff] %v4583
        %5150 = vst [vmem:[%s393 + $0x958] sm:$0xff] %v4585
        %5151 = vst [vmem:[%s393 + $0x960] sm:$0xff] %v3914
        %5152 = vst [vmem:[%s393 + $0x968] sm:$0xff] %v3916
        %5153 = vst [vmem:[%s393 + $0x970] sm:$0xff] %v4587
        %5154 = vst [vmem:[%s393 + $0x978] sm:$0xff] %v4589
        %5155 = vst [vmem:[%s393 + $0x980] sm:$0xff] %v3920
        %5156 = vst [vmem:[%s393 + $0x988] sm:$0xff] %v3922
        %5157 = vst [vmem:[%s393 + $0x990] sm:$0xff] %v4593
        %5158 = vst [vmem:[%s393 + $0x998] sm:$0xff] %v4595
        %5159 = vst [vmem:[%s393 + $0x9a0] sm:$0xff] %v3924
        %5160 = vst [vmem:[%s393 + $0x9a8] sm:$0xff] %v3926
        %5161 = vst [vmem:[%s393 + $0x9b0] sm:$0xff] %v4597
        %5162 = vst [vmem:[%s393 + $0x9b8] sm:$0xff] %v4599
        %5163 = vst [vmem:[%s393 + $0x9c0] sm:$0xff] %v3930
        %5164 = vst [vmem:[%s393 + $0x9c8] sm:$0xff] %v3932
        %5165 = vst [vmem:[%s393 + $0x9d0] sm:$0xff] %v4603
        %5166 = vst [vmem:[%s393 + $0x9d8] sm:$0xff] %v4605
        %5167 = vst [vmem:[%s393 + $0x9e0] sm:$0xff] %v3934
        %5168 = vst [vmem:[%s393 + $0x9e8] sm:$0xff] %v3936
        %5169 = vst [vmem:[%s393 + $0x9f0] sm:$0xff] %v4607
        %5170 = vst [vmem:[%s393 + $0x9f8] sm:$0xff] %v4609
        %5171 = vst [vmem:[%s393 + $0xa00] sm:$0xff] %v3940
        %5172 = vst [vmem:[%s393 + $0xa08] sm:$0xff] %v3942
        %5173 = vst [vmem:[%s393 + $0xa10] sm:$0xff] %v4613
        %5174 = vst [vmem:[%s393 + $0xa18] sm:$0xff] %v4615
        %5175 = vst [vmem:[%s393 + $0xa20] sm:$0xff] %v3944
        %5176 = vst [vmem:[%s393 + $0xa28] sm:$0xff] %v3946
        %5177 = vst [vmem:[%s393 + $0xa30] sm:$0xff] %v4617
        %5178 = vst [vmem:[%s393 + $0xa38] sm:$0xff] %v4619
        %5179 = vst [vmem:[%s393 + $0xa40] sm:$0xff] %v3950
        %5180 = vst [vmem:[%s393 + $0xa48] sm:$0xff] %v3952
        %5181 = vst [vmem:[%s393 + $0xa50] sm:$0xff] %v4623
        %5182 = vst [vmem:[%s393 + $0xa58] sm:$0xff] %v4625
        %5183 = vst [vmem:[%s393 + $0xa60] sm:$0xff] %v3954
        %5184 = vst [vmem:[%s393 + $0xa68] sm:$0xff] %v3956
        %5185 = vst [vmem:[%s393 + $0xa70] sm:$0xff] %v4627
        %5186 = vst [vmem:[%s393 + $0xa78] sm:$0xff] %v4629
        %5187 = vst [vmem:[%s393 + $0xa80] sm:$0xff] %v3960
        %5188 = vst [vmem:[%s393 + $0xa88] sm:$0xff] %v3962
        %5189 = vst [vmem:[%s393 + $0xa90] sm:$0xff] %v4633
        %5190 = vst [vmem:[%s393 + $0xa98] sm:$0xff] %v4635
        %5191 = vst [vmem:[%s393 + $0xaa0] sm:$0xff] %v3964
        %5192 = vst [vmem:[%s393 + $0xaa8] sm:$0xff] %v3966
        %5193 = vst [vmem:[%s393 + $0xab0] sm:$0xff] %v4637
        %5194 = vst [vmem:[%s393 + $0xab8] sm:$0xff] %v4639
        %5195 = vst [vmem:[%s393 + $0xac0] sm:$0xff] %v3970
        %5196 = vst [vmem:[%s393 + $0xac8] sm:$0xff] %v3972
        %5197 = vst [vmem:[%s393 + $0xad0] sm:$0xff] %v4643
        %5198 = vst [vmem:[%s393 + $0xad8] sm:$0xff] %v4645
        %5199 = vst [vmem:[%s393 + $0xae0] sm:$0xff] %v3974
        %5200 = vst [vmem:[%s393 + $0xae8] sm:$0xff] %v3976
        %5201 = vst [vmem:[%s393 + $0xaf0] sm:$0xff] %v4647
        %5202 = vst [vmem:[%s393 + $0xaf8] sm:$0xff] %v4649
        %5203 = vst [vmem:[%s393 + $0xb00] sm:$0xff] %v3980
        %5204 = vst [vmem:[%s393 + $0xb08] sm:$0xff] %v3982
        %5205 = vst [vmem:[%s393 + $0xb10] sm:$0xff] %v4653
        %5206 = vst [vmem:[%s393 + $0xb18] sm:$0xff] %v4655
        %5207 = vst [vmem:[%s393 + $0xb20] sm:$0xff] %v3984
        %5208 = vst [vmem:[%s393 + $0xb28] sm:$0xff] %v3986
        %5209 = vst [vmem:[%s393 + $0xb30] sm:$0xff] %v4657
        %5210 = vst [vmem:[%s393 + $0xb38] sm:$0xff] %v4659
        %5211 = vst [vmem:[%s393 + $0xb40] sm:$0xff] %v3990
        %5212 = vst [vmem:[%s393 + $0xb48] sm:$0xff] %v3992
        %5213 = vst [vmem:[%s393 + $0xb50] sm:$0xff] %v4663
        %5214 = vst [vmem:[%s393 + $0xb58] sm:$0xff] %v4665
        %5215 = vst [vmem:[%s393 + $0xb60] sm:$0xff] %v3994
        %5216 = vst [vmem:[%s393 + $0xb68] sm:$0xff] %v3996
        %5217 = vst [vmem:[%s393 + $0xb70] sm:$0xff] %v4667
        %5218 = vst [vmem:[%s393 + $0xb78] sm:$0xff] %v4669
        %5219 = vst [vmem:[%s393 + $0xb80] sm:$0xff] %v4000
        %5220 = vst [vmem:[%s393 + $0xb88] sm:$0xff] %v4002
        %5221 = vst [vmem:[%s393 + $0xb90] sm:$0xff] %v4673
        %5222 = vst [vmem:[%s393 + $0xb98] sm:$0xff] %v4675
        %5223 = vst [vmem:[%s393 + $0xba0] sm:$0xff] %v4004
        %5224 = vst [vmem:[%s393 + $0xba8] sm:$0xff] %v4006
        %5225 = vst [vmem:[%s393 + $0xbb0] sm:$0xff] %v4677
        %5226 = vst [vmem:[%s393 + $0xbb8] sm:$0xff] %v4679
        %5227 = vst [vmem:[%s393 + $0xbc0] sm:$0xff] %v4010
        %5228 = vst [vmem:[%s393 + $0xbc8] sm:$0xff] %v4012
        %5229 = vst [vmem:[%s393 + $0xbd0] sm:$0xff] %v4683
        %5230 = vst [vmem:[%s393 + $0xbd8] sm:$0xff] %v4685
        %5231 = vst [vmem:[%s393 + $0xbe0] sm:$0xff] %v4014
        %5232 = vst [vmem:[%s393 + $0xbe8] sm:$0xff] %v4016
        %5233 = vst [vmem:[%s393 + $0xbf0] sm:$0xff] %v4687
        %5234 = vst [vmem:[%s393 + $0xbf8] sm:$0xff] %v4689
        %5235 = vst [vmem:[%s393 + $0xc00] sm:$0xff] %v4020
        %5236 = vst [vmem:[%s393 + $0xc08] sm:$0xff] %v4022
        %5237 = vst [vmem:[%s393 + $0xc10] sm:$0xff] %v4693
        %5238 = vst [vmem:[%s393 + $0xc18] sm:$0xff] %v4695
        %5239 = vst [vmem:[%s393 + $0xc20] sm:$0xff] %v4024
        %5240 = vst [vmem:[%s393 + $0xc28] sm:$0xff] %v4026
        %5241 = vst [vmem:[%s393 + $0xc30] sm:$0xff] %v4697
        %5242 = vst [vmem:[%s393 + $0xc38] sm:$0xff] %v4699
        %5243 = vst [vmem:[%s393 + $0xc40] sm:$0xff] %v4030
        %5244 = vst [vmem:[%s393 + $0xc48] sm:$0xff] %v4032
        %5245 = vst [vmem:[%s393 + $0xc50] sm:$0xff] %v4703
        %5246 = vst [vmem:[%s393 + $0xc58] sm:$0xff] %v4705
        %5247 = vst [vmem:[%s393 + $0xc60] sm:$0xff] %v4034
        %5248 = vst [vmem:[%s393 + $0xc68] sm:$0xff] %v4036
        %5249 = vst [vmem:[%s393 + $0xc70] sm:$0xff] %v4707
        %5250 = vst [vmem:[%s393 + $0xc78] sm:$0xff] %v4709
        %5251 = vst [vmem:[%s393 + $0xc80] sm:$0xff] %v4040
        %5252 = vst [vmem:[%s393 + $0xc88] sm:$0xff] %v4042
        %5253 = vst [vmem:[%s393 + $0xc90] sm:$0xff] %v4713
        %5254 = vst [vmem:[%s393 + $0xc98] sm:$0xff] %v4715
        %5255 = vst [vmem:[%s393 + $0xca0] sm:$0xff] %v4044
        %5256 = vst [vmem:[%s393 + $0xca8] sm:$0xff] %v4046
        %5257 = vst [vmem:[%s393 + $0xcb0] sm:$0xff] %v4717
        %5258 = vst [vmem:[%s393 + $0xcb8] sm:$0xff] %v4719
        %5259 = vst [vmem:[%s393 + $0xcc0] sm:$0xff] %v4050
        %5260 = vst [vmem:[%s393 + $0xcc8] sm:$0xff] %v4052
        %5261 = vst [vmem:[%s393 + $0xcd0] sm:$0xff] %v4723
        %5262 = vst [vmem:[%s393 + $0xcd8] sm:$0xff] %v4725
        %5263 = vst [vmem:[%s393 + $0xce0] sm:$0xff] %v4054
        %5264 = vst [vmem:[%s393 + $0xce8] sm:$0xff] %v4056
        %5265 = vst [vmem:[%s393 + $0xcf0] sm:$0xff] %v4727
        %5266 = vst [vmem:[%s393 + $0xcf8] sm:$0xff] %v4729
        %5267 = vst [vmem:[%s393 + $0xd00] sm:$0xff] %v4060
        %5268 = vst [vmem:[%s393 + $0xd08] sm:$0xff] %v4062
        %5269 = vst [vmem:[%s393 + $0xd10] sm:$0xff] %v4733
        %5270 = vst [vmem:[%s393 + $0xd18] sm:$0xff] %v4735
        %5271 = vst [vmem:[%s393 + $0xd20] sm:$0xff] %v4064
        %5272 = vst [vmem:[%s393 + $0xd28] sm:$0xff] %v4066
        %5273 = vst [vmem:[%s393 + $0xd30] sm:$0xff] %v4737
        %5274 = vst [vmem:[%s393 + $0xd38] sm:$0xff] %v4739
        %5275 = vst [vmem:[%s393 + $0xd40] sm:$0xff] %v4070
        %5276 = vst [vmem:[%s393 + $0xd48] sm:$0xff] %v4072
        %5277 = vst [vmem:[%s393 + $0xd50] sm:$0xff] %v4743
        %5278 = vst [vmem:[%s393 + $0xd58] sm:$0xff] %v4745
        %5279 = vst [vmem:[%s393 + $0xd60] sm:$0xff] %v4074
        %5280 = vst [vmem:[%s393 + $0xd68] sm:$0xff] %v4076
        %5281 = vst [vmem:[%s393 + $0xd70] sm:$0xff] %v4747
        %5282 = vst [vmem:[%s393 + $0xd78] sm:$0xff] %v4749
        %5283 = vst [vmem:[%s393 + $0xd80] sm:$0xff] %v4080
        %5284 = vst [vmem:[%s393 + $0xd88] sm:$0xff] %v4082
        %5285 = vst [vmem:[%s393 + $0xd90] sm:$0xff] %v4753
        %5286 = vst [vmem:[%s393 + $0xd98] sm:$0xff] %v4755
        %5287 = vst [vmem:[%s393 + $0xda0] sm:$0xff] %v4084
        %5288 = vst [vmem:[%s393 + $0xda8] sm:$0xff] %v4086
        %5289 = vst [vmem:[%s393 + $0xdb0] sm:$0xff] %v4757
        %5290 = vst [vmem:[%s393 + $0xdb8] sm:$0xff] %v4759
        %5291 = vst [vmem:[%s393 + $0xdc0] sm:$0xff] %v4090
        %5292 = vst [vmem:[%s393 + $0xdc8] sm:$0xff] %v4092
        %5293 = vst [vmem:[%s393 + $0xdd0] sm:$0xff] %v4763
        %5294 = vst [vmem:[%s393 + $0xdd8] sm:$0xff] %v4765
        %5295 = vst [vmem:[%s393 + $0xde0] sm:$0xff] %v4094
        %5296 = vst [vmem:[%s393 + $0xde8] sm:$0xff] %v4096
        %5297 = vst [vmem:[%s393 + $0xdf0] sm:$0xff] %v4767
        %5298 = vst [vmem:[%s393 + $0xdf8] sm:$0xff] %v4769
        %5299 = vst [vmem:[%s393 + $0xe00] sm:$0xff] %v4100
        %5300 = vst [vmem:[%s393 + $0xe08] sm:$0xff] %v4102
        %5301 = vst [vmem:[%s393 + $0xe10] sm:$0xff] %v4773
        %5302 = vst [vmem:[%s393 + $0xe18] sm:$0xff] %v4775
        %5303 = vst [vmem:[%s393 + $0xe20] sm:$0xff] %v4104
        %5304 = vst [vmem:[%s393 + $0xe28] sm:$0xff] %v4106
        %5305 = vst [vmem:[%s393 + $0xe30] sm:$0xff] %v4777
        %5306 = vst [vmem:[%s393 + $0xe38] sm:$0xff] %v4779
        %5307 = vst [vmem:[%s393 + $0xe40] sm:$0xff] %v4110
        %5308 = vst [vmem:[%s393 + $0xe48] sm:$0xff] %v4112
        %5309 = vst [vmem:[%s393 + $0xe50] sm:$0xff] %v4783
        %5310 = vst [vmem:[%s393 + $0xe58] sm:$0xff] %v4785
        %5311 = vst [vmem:[%s393 + $0xe60] sm:$0xff] %v4114
        %5312 = vst [vmem:[%s393 + $0xe68] sm:$0xff] %v4116
        %5313 = vst [vmem:[%s393 + $0xe70] sm:$0xff] %v4787
        %5314 = vst [vmem:[%s393 + $0xe78] sm:$0xff] %v4789
        %5315 = vst [vmem:[%s393 + $0xe80] sm:$0xff] %v4120
        %5316 = vst [vmem:[%s393 + $0xe88] sm:$0xff] %v4122
        %5317 = vst [vmem:[%s393 + $0xe90] sm:$0xff] %v4793
        %5318 = vst [vmem:[%s393 + $0xe98] sm:$0xff] %v4795
        %5319 = vst [vmem:[%s393 + $0xea0] sm:$0xff] %v4124
        %5320 = vst [vmem:[%s393 + $0xea8] sm:$0xff] %v4126
        %5321 = vst [vmem:[%s393 + $0xeb0] sm:$0xff] %v4797
        %5322 = vst [vmem:[%s393 + $0xeb8] sm:$0xff] %v4799
        %5323 = vst [vmem:[%s393 + $0xec0] sm:$0xff] %v4130
        %5324 = vst [vmem:[%s393 + $0xec8] sm:$0xff] %v4132
        %5325 = vst [vmem:[%s393 + $0xed0] sm:$0xff] %v4803
        %5326 = vst [vmem:[%s393 + $0xed8] sm:$0xff] %v4805
        %5327 = vst [vmem:[%s393 + $0xee0] sm:$0xff] %v4134
        %5328 = vst [vmem:[%s393 + $0xee8] sm:$0xff] %v4136
        %5329 = vst [vmem:[%s393 + $0xef0] sm:$0xff] %v4807
        %5330 = vst [vmem:[%s393 + $0xef8] sm:$0xff] %v4809
        %5331 = vst [vmem:[%s393 + $0xf00] sm:$0xff] %v4140
        %5332 = vst [vmem:[%s393 + $0xf08] sm:$0xff] %v4142
        %5333 = vst [vmem:[%s393 + $0xf10] sm:$0xff] %v4813
        %5334 = vst [vmem:[%s393 + $0xf18] sm:$0xff] %v4815
        %5335 = vst [vmem:[%s393 + $0xf20] sm:$0xff] %v4144
        %5336 = vst [vmem:[%s393 + $0xf28] sm:$0xff] %v4146
        %5337 = vst [vmem:[%s393 + $0xf30] sm:$0xff] %v4817
        %5338 = vst [vmem:[%s393 + $0xf38] sm:$0xff] %v4819
        %5339 = vst [vmem:[%s393 + $0xf40] sm:$0xff] %v4150
        %5340 = vst [vmem:[%s393 + $0xf48] sm:$0xff] %v4152
        %5341 = vst [vmem:[%s393 + $0xf50] sm:$0xff] %v4823
        %5342 = vst [vmem:[%s393 + $0xf58] sm:$0xff] %v4825
        %5343 = vst [vmem:[%s393 + $0xf60] sm:$0xff] %v4154
        %5344 = vst [vmem:[%s393 + $0xf68] sm:$0xff] %v4156
        %5345 = vst [vmem:[%s393 + $0xf70] sm:$0xff] %v4827
        %5346 = vst [vmem:[%s393 + $0xf78] sm:$0xff] %v4829
        %5347 = vst [vmem:[%s393 + $0xf80] sm:$0xff] %v4160
        %5348 = vst [vmem:[%s393 + $0xf88] sm:$0xff] %v4162
        %5349 = vst [vmem:[%s393 + $0xf90] sm:$0xff] %v4833
        %5350 = vst [vmem:[%s393 + $0xf98] sm:$0xff] %v4835
        %5351 = vst [vmem:[%s393 + $0xfa0] sm:$0xff] %v4164
        %5352 = vst [vmem:[%s393 + $0xfa8] sm:$0xff] %v4166
        %5353 = vst [vmem:[%s393 + $0xfb0] sm:$0xff] %v4837
        %5354 = vst [vmem:[%s393 + $0xfb8] sm:$0xff] %v4839
        %5355 = vst [vmem:[%s393 + $0xfc0] sm:$0xff] %v4170
        %5356 = vst [vmem:[%s393 + $0xfc8] sm:$0xff] %v4172
        %5357 = vst [vmem:[%s393 + $0xfd0] sm:$0xff] %v4843
        %5358 = vst [vmem:[%s393 + $0xfd8] sm:$0xff] %v4845
        %5359 = vst [vmem:[%s393 + $0xfe0] sm:$0xff] %v4174
        %5360 = vst [vmem:[%s393 + $0xfe8] sm:$0xff] %v4176
        %5361 = vst [vmem:[%s393 + $0xff0] sm:$0xff] %v4847
        %5362 = vst [vmem:[%s393 + $0xff8] sm:$0xff] %v4849
        %s5363 = sand.u32 %s207, 1
        %s5364 = scalar_lea.sflag [#allocation4], %s5363
        %s5365 = sand.u32 %s207, 1
        %s5366 = smul.addr %s5365, 4096
        %s5367 = scalar_lea.vmem [#allocation14], %s5366
        // Predicated region
        $region81: #{ppmodel_forward.1} parent=51 // pred_check
          %p5368 = pneg %p217
        $region82: #{ppmodel_forward.1} parent=51 // pred_check_branch
          %5370 = sbr.rel (%p5368) target = $region84
        $region83: #{ppmodel_forward.1} parent=51 // pred_region
          %s5371 = smul.u32 128, %s26
          %s5373 = ssub.s32 65536, 65536
          %5374 = vsyncadd %s5364, %s5373
          %s5375 = smul.addr %s5371, 4
          %s5376 = smul.addr %s5375, 128
          %s5377 = scalar_lea.hbm %s8, %s5376
          %s5378 = sshll.u32 %s5367, 4
          %s5379 = int_to_ptr.vmem [resolvable:$true] %s5378
          %5384 = dma.vmem_to_hbm [thread:$0]  %s5379, 65536, %s5377, %s5364, 512, 512, 32
        $region84: #{ppmodel_forward.1} parent=51 // pred_fallthru
          _
      $region52: #{ppmodel_forward.1} parent=5 // pred_fallthru
        _
      %p5385 = scmp.le.s32.totalorder 2, %s21
      // Predicated region
      $region85: #{ppmodel_forward.1} parent=5 // pred_check
        %p5386 = pneg %p5385
      $region86: #{ppmodel_forward.1} parent=5 // pred_check_branch
        %5388 = sbr.rel (%p5386) target = $region88
      $region87: #{ppmodel_forward.1} parent=5 // pred_region
        %s5389 = ssub.s32 %s21, 2
        // Predicated region
        $region89: #{ppmodel_forward.1} parent=87 // pred_check
          %p5390 = pneg %p223
        $region90: #{ppmodel_forward.1} parent=87 // pred_check_branch
          %5392 = sbr.rel (%p5390) target = $region92
        $region91: #{ppmodel_forward.1} parent=87 // pred_region
          %s5393 = sand.u32 %s208, 1
          %s5394 = scalar_lea.sflag [#allocation4], %s5393
          %s5395 = sand.u32 %s208, 1
          %s5396 = smul.addr %s5395, 4096
          %s5397 = scalar_lea.vmem [#allocation14], %s5396
          %5398 = dma.done %s5394, 65536
        $region92: #{ppmodel_forward.1} parent=87 // pred_fallthru
          _
      $region88: #{ppmodel_forward.1} parent=5 // pred_fallthru
        _
    $region6: #{ppmodel_forward.1} parent=1 // loop_footer
      %s25 = sadd.s32 1, %s21
    $region7: #{ppmodel_forward.1} parent=1 // loop_footer_branch
      %20 = sbr.rel target = $region3
    $region8: #{ppmodel_forward.1} parent=1 // loop_exit
      _
    %5399 = vsyncpa [#allocation3], 1
    %s5400 = scalar_lea.sflag [#allocation3], 1
    %5401 = vsyncpa %s5400, 1
    %5402 = vsyncpa [#allocation6], 1
    %5403 = vsyncpa [#allocation9], 1
    %5404 = vsyncpa [#allocation12], 1
    %5405 = vsyncpa [#allocation4], 1
    %s5406 = scalar_lea.sflag [#allocation4], 1
    %5407 = vsyncpa %s5406, 1

</llo_original>
